<compile_context>
chip_gen: v7x
topology: tpu7x:2x2x1
jax: 0.10.0
libtpu: 0.0.40
codegen_flags: <defaults>
</compile_context>

<pallas_src>
import jax
import jax.numpy as jnp
from jax.experimental import pallas as pl
from jax.experimental.pallas import tpu as pltpu

NUM_UNITS = 1000        # matches default num_units=1000 (== the hard-coded 1000)
NUM_CLASS = 2
IN_FEATURES = 2
HIDDEN_PAD = 1024       # hidden dim padded to a multiple of 128 lanes
BATCH_TILE = 512        # batch tile for the pipelined grid path


def _mlp_kernel(x_ref, w1_ref, b1_ref, w2_ref, b2_ref, w3o_ref, b3o_ref, o_ref):
    # ---- linear1 + ReLU (Dropout eval mode == identity) ------------------
    # K = 2, so do it on the VPU as two broadcast FMAs instead of the MXU.
    # Padded hidden columns of w1/b1 are zero, so h1[:, 1000:] == 0 exactly.
    x0 = x_ref[:, 0:1]                                        # (tn, 1) f32
    x1 = x_ref[:, 1:2]                                        # (tn, 1) f32
    h1 = x0 * w1_ref[0:1, :] + x1 * w1_ref[1:2, :] + b1_ref[...]
    h1 = jnp.maximum(h1, 0.0)                                 # (tn, 1024) f32

    # ---- linear2 + ReLU ---------------------------------------------------
    # Native bf16 x bf16 MXU matmul with f32 accumulation (w2 stored bf16).
    h2 = jnp.dot(h1.astype(jnp.bfloat16), w2_ref[...],
                 preferred_element_type=jnp.float32)
    h2 = jnp.maximum(h2 + b2_ref[...], 0.0)                   # (tn, 1024) f32

    # ---- linear3 folded into the output projection at setup time ----------
    #   W3o = w3 @ wo,  b3o = b3 @ wo + bo   (exact: no activation in between)
    out = jnp.dot(h2, w3o_ref[...], preferred_element_type=jnp.float32)
    o_ref[...] = out + b3o_ref[...]                           # (tn, 2) f32


def _cost_estimate(n):
    flops = 2 * n * (IN_FEATURES * HIDDEN_PAD
                     + HIDDEN_PAD * HIDDEN_PAD
                     + HIDDEN_PAD * NUM_CLASS)
    bytes_accessed = (
        n * IN_FEATURES * 4 + n * NUM_CLASS * 4               # x in, out
        + IN_FEATURES * HIDDEN_PAD * 4 + HIDDEN_PAD * 4       # w1 (f32), b1
        + HIDDEN_PAD * HIDDEN_PAD * 2 + HIDDEN_PAD * 4        # w2 (bf16), b2
        + HIDDEN_PAD * NUM_CLASS * 4 + NUM_CLASS * 4)         # w3o, b3o
    return pl.CostEstimate(flops=flops, transcendentals=0,
                           bytes_accessed=bytes_accessed)


def _forward_single(x, p):
    """Small-batch path (n <= BATCH_TILE): single step, everything in VMEM."""
    n = x.shape[0]
    args = (x, p["w1"], p["b1"], p["w2"], p["b2"], p["w3o"], p["b3o"])

    def full_spec(a):
        nd = a.ndim
        return pl.BlockSpec(a.shape, lambda *_: (0,) * nd,
                            memory_space=pltpu.VMEM)

    return pl.pallas_call(
        _mlp_kernel,
        out_shape=jax.ShapeDtypeStruct((n, NUM_CLASS), jnp.float32),
        in_specs=[full_spec(a) for a in args],
        out_specs=pl.BlockSpec((n, NUM_CLASS), lambda *_: (0, 0),
                               memory_space=pltpu.VMEM),
        compiler_params=pltpu.CompilerParams(vmem_limit_bytes=32 << 20),
        cost_estimate=_cost_estimate(n),
    )(*args)


def _forward_batched(x, p):
    """Large-batch path: pad N to a multiple of BATCH_TILE, 1-D parallel grid
    over N; weights stay VMEM-resident (constant index_map) while activation
    tiles pipeline.  Parallel axis shards across v7x's two TensorCores."""
    n = x.shape[0]
    n_pad = pl.cdiv(n, BATCH_TILE) * BATCH_TILE
    if n_pad != n:
        x = jnp.pad(x, ((0, n_pad - n), (0, 0)))
    weight_args = (p["w1"], p["b1"], p["w2"], p["b2"], p["w3o"], p["b3o"])

    def wspec(a):
        nd = a.ndim
        return pl.BlockSpec(a.shape, lambda i: (0,) * nd,
                            memory_space=pltpu.VMEM)

    out = pl.pallas_call(
        _mlp_kernel,
        out_shape=jax.ShapeDtypeStruct((n_pad, NUM_CLASS), jnp.float32),
        grid=(n_pad // BATCH_TILE,),
        in_specs=[pl.BlockSpec((BATCH_TILE, IN_FEATURES), lambda i: (i, 0),
                               memory_space=pltpu.VMEM)]
                 + [wspec(a) for a in weight_args],
        out_specs=pl.BlockSpec((BATCH_TILE, NUM_CLASS), lambda i: (i, 0),
                               memory_space=pltpu.VMEM),
        compiler_params=pltpu.CompilerParams(
            dimension_semantics=("parallel",),
            vmem_limit_bytes=32 << 20),
        cost_estimate=_cost_estimate(n_pad),
    )(x, *weight_args)
    return out[:n] if n_pad != n else out


def net_forward(x, prepared_params):
    """x: (N, 2) float32.  prepared_params: output of prepare_params()."""
    n = x.shape[0]
    if n > BATCH_TILE:
        return _forward_batched(x, prepared_params)
    return _forward_single(x, prepared_params)


def init_params(key):
    """Deterministic init mimicking PyTorch Linear default U[-1/sqrt(fan_in), +].
    Weights are stored as (in_features, out_features)."""
    def linear(key, fan_in, fan_out):
        kw, kb = jax.random.split(key)
        bound = 1.0 / jnp.sqrt(fan_in)
        w = jax.random.uniform(kw, (fan_in, fan_out), jnp.float32, -bound, bound)
        b = jax.random.uniform(kb, (1, fan_out), jnp.float32, -bound, bound)
        return w, b

    k1, k2, k3, k4 = jax.random.split(key, 4)
    w1, b1 = linear(k1, IN_FEATURES, NUM_UNITS)
    w2, b2 = linear(k2, NUM_UNITS, NUM_UNITS)
    w3, b3 = linear(k3, NUM_UNITS, NUM_UNITS)
    wo, bo = linear(k4, NUM_UNITS, NUM_CLASS)
    return {"w1": w1, "b1": b1, "w2": w2, "b2": b2,
            "w3": w3, "b3": b3, "wo": wo, "bo": bo}


def prepare_params(params):
    """Fold linear3 into the output layer, zero-pad the hidden dim to 1024, and
    cast the single large weight (w2) to bf16.  Exact except for the bf16
    quantization of w2."""
    w1, b1 = params["w1"], params["b1"]
    w2, b2 = params["w2"], params["b2"]
    w3, b3 = params["w3"], params["b3"]
    wo, bo = params["wo"], params["bo"]

    # Exact algebraic fusion (no activation between linear3 and output).
    w3o = w3 @ wo                                    # (1000, 2) f32
    b3o = b3 @ wo + bo                               # (1, 2)    f32

    pad_h = HIDDEN_PAD - NUM_UNITS
    w1p = jnp.pad(w1, ((0, 0), (0, pad_h)))                            # f32
    b1p = jnp.pad(b1, ((0, 0), (0, pad_h)))                            # f32
    w2p = jnp.pad(w2, ((0, pad_h), (0, pad_h))).astype(jnp.bfloat16)   # bf16
    b2p = jnp.pad(b2, ((0, 0), (0, pad_h)))                            # f32
    w3op = jnp.pad(w3o, ((0, pad_h), (0, 0)))                          # f32

    return {"w1": w1p, "b1": b1p, "w2": w2p, "b2": b2p,
            "w3o": w3op, "b3o": b3o}


def reference_forward(x, p):
    """Original module semantics: all f32, unfused (ground truth)."""
    h1 = jnp.maximum(x @ p["w1"] + p["b1"], 0.0)
    h2 = jnp.maximum(h1 @ p["w2"] + p["b2"], 0.0)
    h3 = h2 @ p["w3"] + p["b3"]
    return h3 @ p["wo"] + p["bo"]


def reference_forward_prepared(x, p):
    """Pure-JAX reference using the exact same prepared (fused/padded/bf16)
    parameters and the same bf16 x bf16 layer-2 matmul the kernel performs."""
    h1 = jnp.maximum(x @ p["w1"] + p["b1"], 0.0)
    h2 = jnp.dot(h1.astype(jnp.bfloat16), p["w2"],
                 preferred_element_type=jnp.float32)
    h2 = jnp.maximum(h2 + p["b2"], 0.0)
    return h2 @ p["w3o"] + p["b3o"]


if __name__ == "__main__":
    key = jax.random.PRNGKey(0)
    kp, kx = jax.random.split(key)
    params = init_params(kp)
    prepared = prepare_params(params)

    # ---- small batch (single-shot path) ----
    batch = 8
    x = jax.random.normal(kx, (batch, IN_FEATURES), dtype=jnp.float32)
    out = jax.block_until_ready(net_forward(x, prepared))
    assert out.shape == (batch, NUM_CLASS), out.shape

    ref_same = reference_forward_prepared(x, prepared)
    assert jnp.allclose(out, ref_same, atol=2e-2, rtol=2e-2), \
        "mismatch vs prepared-params reference (small batch)"
    ref_f32 = reference_forward(x, params)
    assert jnp.allclose(out, ref_f32, atol=5e-2, rtol=5e-2), \
        "mismatch vs f32 module reference (small batch)"

    # ---- larger, non-tile-multiple batch (padded pipelined grid path) ----
    batch2 = 3 * BATCH_TILE + 37
    x2 = jax.random.normal(jax.random.PRNGKey(1), (batch2, IN_FEATURES),
                           dtype=jnp.float32)
    out2 = jax.block_until_ready(net_forward(x2, prepared))
    assert out2.shape == (batch2, NUM_CLASS), out2.shape
    ref2 = reference_forward_prepared(x2, prepared)
    assert jnp.allclose(out2, ref2, atol=2e-2, rtol=2e-2), \
        "mismatch vs prepared-params reference (batched path)"

    print("KERNEL_OK")
</pallas_src>

<mosaic_0001>
module attributes {stable_mosaic.version = 11 : i64} {
  func.func @_mlp_kernel(%arg0: memref<8x2xf32, #tpu.memory_space<vmem>>, %arg1: memref<2x1024xf32, #tpu.memory_space<vmem>>, %arg2: memref<1x1024xf32, #tpu.memory_space<vmem>>, %arg3: memref<1024x1024xbf16, #tpu.memory_space<vmem>>, %arg4: memref<1x1024xf32, #tpu.memory_space<vmem>>, %arg5: memref<1024x2xf32, #tpu.memory_space<vmem>>, %arg6: memref<1x2xf32, #tpu.memory_space<vmem>>, %arg7: memref<8x2xf32, #tpu.memory_space<vmem>>) attributes {dimension_semantics = [], scalar_prefetch = 0 : i64, scratch_operands = 0 : i64, tpu.core_type = #tpu.core_type<tc>} {
    %c0 = arith.constant 0 : index
    %c0_0 = arith.constant 0 : index
    %0 = vector.load %arg0[%c0, %c0_0] : memref<8x2xf32, #tpu.memory_space<vmem>>, vector<8x1xf32>
    %c0_1 = arith.constant 0 : index
    %c1 = arith.constant 1 : index
    %1 = vector.load %arg0[%c0_1, %c1] : memref<8x2xf32, #tpu.memory_space<vmem>>, vector<8x1xf32>
    %c0_2 = arith.constant 0 : index
    %c0_3 = arith.constant 0 : index
    %2 = vector.load %arg1[%c0_2, %c0_3] : memref<2x1024xf32, #tpu.memory_space<vmem>>, vector<1x1024xf32>
    %3 = vector.broadcast %0 : vector<8x1xf32> to vector<8x1024xf32>
    %4 = vector.broadcast %2 : vector<1x1024xf32> to vector<8x1024xf32>
    %5 = arith.mulf %3, %4 : vector<8x1024xf32>
    %c1_4 = arith.constant 1 : index
    %c0_5 = arith.constant 0 : index
    %6 = vector.load %arg1[%c1_4, %c0_5] : memref<2x1024xf32, #tpu.memory_space<vmem>>, vector<1x1024xf32>
    %7 = vector.broadcast %1 : vector<8x1xf32> to vector<8x1024xf32>
    %8 = vector.broadcast %6 : vector<1x1024xf32> to vector<8x1024xf32>
    %9 = arith.mulf %7, %8 : vector<8x1024xf32>
    %10 = arith.addf %5, %9 : vector<8x1024xf32>
    %c0_6 = arith.constant 0 : index
    %c0_7 = arith.constant 0 : index
    %11 = vector.load %arg2[%c0_6, %c0_7] : memref<1x1024xf32, #tpu.memory_space<vmem>>, vector<1x1024xf32>
    %12 = vector.broadcast %11 : vector<1x1024xf32> to vector<8x1024xf32>
    %13 = arith.addf %10, %12 : vector<8x1024xf32>
    %cst = arith.constant 0.000000e+00 : f32
    %14 = vector.broadcast %cst : f32 to vector<8x1024xf32>
    %15 = arith.maximumf %13, %14 : vector<8x1024xf32>
    %16 = arith.truncf %15 : vector<8x1024xf32> to vector<8x1024xbf16>
    %c0_8 = arith.constant 0 : index
    %c0_9 = arith.constant 0 : index
    %17 = vector.load %arg3[%c0_8, %c0_9] : memref<1024x1024xbf16, #tpu.memory_space<vmem>>, vector<1024x1024xbf16>
    %cst_10 = arith.constant dense<0.000000e+00> : vector<8x1024xf32>
    %18 = tpu.matmul %16, %17, %cst_10 {dimension_numbers = #tpu.dot_dimension_numbers<[1], [0], [0], [1], [0, 0, 1, 1], [], []>} : vector<8x1024xbf16>, vector<1024x1024xbf16>, vector<8x1024xf32> -> vector<8x1024xf32>
    %c0_11 = arith.constant 0 : index
    %c0_12 = arith.constant 0 : index
    %19 = vector.load %arg4[%c0_11, %c0_12] : memref<1x1024xf32, #tpu.memory_space<vmem>>, vector<1x1024xf32>
    %20 = vector.broadcast %19 : vector<1x1024xf32> to vector<8x1024xf32>
    %21 = arith.addf %18, %20 : vector<8x1024xf32>
    %cst_13 = arith.constant 0.000000e+00 : f32
    %22 = vector.broadcast %cst_13 : f32 to vector<8x1024xf32>
    %23 = arith.maximumf %21, %22 : vector<8x1024xf32>
    %c0_14 = arith.constant 0 : index
    %c0_15 = arith.constant 0 : index
    %24 = vector.load %arg5[%c0_14, %c0_15] : memref<1024x2xf32, #tpu.memory_space<vmem>>, vector<1024x2xf32>
    %cst_16 = arith.constant dense<0.000000e+00> : vector<8x2xf32>
    %25 = tpu.matmul %23, %24, %cst_16 {dimension_numbers = #tpu.dot_dimension_numbers<[1], [0], [0], [1], [0, 0, 1, 1], [], []>} : vector<8x1024xf32>, vector<1024x2xf32>, vector<8x2xf32> -> vector<8x2xf32>
    %c0_17 = arith.constant 0 : index
    %c0_18 = arith.constant 0 : index
    %26 = vector.load %arg6[%c0_17, %c0_18] : memref<1x2xf32, #tpu.memory_space<vmem>>, vector<1x2xf32>
    %27 = vector.broadcast %26 : vector<1x2xf32> to vector<8x2xf32>
    %28 = arith.addf %25, %27 : vector<8x2xf32>
    %c0_19 = arith.constant 0 : index
    %c0_20 = arith.constant 0 : index
    %29 = vector.load %arg7[%c0_19, %c0_20] : memref<8x2xf32, #tpu.memory_space<vmem>>, vector<8x2xf32>
    tpu.vector_store %arg7[%c0_19, %c0_20], %28 {strides = array<i32>} : memref<8x2xf32, #tpu.memory_space<vmem>>, vector<8x2xf32>,
    return
  }
}

</mosaic_0001>

<llo_original>
// kernel: tpu_custom_call.1
$region0: #{tpu_custom_call.1}
  #allocation0 [shape = 'u32[]', space=smem, size = 0x4, offset = 0x4, fixed_abs, tag = 'smem constant byte address 0x4 - core index']
  #allocation1 [shape = 'u32[144,128]{1,0:T(1,128)}', space=vmem, size = 0x12000, scoped, tag = 'internal scratch']
  %s0 = inlined_call_operand.vmem [shape: f32[8,2], index: 0, kind: input, shape index: {}]
  %s1 = inlined_call_operand.hbm [shape: f32[2,1024], index: 1, kind: input, shape index: {}]
  %s2 = inlined_call_operand.hbm [shape: f32[1,1024], index: 2, kind: input, shape index: {}]
  %s3 = inlined_call_operand.hbm [shape: bf16[1024,1024], index: 3, kind: input, shape index: {}]
  %s4 = inlined_call_operand.hbm [shape: f32[1,1024], index: 4, kind: input, shape index: {}]
  %s5 = inlined_call_operand.vmem [shape: f32[1024,2], index: 5, kind: input, shape index: {}]
  %s6 = inlined_call_operand.hbm [shape: f32[1,2], index: 6, kind: input, shape index: {}]
  %s7 = inlined_call_operand.vmem [shape: f32[8,2], index: 7, kind: output, shape index: {}]
  %s8 = sld [smem:[#allocation0]]
  $region58: #{tpu_custom_call.1} parent=0
    _
  %s10 = ssub.s32 1, %s8
  %s11 = scalar_select 0, %s10, %s8
  $region1: #{tpu_custom_call.1} parent=0
    #allocation2 [shape = 'u8[8192]{0}', space=vmem, size = 0x2000, scoped, tag = 'input window, operand 1, single buffered']
    #allocation3 [shape = 's32[1]{0}', space=sflag, size = 0x4, scoped, tag = 'scoped memory for tpu_custom_call.1']
    #allocation4 [shape = 'u8[4096]{0}', space=vmem, size = 0x1000, scoped, tag = 'input window, operand 2, single buffered']
    #allocation5 [shape = 's32[1]{0}', space=sflag, size = 0x4, scoped, tag = 'scoped memory for tpu_custom_call.1']
    #allocation6 [shape = 'u8[2097152]{0}', space=vmem, size = 0x200000, scoped, tag = 'input window, operand 3, single buffered']
    #allocation7 [shape = 'u8[4096]{0}', space=vmem, size = 0x1000, scoped, tag = 'input window, operand 4, single buffered']
    #allocation8 [shape = 's32[1]{0}', space=sflag, size = 0x4, scoped, tag = 'scoped memory for tpu_custom_call.1']
    #allocation9 [shape = 'u8[512]{0}', space=vmem, size = 0x400, scoped, tag = 'input window, operand 6, single buffered']
    %12 = vsyncpa [#allocation3], 0
    %13 = vsyncpa [#allocation5], 0
    %14 = vsyncpa [#allocation8], 0
    // Predicated region
    $region2: #{tpu_custom_call.1} parent=1 // pred_check
      _
    $region3: #{tpu_custom_call.1} parent=1 // pred_check_branch
      %16 = sbr.rel (0) target = $region5
    $region4: #{tpu_custom_call.1} parent=1 // pred_region
      _
    $region5: #{tpu_custom_call.1} parent=1 // pred_fallthru
      _
    // Predicated region
    $region6: #{tpu_custom_call.1} parent=1 // pred_check
      _
    $region7: #{tpu_custom_call.1} parent=1 // pred_check_branch
      %18 = sbr.rel (0) target = $region9
    $region8: #{tpu_custom_call.1} parent=1 // pred_region
      %s20 = ssub.s32 256, 256
      %21 = vsyncadd [#allocation3], %s20
      %s23 = sshll.u32 [#allocation2], 4
      %s24 = int_to_ptr.vmem [resolvable:$true] %s23
      %26 = dma.hbm_to_vmem [thread:$0]  %s1, 256, %s24, [#allocation3]
    $region9: #{tpu_custom_call.1} parent=1 // pred_fallthru
      _
    // Predicated region
    $region10: #{tpu_custom_call.1} parent=1 // pred_check
      _
    $region11: #{tpu_custom_call.1} parent=1 // pred_check_branch
      %28 = sbr.rel (0) target = $region13
    $region12: #{tpu_custom_call.1} parent=1 // pred_region
      %s30 = ssub.s32 128, 128
      %31 = vsyncadd [#allocation5], %s30
      %s33 = sshll.u32 [#allocation4], 4
      %s34 = int_to_ptr.vmem [resolvable:$true] %s33
      %36 = dma.hbm_to_vmem [thread:$0]  %s2, 128, %s34, [#allocation5]
    $region13: #{tpu_custom_call.1} parent=1 // pred_fallthru
      _
    // Predicated region
    $region14: #{tpu_custom_call.1} parent=1 // pred_check
      _
    $region15: #{tpu_custom_call.1} parent=1 // pred_check_branch
      %38 = sbr.rel (0) target = $region17
    $region16: #{tpu_custom_call.1} parent=1 // pred_region
      %s40 = ssub.s32 65536, 65536
      %41 = vsyncadd [#allocation5], %s40
      %s42 = sshll.u32 [#allocation6], 4
      %s43 = int_to_ptr.vmem [resolvable:$true] %s42
      %48 = dma.hbm_to_vmem [thread:$0]  %s3, 65536, %s43, [#allocation5], 512, 512, 32
    $region17: #{tpu_custom_call.1} parent=1 // pred_fallthru
      _
    // Predicated region
    $region18: #{tpu_custom_call.1} parent=1 // pred_check
      _
    $region19: #{tpu_custom_call.1} parent=1 // pred_check_branch
      %50 = sbr.rel (0) target = $region21
    $region20: #{tpu_custom_call.1} parent=1 // pred_region
      %s52 = ssub.s32 128, 128
      %53 = vsyncadd [#allocation8], %s52
      %s55 = sshll.u32 [#allocation7], 4
      %s56 = int_to_ptr.vmem [resolvable:$true] %s55
      %58 = dma.hbm_to_vmem [thread:$0]  %s4, 128, %s56, [#allocation8]
    $region21: #{tpu_custom_call.1} parent=1 // pred_fallthru
      _
    // Predicated region
    $region22: #{tpu_custom_call.1} parent=1 // pred_check
      _
    $region23: #{tpu_custom_call.1} parent=1 // pred_check_branch
      %60 = sbr.rel (0) target = $region25
    $region24: #{tpu_custom_call.1} parent=1 // pred_region
      _
    $region25: #{tpu_custom_call.1} parent=1 // pred_fallthru
      _
    // Predicated region
    $region26: #{tpu_custom_call.1} parent=1 // pred_check
      _
    $region27: #{tpu_custom_call.1} parent=1 // pred_check_branch
      %62 = sbr.rel (0) target = $region29
    $region28: #{tpu_custom_call.1} parent=1 // pred_region
      %s64 = ssub.s32 16, 16
      %65 = vsyncadd [#allocation8], %s64
      %s67 = sshll.u32 [#allocation9], 4
      %s68 = int_to_ptr.vmem [resolvable:$true] %s67
      %70 = dma.hbm_to_vmem [thread:$0]  %s6, 16, %s68, [#allocation8]
    $region29: #{tpu_custom_call.1} parent=1 // pred_fallthru
      _
    // Predicated region
    $region30: #{tpu_custom_call.1} parent=1 // pred_check
      _
    $region31: #{tpu_custom_call.1} parent=1 // pred_check_branch
      %72 = sbr.rel (0) target = $region33
    $region32: #{tpu_custom_call.1} parent=1 // pred_region
      %73 = dma.done [#allocation3], 256
    $region33: #{tpu_custom_call.1} parent=1 // pred_fallthru
      _
    // Predicated region
    $region34: #{tpu_custom_call.1} parent=1 // pred_check
      _
    $region35: #{tpu_custom_call.1} parent=1 // pred_check_branch
      %75 = sbr.rel (0) target = $region37
    $region36: #{tpu_custom_call.1} parent=1 // pred_region
      %76 = dma.done [#allocation5], 128
    $region37: #{tpu_custom_call.1} parent=1 // pred_fallthru
      _
    // Predicated region
    $region38: #{tpu_custom_call.1} parent=1 // pred_check
      _
    $region39: #{tpu_custom_call.1} parent=1 // pred_check_branch
      %78 = sbr.rel (0) target = $region41
    $region40: #{tpu_custom_call.1} parent=1 // pred_region
      %79 = dma.done [#allocation5], 65536
    $region41: #{tpu_custom_call.1} parent=1 // pred_fallthru
      _
    // Predicated region
    $region42: #{tpu_custom_call.1} parent=1 // pred_check
      _
    $region43: #{tpu_custom_call.1} parent=1 // pred_check_branch
      %81 = sbr.rel (0) target = $region45
    $region44: #{tpu_custom_call.1} parent=1 // pred_region
      %82 = dma.done [#allocation8], 128
    $region45: #{tpu_custom_call.1} parent=1 // pred_fallthru
      _
    // Predicated region
    $region46: #{tpu_custom_call.1} parent=1 // pred_check
      _
    $region47: #{tpu_custom_call.1} parent=1 // pred_check_branch
      %84 = sbr.rel (0) target = $region49
    $region48: #{tpu_custom_call.1} parent=1 // pred_region
      %85 = dma.done [#allocation8], 16
    $region49: #{tpu_custom_call.1} parent=1 // pred_fallthru
      _
    %v86 = vld [vmem:[%s0] sm:$0xff]
    %v87 = vld [vmem:[#allocation2] ss:$2 sm:$0xff]
    %89 = vset.pattern.permute.xlu0 0
    %90 = vperm.xlu0 %89, %v86
    %v91 = vpop.permute.xlu0 %90
    %v94 = vlaneseq
    %v95 = vshrl.u32 %v94, 7
    %v96 = vsub.s32 0, %v95
    %v97 = vrot.slane %v87, %v96
    %v98 = vlaneseq
    %v99 = vshrl.u32 %v98, 7
    %v100 = vsub.s32 1, %v99
    %v101 = vrot.slane %v87, %v100
    %v102 = vlaneseq
    %v103 = vshrl.u32 %v102, 7
    %v104 = vsub.s32 2, %v103
    %v105 = vrot.slane %v87, %v104
    %v106 = vlaneseq
    %v107 = vshrl.u32 %v106, 7
    %v108 = vsub.s32 3, %v107
    %v109 = vrot.slane %v87, %v108
    %v110 = vlaneseq
    %v111 = vshrl.u32 %v110, 7
    %v112 = vsub.s32 4, %v111
    %v113 = vrot.slane %v87, %v112
    %v114 = vlaneseq
    %v115 = vshrl.u32 %v114, 7
    %v116 = vsub.s32 5, %v115
    %v117 = vrot.slane %v87, %v116
    %v118 = vlaneseq
    %v119 = vshrl.u32 %v118, 7
    %v120 = vsub.s32 6, %v119
    %v121 = vrot.slane %v87, %v120
    %v122 = vlaneseq
    %v123 = vshrl.u32 %v122, 7
    %v124 = vsub.s32 7, %v123
    %v125 = vrot.slane %v87, %v124
    %v134 = vmul.f32 %v91, %v97
    %v135 = vmul.f32 %v91, %v101
    %v136 = vmul.f32 %v91, %v105
    %v137 = vmul.f32 %v91, %v109
    %v138 = vmul.f32 %v91, %v113
    %v139 = vmul.f32 %v91, %v117
    %v140 = vmul.f32 %v91, %v121
    %v141 = vmul.f32 %v91, %v125
    %s142 = scalar_lea.vmem [#allocation2], 1
    %v143 = vld [vmem:[%s142] ss:$2 sm:$0xff]
    %144 = vset.pattern.permute.xlu0 1
    %145 = vperm.xlu0 %144, %v86
    %v146 = vpop.permute.xlu0 %145
    %v149 = vlaneseq
    %v150 = vshrl.u32 %v149, 7
    %v151 = vsub.s32 0, %v150
    %v152 = vrot.slane %v143, %v151
    %v153 = vlaneseq
    %v154 = vshrl.u32 %v153, 7
    %v155 = vsub.s32 1, %v154
    %v156 = vrot.slane %v143, %v155
    %v157 = vlaneseq
    %v158 = vshrl.u32 %v157, 7
    %v159 = vsub.s32 2, %v158
    %v160 = vrot.slane %v143, %v159
    %v161 = vlaneseq
    %v162 = vshrl.u32 %v161, 7
    %v163 = vsub.s32 3, %v162
    %v164 = vrot.slane %v143, %v163
    %v165 = vlaneseq
    %v166 = vshrl.u32 %v165, 7
    %v167 = vsub.s32 4, %v166
    %v168 = vrot.slane %v143, %v167
    %v169 = vlaneseq
    %v170 = vshrl.u32 %v169, 7
    %v171 = vsub.s32 5, %v170
    %v172 = vrot.slane %v143, %v171
    %v173 = vlaneseq
    %v174 = vshrl.u32 %v173, 7
    %v175 = vsub.s32 6, %v174
    %v176 = vrot.slane %v143, %v175
    %v177 = vlaneseq
    %v178 = vshrl.u32 %v177, 7
    %v179 = vsub.s32 7, %v178
    %v180 = vrot.slane %v143, %v179
    %v189 = vmul.f32 %v146, %v152
    %v190 = vmul.f32 %v146, %v156
    %v191 = vmul.f32 %v146, %v160
    %v192 = vmul.f32 %v146, %v164
    %v193 = vmul.f32 %v146, %v168
    %v194 = vmul.f32 %v146, %v172
    %v195 = vmul.f32 %v146, %v176
    %v196 = vmul.f32 %v146, %v180
    %v197 = vadd.f32 %v134, %v189
    %v198 = vadd.f32 %v135, %v190
    %v199 = vadd.f32 %v136, %v191
    %v200 = vadd.f32 %v137, %v192
    %v201 = vadd.f32 %v138, %v193
    %v202 = vadd.f32 %v139, %v194
    %v203 = vadd.f32 %v140, %v195
    %v204 = vadd.f32 %v141, %v196
    %v205 = vld [vmem:[#allocation4] sm:$0xff]
    %v207 = vlaneseq
    %v208 = vshrl.u32 %v207, 7
    %v209 = vsub.s32 0, %v208
    %v210 = vrot.slane %v205, %v209
    %v211 = vlaneseq
    %v212 = vshrl.u32 %v211, 7
    %v213 = vsub.s32 1, %v212
    %v214 = vrot.slane %v205, %v213
    %v215 = vlaneseq
    %v216 = vshrl.u32 %v215, 7
    %v217 = vsub.s32 2, %v216
    %v218 = vrot.slane %v205, %v217
    %v219 = vlaneseq
    %v220 = vshrl.u32 %v219, 7
    %v221 = vsub.s32 3, %v220
    %v222 = vrot.slane %v205, %v221
    %v223 = vlaneseq
    %v224 = vshrl.u32 %v223, 7
    %v225 = vsub.s32 4, %v224
    %v226 = vrot.slane %v205, %v225
    %v227 = vlaneseq
    %v228 = vshrl.u32 %v227, 7
    %v229 = vsub.s32 5, %v228
    %v230 = vrot.slane %v205, %v229
    %v231 = vlaneseq
    %v232 = vshrl.u32 %v231, 7
    %v233 = vsub.s32 6, %v232
    %v234 = vrot.slane %v205, %v233
    %v235 = vlaneseq
    %v236 = vshrl.u32 %v235, 7
    %v237 = vsub.s32 7, %v236
    %v238 = vrot.slane %v205, %v237
    %v247 = vadd.f32 %v197, %v210
    %v248 = vadd.f32 %v198, %v214
    %v249 = vadd.f32 %v199, %v218
    %v250 = vadd.f32 %v200, %v222
    %v251 = vadd.f32 %v201, %v226
    %v252 = vadd.f32 %v202, %v230
    %v253 = vadd.f32 %v203, %v234
    %v254 = vadd.f32 %v204, %v238
    %v255 = vmax.f32 %v247, 0.0
    %v256 = vmax.f32 %v248, 0.0
    %v257 = vmax.f32 %v249, 0.0
    %v258 = vmax.f32 %v250, 0.0
    %v259 = vmax.f32 %v251, 0.0
    %v260 = vmax.f32 %v252, 0.0
    %v261 = vmax.f32 %v253, 0.0
    %v262 = vmax.f32 %v254, 0.0
    %v263 = vpack.c.bf16 %v255, %v255
    %v264 = vpack.c.bf16 %v256, %v256
    %v265 = vpack.c.bf16 %v257, %v257
    %v266 = vpack.c.bf16 %v258, %v258
    %v267 = vpack.c.bf16 %v259, %v259
    %v268 = vpack.c.bf16 %v260, %v260
    %v269 = vpack.c.bf16 %v261, %v261
    %v270 = vpack.c.bf16 %v262, %v262
    %v271 = vld [vmem:[#allocation6] sm:$0xff]
    %v272 = vld [vmem:[#allocation6 + $0x8] sm:$0xff]
    %v273 = vld [vmem:[#allocation6 + $0x10] sm:$0xff]
    %v274 = vld [vmem:[#allocation6 + $0x18] sm:$0xff]
    %v275 = vld [vmem:[#allocation6 + $0x20] sm:$0xff]
    %v276 = vld [vmem:[#allocation6 + $0x28] sm:$0xff]
    %v277 = vld [vmem:[#allocation6 + $0x30] sm:$0xff]
    %v278 = vld [vmem:[#allocation6 + $0x38] sm:$0xff]
    %v279 = vld [vmem:[#allocation6 + $0x40] sm:$0xff]
    %v280 = vld [vmem:[#allocation6 + $0x48] sm:$0xff]
    %v281 = vld [vmem:[#allocation6 + $0x50] sm:$0xff]
    %v282 = vld [vmem:[#allocation6 + $0x58] sm:$0xff]
    %v283 = vld [vmem:[#allocation6 + $0x60] sm:$0xff]
    %v284 = vld [vmem:[#allocation6 + $0x68] sm:$0xff]
    %v285 = vld [vmem:[#allocation6 + $0x70] sm:$0xff]
    %v286 = vld [vmem:[#allocation6 + $0x78] sm:$0xff]
    %v287 = vld [vmem:[#allocation6 + $0x80] sm:$0xff]
    %v288 = vld [vmem:[#allocation6 + $0x88] sm:$0xff]
    %v289 = vld [vmem:[#allocation6 + $0x90] sm:$0xff]
    %v290 = vld [vmem:[#allocation6 + $0x98] sm:$0xff]
    %v291 = vld [vmem:[#allocation6 + $0xa0] sm:$0xff]
    %v292 = vld [vmem:[#allocation6 + $0xa8] sm:$0xff]
    %v293 = vld [vmem:[#allocation6 + $0xb0] sm:$0xff]
    %v294 = vld [vmem:[#allocation6 + $0xb8] sm:$0xff]
    %v295 = vld [vmem:[#allocation6 + $0xc0] sm:$0xff]
    %v296 = vld [vmem:[#allocation6 + $0xc8] sm:$0xff]
    %v297 = vld [vmem:[#allocation6 + $0xd0] sm:$0xff]
    %v298 = vld [vmem:[#allocation6 + $0xd8] sm:$0xff]
    %v299 = vld [vmem:[#allocation6 + $0xe0] sm:$0xff]
    %v300 = vld [vmem:[#allocation6 + $0xe8] sm:$0xff]
    %v301 = vld [vmem:[#allocation6 + $0xf0] sm:$0xff]
    %v302 = vld [vmem:[#allocation6 + $0xf8] sm:$0xff]
    %v303 = vld [vmem:[#allocation6 + $0x100] sm:$0xff]
    %v304 = vld [vmem:[#allocation6 + $0x108] sm:$0xff]
    %v305 = vld [vmem:[#allocation6 + $0x110] sm:$0xff]
    %v306 = vld [vmem:[#allocation6 + $0x118] sm:$0xff]
    %v307 = vld [vmem:[#allocation6 + $0x120] sm:$0xff]
    %v308 = vld [vmem:[#allocation6 + $0x128] sm:$0xff]
    %v309 = vld [vmem:[#allocation6 + $0x130] sm:$0xff]
    %v310 = vld [vmem:[#allocation6 + $0x138] sm:$0xff]
    %v311 = vld [vmem:[#allocation6 + $0x140] sm:$0xff]
    %v312 = vld [vmem:[#allocation6 + $0x148] sm:$0xff]
    %v313 = vld [vmem:[#allocation6 + $0x150] sm:$0xff]
    %v314 = vld [vmem:[#allocation6 + $0x158] sm:$0xff]
    %v315 = vld [vmem:[#allocation6 + $0x160] sm:$0xff]
    %v316 = vld [vmem:[#allocation6 + $0x168] sm:$0xff]
    %v317 = vld [vmem:[#allocation6 + $0x170] sm:$0xff]
    %v318 = vld [vmem:[#allocation6 + $0x178] sm:$0xff]
    %v319 = vld [vmem:[#allocation6 + $0x180] sm:$0xff]
    %v320 = vld [vmem:[#allocation6 + $0x188] sm:$0xff]
    %v321 = vld [vmem:[#allocation6 + $0x190] sm:$0xff]
    %v322 = vld [vmem:[#allocation6 + $0x198] sm:$0xff]
    %v323 = vld [vmem:[#allocation6 + $0x1a0] sm:$0xff]
    %v324 = vld [vmem:[#allocation6 + $0x1a8] sm:$0xff]
    %v325 = vld [vmem:[#allocation6 + $0x1b0] sm:$0xff]
    %v326 = vld [vmem:[#allocation6 + $0x1b8] sm:$0xff]
    %v327 = vld [vmem:[#allocation6 + $0x1c0] sm:$0xff]
    %v328 = vld [vmem:[#allocation6 + $0x1c8] sm:$0xff]
    %v329 = vld [vmem:[#allocation6 + $0x1d0] sm:$0xff]
    %v330 = vld [vmem:[#allocation6 + $0x1d8] sm:$0xff]
    %v331 = vld [vmem:[#allocation6 + $0x1e0] sm:$0xff]
    %v332 = vld [vmem:[#allocation6 + $0x1e8] sm:$0xff]
    %v333 = vld [vmem:[#allocation6 + $0x1f0] sm:$0xff]
    %v334 = vld [vmem:[#allocation6 + $0x1f8] sm:$0xff]
    %v335 = vld [vmem:[#allocation6 + $0x200] sm:$0xff]
    %v336 = vld [vmem:[#allocation6 + $0x208] sm:$0xff]
    %v337 = vld [vmem:[#allocation6 + $0x210] sm:$0xff]
    %v338 = vld [vmem:[#allocation6 + $0x218] sm:$0xff]
    %v339 = vld [vmem:[#allocation6 + $0x220] sm:$0xff]
    %v340 = vld [vmem:[#allocation6 + $0x228] sm:$0xff]
    %v341 = vld [vmem:[#allocation6 + $0x230] sm:$0xff]
    %v342 = vld [vmem:[#allocation6 + $0x238] sm:$0xff]
    %v343 = vld [vmem:[#allocation6 + $0x240] sm:$0xff]
    %v344 = vld [vmem:[#allocation6 + $0x248] sm:$0xff]
    %v345 = vld [vmem:[#allocation6 + $0x250] sm:$0xff]
    %v346 = vld [vmem:[#allocation6 + $0x258] sm:$0xff]
    %v347 = vld [vmem:[#allocation6 + $0x260] sm:$0xff]
    %v348 = vld [vmem:[#allocation6 + $0x268] sm:$0xff]
    %v349 = vld [vmem:[#allocation6 + $0x270] sm:$0xff]
    %v350 = vld [vmem:[#allocation6 + $0x278] sm:$0xff]
    %v351 = vld [vmem:[#allocation6 + $0x280] sm:$0xff]
    %v352 = vld [vmem:[#allocation6 + $0x288] sm:$0xff]
    %v353 = vld [vmem:[#allocation6 + $0x290] sm:$0xff]
    %v354 = vld [vmem:[#allocation6 + $0x298] sm:$0xff]
    %v355 = vld [vmem:[#allocation6 + $0x2a0] sm:$0xff]
    %v356 = vld [vmem:[#allocation6 + $0x2a8] sm:$0xff]
    %v357 = vld [vmem:[#allocation6 + $0x2b0] sm:$0xff]
    %v358 = vld [vmem:[#allocation6 + $0x2b8] sm:$0xff]
    %v359 = vld [vmem:[#allocation6 + $0x2c0] sm:$0xff]
    %v360 = vld [vmem:[#allocation6 + $0x2c8] sm:$0xff]
    %v361 = vld [vmem:[#allocation6 + $0x2d0] sm:$0xff]
    %v362 = vld [vmem:[#allocation6 + $0x2d8] sm:$0xff]
    %v363 = vld [vmem:[#allocation6 + $0x2e0] sm:$0xff]
    %v364 = vld [vmem:[#allocation6 + $0x2e8] sm:$0xff]
    %v365 = vld [vmem:[#allocation6 + $0x2f0] sm:$0xff]
    %v366 = vld [vmem:[#allocation6 + $0x2f8] sm:$0xff]
    %v367 = vld [vmem:[#allocation6 + $0x300] sm:$0xff]
    %v368 = vld [vmem:[#allocation6 + $0x308] sm:$0xff]
    %v369 = vld [vmem:[#allocation6 + $0x310] sm:$0xff]
    %v370 = vld [vmem:[#allocation6 + $0x318] sm:$0xff]
    %v371 = vld [vmem:[#allocation6 + $0x320] sm:$0xff]
    %v372 = vld [vmem:[#allocation6 + $0x328] sm:$0xff]
    %v373 = vld [vmem:[#allocation6 + $0x330] sm:$0xff]
    %v374 = vld [vmem:[#allocation6 + $0x338] sm:$0xff]
    %v375 = vld [vmem:[#allocation6 + $0x340] sm:$0xff]
    %v376 = vld [vmem:[#allocation6 + $0x348] sm:$0xff]
    %v377 = vld [vmem:[#allocation6 + $0x350] sm:$0xff]
    %v378 = vld [vmem:[#allocation6 + $0x358] sm:$0xff]
    %v379 = vld [vmem:[#allocation6 + $0x360] sm:$0xff]
    %v380 = vld [vmem:[#allocation6 + $0x368] sm:$0xff]
    %v381 = vld [vmem:[#allocation6 + $0x370] sm:$0xff]
    %v382 = vld [vmem:[#allocation6 + $0x378] sm:$0xff]
    %v383 = vld [vmem:[#allocation6 + $0x380] sm:$0xff]
    %v384 = vld [vmem:[#allocation6 + $0x388] sm:$0xff]
    %v385 = vld [vmem:[#allocation6 + $0x390] sm:$0xff]
    %v386 = vld [vmem:[#allocation6 + $0x398] sm:$0xff]
    %v387 = vld [vmem:[#allocation6 + $0x3a0] sm:$0xff]
    %v388 = vld [vmem:[#allocation6 + $0x3a8] sm:$0xff]
    %v389 = vld [vmem:[#allocation6 + $0x3b0] sm:$0xff]
    %v390 = vld [vmem:[#allocation6 + $0x3b8] sm:$0xff]
    %v391 = vld [vmem:[#allocation6 + $0x3c0] sm:$0xff]
    %v392 = vld [vmem:[#allocation6 + $0x3c8] sm:$0xff]
    %v393 = vld [vmem:[#allocation6 + $0x3d0] sm:$0xff]
    %v394 = vld [vmem:[#allocation6 + $0x3d8] sm:$0xff]
    %v395 = vld [vmem:[#allocation6 + $0x3e0] sm:$0xff]
    %v396 = vld [vmem:[#allocation6 + $0x3e8] sm:$0xff]
    %v397 = vld [vmem:[#allocation6 + $0x3f0] sm:$0xff]
    %v398 = vld [vmem:[#allocation6 + $0x3f8] sm:$0xff]
    %v399 = vld [vmem:[#allocation6 + $0x400] sm:$0xff]
    %v400 = vld [vmem:[#allocation6 + $0x408] sm:$0xff]
    %v401 = vld [vmem:[#allocation6 + $0x410] sm:$0xff]
    %v402 = vld [vmem:[#allocation6 + $0x418] sm:$0xff]
    %v403 = vld [vmem:[#allocation6 + $0x420] sm:$0xff]
    %v404 = vld [vmem:[#allocation6 + $0x428] sm:$0xff]
    %v405 = vld [vmem:[#allocation6 + $0x430] sm:$0xff]
    %v406 = vld [vmem:[#allocation6 + $0x438] sm:$0xff]
    %v407 = vld [vmem:[#allocation6 + $0x440] sm:$0xff]
    %v408 = vld [vmem:[#allocation6 + $0x448] sm:$0xff]
    %v409 = vld [vmem:[#allocation6 + $0x450] sm:$0xff]
    %v410 = vld [vmem:[#allocation6 + $0x458] sm:$0xff]
    %v411 = vld [vmem:[#allocation6 + $0x460] sm:$0xff]
    %v412 = vld [vmem:[#allocation6 + $0x468] sm:$0xff]
    %v413 = vld [vmem:[#allocation6 + $0x470] sm:$0xff]
    %v414 = vld [vmem:[#allocation6 + $0x478] sm:$0xff]
    %v415 = vld [vmem:[#allocation6 + $0x480] sm:$0xff]
    %v416 = vld [vmem:[#allocation6 + $0x488] sm:$0xff]
    %v417 = vld [vmem:[#allocation6 + $0x490] sm:$0xff]
    %v418 = vld [vmem:[#allocation6 + $0x498] sm:$0xff]
    %v419 = vld [vmem:[#allocation6 + $0x4a0] sm:$0xff]
    %v420 = vld [vmem:[#allocation6 + $0x4a8] sm:$0xff]
    %v421 = vld [vmem:[#allocation6 + $0x4b0] sm:$0xff]
    %v422 = vld [vmem:[#allocation6 + $0x4b8] sm:$0xff]
    %v423 = vld [vmem:[#allocation6 + $0x4c0] sm:$0xff]
    %v424 = vld [vmem:[#allocation6 + $0x4c8] sm:$0xff]
    %v425 = vld [vmem:[#allocation6 + $0x4d0] sm:$0xff]
    %v426 = vld [vmem:[#allocation6 + $0x4d8] sm:$0xff]
    %v427 = vld [vmem:[#allocation6 + $0x4e0] sm:$0xff]
    %v428 = vld [vmem:[#allocation6 + $0x4e8] sm:$0xff]
    %v429 = vld [vmem:[#allocation6 + $0x4f0] sm:$0xff]
    %v430 = vld [vmem:[#allocation6 + $0x4f8] sm:$0xff]
    %v431 = vld [vmem:[#allocation6 + $0x500] sm:$0xff]
    %v432 = vld [vmem:[#allocation6 + $0x508] sm:$0xff]
    %v433 = vld [vmem:[#allocation6 + $0x510] sm:$0xff]
    %v434 = vld [vmem:[#allocation6 + $0x518] sm:$0xff]
    %v435 = vld [vmem:[#allocation6 + $0x520] sm:$0xff]
    %v436 = vld [vmem:[#allocation6 + $0x528] sm:$0xff]
    %v437 = vld [vmem:[#allocation6 + $0x530] sm:$0xff]
    %v438 = vld [vmem:[#allocation6 + $0x538] sm:$0xff]
    %v439 = vld [vmem:[#allocation6 + $0x540] sm:$0xff]
    %v440 = vld [vmem:[#allocation6 + $0x548] sm:$0xff]
    %v441 = vld [vmem:[#allocation6 + $0x550] sm:$0xff]
    %v442 = vld [vmem:[#allocation6 + $0x558] sm:$0xff]
    %v443 = vld [vmem:[#allocation6 + $0x560] sm:$0xff]
    %v444 = vld [vmem:[#allocation6 + $0x568] sm:$0xff]
    %v445 = vld [vmem:[#allocation6 + $0x570] sm:$0xff]
    %v446 = vld [vmem:[#allocation6 + $0x578] sm:$0xff]
    %v447 = vld [vmem:[#allocation6 + $0x580] sm:$0xff]
    %v448 = vld [vmem:[#allocation6 + $0x588] sm:$0xff]
    %v449 = vld [vmem:[#allocation6 + $0x590] sm:$0xff]
    %v450 = vld [vmem:[#allocation6 + $0x598] sm:$0xff]
    %v451 = vld [vmem:[#allocation6 + $0x5a0] sm:$0xff]
    %v452 = vld [vmem:[#allocation6 + $0x5a8] sm:$0xff]
    %v453 = vld [vmem:[#allocation6 + $0x5b0] sm:$0xff]
    %v454 = vld [vmem:[#allocation6 + $0x5b8] sm:$0xff]
    %v455 = vld [vmem:[#allocation6 + $0x5c0] sm:$0xff]
    %v456 = vld [vmem:[#allocation6 + $0x5c8] sm:$0xff]
    %v457 = vld [vmem:[#allocation6 + $0x5d0] sm:$0xff]
    %v458 = vld [vmem:[#allocation6 + $0x5d8] sm:$0xff]
    %v459 = vld [vmem:[#allocation6 + $0x5e0] sm:$0xff]
    %v460 = vld [vmem:[#allocation6 + $0x5e8] sm:$0xff]
    %v461 = vld [vmem:[#allocation6 + $0x5f0] sm:$0xff]
    %v462 = vld [vmem:[#allocation6 + $0x5f8] sm:$0xff]
    %v463 = vld [vmem:[#allocation6 + $0x600] sm:$0xff]
    %v464 = vld [vmem:[#allocation6 + $0x608] sm:$0xff]
    %v465 = vld [vmem:[#allocation6 + $0x610] sm:$0xff]
    %v466 = vld [vmem:[#allocation6 + $0x618] sm:$0xff]
    %v467 = vld [vmem:[#allocation6 + $0x620] sm:$0xff]
    %v468 = vld [vmem:[#allocation6 + $0x628] sm:$0xff]
    %v469 = vld [vmem:[#allocation6 + $0x630] sm:$0xff]
    %v470 = vld [vmem:[#allocation6 + $0x638] sm:$0xff]
    %v471 = vld [vmem:[#allocation6 + $0x640] sm:$0xff]
    %v472 = vld [vmem:[#allocation6 + $0x648] sm:$0xff]
    %v473 = vld [vmem:[#allocation6 + $0x650] sm:$0xff]
    %v474 = vld [vmem:[#allocation6 + $0x658] sm:$0xff]
    %v475 = vld [vmem:[#allocation6 + $0x660] sm:$0xff]
    %v476 = vld [vmem:[#allocation6 + $0x668] sm:$0xff]
    %v477 = vld [vmem:[#allocation6 + $0x670] sm:$0xff]
    %v478 = vld [vmem:[#allocation6 + $0x678] sm:$0xff]
    %v479 = vld [vmem:[#allocation6 + $0x680] sm:$0xff]
    %v480 = vld [vmem:[#allocation6 + $0x688] sm:$0xff]
    %v481 = vld [vmem:[#allocation6 + $0x690] sm:$0xff]
    %v482 = vld [vmem:[#allocation6 + $0x698] sm:$0xff]
    %v483 = vld [vmem:[#allocation6 + $0x6a0] sm:$0xff]
    %v484 = vld [vmem:[#allocation6 + $0x6a8] sm:$0xff]
    %v485 = vld [vmem:[#allocation6 + $0x6b0] sm:$0xff]
    %v486 = vld [vmem:[#allocation6 + $0x6b8] sm:$0xff]
    %v487 = vld [vmem:[#allocation6 + $0x6c0] sm:$0xff]
    %v488 = vld [vmem:[#allocation6 + $0x6c8] sm:$0xff]
    %v489 = vld [vmem:[#allocation6 + $0x6d0] sm:$0xff]
    %v490 = vld [vmem:[#allocation6 + $0x6d8] sm:$0xff]
    %v491 = vld [vmem:[#allocation6 + $0x6e0] sm:$0xff]
    %v492 = vld [vmem:[#allocation6 + $0x6e8] sm:$0xff]
    %v493 = vld [vmem:[#allocation6 + $0x6f0] sm:$0xff]
    %v494 = vld [vmem:[#allocation6 + $0x6f8] sm:$0xff]
    %v495 = vld [vmem:[#allocation6 + $0x700] sm:$0xff]
    %v496 = vld [vmem:[#allocation6 + $0x708] sm:$0xff]
    %v497 = vld [vmem:[#allocation6 + $0x710] sm:$0xff]
    %v498 = vld [vmem:[#allocation6 + $0x718] sm:$0xff]
    %v499 = vld [vmem:[#allocation6 + $0x720] sm:$0xff]
    %v500 = vld [vmem:[#allocation6 + $0x728] sm:$0xff]
    %v501 = vld [vmem:[#allocation6 + $0x730] sm:$0xff]
    %v502 = vld [vmem:[#allocation6 + $0x738] sm:$0xff]
    %v503 = vld [vmem:[#allocation6 + $0x740] sm:$0xff]
    %v504 = vld [vmem:[#allocation6 + $0x748] sm:$0xff]
    %v505 = vld [vmem:[#allocation6 + $0x750] sm:$0xff]
    %v506 = vld [vmem:[#allocation6 + $0x758] sm:$0xff]
    %v507 = vld [vmem:[#allocation6 + $0x760] sm:$0xff]
    %v508 = vld [vmem:[#allocation6 + $0x768] sm:$0xff]
    %v509 = vld [vmem:[#allocation6 + $0x770] sm:$0xff]
    %v510 = vld [vmem:[#allocation6 + $0x778] sm:$0xff]
    %v511 = vld [vmem:[#allocation6 + $0x780] sm:$0xff]
    %v512 = vld [vmem:[#allocation6 + $0x788] sm:$0xff]
    %v513 = vld [vmem:[#allocation6 + $0x790] sm:$0xff]
    %v514 = vld [vmem:[#allocation6 + $0x798] sm:$0xff]
    %v515 = vld [vmem:[#allocation6 + $0x7a0] sm:$0xff]
    %v516 = vld [vmem:[#allocation6 + $0x7a8] sm:$0xff]
    %v517 = vld [vmem:[#allocation6 + $0x7b0] sm:$0xff]
    %v518 = vld [vmem:[#allocation6 + $0x7b8] sm:$0xff]
    %v519 = vld [vmem:[#allocation6 + $0x7c0] sm:$0xff]
    %v520 = vld [vmem:[#allocation6 + $0x7c8] sm:$0xff]
    %v521 = vld [vmem:[#allocation6 + $0x7d0] sm:$0xff]
    %v522 = vld [vmem:[#allocation6 + $0x7d8] sm:$0xff]
    %v523 = vld [vmem:[#allocation6 + $0x7e0] sm:$0xff]
    %v524 = vld [vmem:[#allocation6 + $0x7e8] sm:$0xff]
    %v525 = vld [vmem:[#allocation6 + $0x7f0] sm:$0xff]
    %v526 = vld [vmem:[#allocation6 + $0x7f8] sm:$0xff]
    %v527 = vld [vmem:[#allocation6 + $0x800] sm:$0xff]
    %v528 = vld [vmem:[#allocation6 + $0x808] sm:$0xff]
    %v529 = vld [vmem:[#allocation6 + $0x810] sm:$0xff]
    %v530 = vld [vmem:[#allocation6 + $0x818] sm:$0xff]
    %v531 = vld [vmem:[#allocation6 + $0x820] sm:$0xff]
    %v532 = vld [vmem:[#allocation6 + $0x828] sm:$0xff]
    %v533 = vld [vmem:[#allocation6 + $0x830] sm:$0xff]
    %v534 = vld [vmem:[#allocation6 + $0x838] sm:$0xff]
    %v535 = vld [vmem:[#allocation6 + $0x840] sm:$0xff]
    %v536 = vld [vmem:[#allocation6 + $0x848] sm:$0xff]
    %v537 = vld [vmem:[#allocation6 + $0x850] sm:$0xff]
    %v538 = vld [vmem:[#allocation6 + $0x858] sm:$0xff]
    %v539 = vld [vmem:[#allocation6 + $0x860] sm:$0xff]
    %v540 = vld [vmem:[#allocation6 + $0x868] sm:$0xff]
    %v541 = vld [vmem:[#allocation6 + $0x870] sm:$0xff]
    %v542 = vld [vmem:[#allocation6 + $0x878] sm:$0xff]
    %v543 = vld [vmem:[#allocation6 + $0x880] sm:$0xff]
    %v544 = vld [vmem:[#allocation6 + $0x888] sm:$0xff]
    %v545 = vld [vmem:[#allocation6 + $0x890] sm:$0xff]
    %v546 = vld [vmem:[#allocation6 + $0x898] sm:$0xff]
    %v547 = vld [vmem:[#allocation6 + $0x8a0] sm:$0xff]
    %v548 = vld [vmem:[#allocation6 + $0x8a8] sm:$0xff]
    %v549 = vld [vmem:[#allocation6 + $0x8b0] sm:$0xff]
    %v550 = vld [vmem:[#allocation6 + $0x8b8] sm:$0xff]
    %v551 = vld [vmem:[#allocation6 + $0x8c0] sm:$0xff]
    %v552 = vld [vmem:[#allocation6 + $0x8c8] sm:$0xff]
    %v553 = vld [vmem:[#allocation6 + $0x8d0] sm:$0xff]
    %v554 = vld [vmem:[#allocation6 + $0x8d8] sm:$0xff]
    %v555 = vld [vmem:[#allocation6 + $0x8e0] sm:$0xff]
    %v556 = vld [vmem:[#allocation6 + $0x8e8] sm:$0xff]
    %v557 = vld [vmem:[#allocation6 + $0x8f0] sm:$0xff]
    %v558 = vld [vmem:[#allocation6 + $0x8f8] sm:$0xff]
    %v559 = vld [vmem:[#allocation6 + $0x900] sm:$0xff]
    %v560 = vld [vmem:[#allocation6 + $0x908] sm:$0xff]
    %v561 = vld [vmem:[#allocation6 + $0x910] sm:$0xff]
    %v562 = vld [vmem:[#allocation6 + $0x918] sm:$0xff]
    %v563 = vld [vmem:[#allocation6 + $0x920] sm:$0xff]
    %v564 = vld [vmem:[#allocation6 + $0x928] sm:$0xff]
    %v565 = vld [vmem:[#allocation6 + $0x930] sm:$0xff]
    %v566 = vld [vmem:[#allocation6 + $0x938] sm:$0xff]
    %v567 = vld [vmem:[#allocation6 + $0x940] sm:$0xff]
    %v568 = vld [vmem:[#allocation6 + $0x948] sm:$0xff]
    %v569 = vld [vmem:[#allocation6 + $0x950] sm:$0xff]
    %v570 = vld [vmem:[#allocation6 + $0x958] sm:$0xff]
    %v571 = vld [vmem:[#allocation6 + $0x960] sm:$0xff]
    %v572 = vld [vmem:[#allocation6 + $0x968] sm:$0xff]
    %v573 = vld [vmem:[#allocation6 + $0x970] sm:$0xff]
    %v574 = vld [vmem:[#allocation6 + $0x978] sm:$0xff]
    %v575 = vld [vmem:[#allocation6 + $0x980] sm:$0xff]
    %v576 = vld [vmem:[#allocation6 + $0x988] sm:$0xff]
    %v577 = vld [vmem:[#allocation6 + $0x990] sm:$0xff]
    %v578 = vld [vmem:[#allocation6 + $0x998] sm:$0xff]
    %v579 = vld [vmem:[#allocation6 + $0x9a0] sm:$0xff]
    %v580 = vld [vmem:[#allocation6 + $0x9a8] sm:$0xff]
    %v581 = vld [vmem:[#allocation6 + $0x9b0] sm:$0xff]
    %v582 = vld [vmem:[#allocation6 + $0x9b8] sm:$0xff]
    %v583 = vld [vmem:[#allocation6 + $0x9c0] sm:$0xff]
    %v584 = vld [vmem:[#allocation6 + $0x9c8] sm:$0xff]
    %v585 = vld [vmem:[#allocation6 + $0x9d0] sm:$0xff]
    %v586 = vld [vmem:[#allocation6 + $0x9d8] sm:$0xff]
    %v587 = vld [vmem:[#allocation6 + $0x9e0] sm:$0xff]
    %v588 = vld [vmem:[#allocation6 + $0x9e8] sm:$0xff]
    %v589 = vld [vmem:[#allocation6 + $0x9f0] sm:$0xff]
    %v590 = vld [vmem:[#allocation6 + $0x9f8] sm:$0xff]
    %v591 = vld [vmem:[#allocation6 + $0xa00] sm:$0xff]
    %v592 = vld [vmem:[#allocation6 + $0xa08] sm:$0xff]
    %v593 = vld [vmem:[#allocation6 + $0xa10] sm:$0xff]
    %v594 = vld [vmem:[#allocation6 + $0xa18] sm:$0xff]
    %v595 = vld [vmem:[#allocation6 + $0xa20] sm:$0xff]
    %v596 = vld [vmem:[#allocation6 + $0xa28] sm:$0xff]
    %v597 = vld [vmem:[#allocation6 + $0xa30] sm:$0xff]
    %v598 = vld [vmem:[#allocation6 + $0xa38] sm:$0xff]
    %v599 = vld [vmem:[#allocation6 + $0xa40] sm:$0xff]
    %v600 = vld [vmem:[#allocation6 + $0xa48] sm:$0xff]
    %v601 = vld [vmem:[#allocation6 + $0xa50] sm:$0xff]
    %v602 = vld [vmem:[#allocation6 + $0xa58] sm:$0xff]
    %v603 = vld [vmem:[#allocation6 + $0xa60] sm:$0xff]
    %v604 = vld [vmem:[#allocation6 + $0xa68] sm:$0xff]
    %v605 = vld [vmem:[#allocation6 + $0xa70] sm:$0xff]
    %v606 = vld [vmem:[#allocation6 + $0xa78] sm:$0xff]
    %v607 = vld [vmem:[#allocation6 + $0xa80] sm:$0xff]
    %v608 = vld [vmem:[#allocation6 + $0xa88] sm:$0xff]
    %v609 = vld [vmem:[#allocation6 + $0xa90] sm:$0xff]
    %v610 = vld [vmem:[#allocation6 + $0xa98] sm:$0xff]
    %v611 = vld [vmem:[#allocation6 + $0xaa0] sm:$0xff]
    %v612 = vld [vmem:[#allocation6 + $0xaa8] sm:$0xff]
    %v613 = vld [vmem:[#allocation6 + $0xab0] sm:$0xff]
    %v614 = vld [vmem:[#allocation6 + $0xab8] sm:$0xff]
    %v615 = vld [vmem:[#allocation6 + $0xac0] sm:$0xff]
    %v616 = vld [vmem:[#allocation6 + $0xac8] sm:$0xff]
    %v617 = vld [vmem:[#allocation6 + $0xad0] sm:$0xff]
    %v618 = vld [vmem:[#allocation6 + $0xad8] sm:$0xff]
    %v619 = vld [vmem:[#allocation6 + $0xae0] sm:$0xff]
    %v620 = vld [vmem:[#allocation6 + $0xae8] sm:$0xff]
    %v621 = vld [vmem:[#allocation6 + $0xaf0] sm:$0xff]
    %v622 = vld [vmem:[#allocation6 + $0xaf8] sm:$0xff]
    %v623 = vld [vmem:[#allocation6 + $0xb00] sm:$0xff]
    %v624 = vld [vmem:[#allocation6 + $0xb08] sm:$0xff]
    %v625 = vld [vmem:[#allocation6 + $0xb10] sm:$0xff]
    %v626 = vld [vmem:[#allocation6 + $0xb18] sm:$0xff]
    %v627 = vld [vmem:[#allocation6 + $0xb20] sm:$0xff]
    %v628 = vld [vmem:[#allocation6 + $0xb28] sm:$0xff]
    %v629 = vld [vmem:[#allocation6 + $0xb30] sm:$0xff]
    %v630 = vld [vmem:[#allocation6 + $0xb38] sm:$0xff]
    %v631 = vld [vmem:[#allocation6 + $0xb40] sm:$0xff]
    %v632 = vld [vmem:[#allocation6 + $0xb48] sm:$0xff]
    %v633 = vld [vmem:[#allocation6 + $0xb50] sm:$0xff]
    %v634 = vld [vmem:[#allocation6 + $0xb58] sm:$0xff]
    %v635 = vld [vmem:[#allocation6 + $0xb60] sm:$0xff]
    %v636 = vld [vmem:[#allocation6 + $0xb68] sm:$0xff]
    %v637 = vld [vmem:[#allocation6 + $0xb70] sm:$0xff]
    %v638 = vld [vmem:[#allocation6 + $0xb78] sm:$0xff]
    %v639 = vld [vmem:[#allocation6 + $0xb80] sm:$0xff]
    %v640 = vld [vmem:[#allocation6 + $0xb88] sm:$0xff]
    %v641 = vld [vmem:[#allocation6 + $0xb90] sm:$0xff]
    %v642 = vld [vmem:[#allocation6 + $0xb98] sm:$0xff]
    %v643 = vld [vmem:[#allocation6 + $0xba0] sm:$0xff]
    %v644 = vld [vmem:[#allocation6 + $0xba8] sm:$0xff]
    %v645 = vld [vmem:[#allocation6 + $0xbb0] sm:$0xff]
    %v646 = vld [vmem:[#allocation6 + $0xbb8] sm:$0xff]
    %v647 = vld [vmem:[#allocation6 + $0xbc0] sm:$0xff]
    %v648 = vld [vmem:[#allocation6 + $0xbc8] sm:$0xff]
    %v649 = vld [vmem:[#allocation6 + $0xbd0] sm:$0xff]
    %v650 = vld [vmem:[#allocation6 + $0xbd8] sm:$0xff]
    %v651 = vld [vmem:[#allocation6 + $0xbe0] sm:$0xff]
    %v652 = vld [vmem:[#allocation6 + $0xbe8] sm:$0xff]
    %v653 = vld [vmem:[#allocation6 + $0xbf0] sm:$0xff]
    %v654 = vld [vmem:[#allocation6 + $0xbf8] sm:$0xff]
    %v655 = vld [vmem:[#allocation6 + $0xc00] sm:$0xff]
    %v656 = vld [vmem:[#allocation6 + $0xc08] sm:$0xff]
    %v657 = vld [vmem:[#allocation6 + $0xc10] sm:$0xff]
    %v658 = vld [vmem:[#allocation6 + $0xc18] sm:$0xff]
    %v659 = vld [vmem:[#allocation6 + $0xc20] sm:$0xff]
    %v660 = vld [vmem:[#allocation6 + $0xc28] sm:$0xff]
    %v661 = vld [vmem:[#allocation6 + $0xc30] sm:$0xff]
    %v662 = vld [vmem:[#allocation6 + $0xc38] sm:$0xff]
    %v663 = vld [vmem:[#allocation6 + $0xc40] sm:$0xff]
    %v664 = vld [vmem:[#allocation6 + $0xc48] sm:$0xff]
    %v665 = vld [vmem:[#allocation6 + $0xc50] sm:$0xff]
    %v666 = vld [vmem:[#allocation6 + $0xc58] sm:$0xff]
    %v667 = vld [vmem:[#allocation6 + $0xc60] sm:$0xff]
    %v668 = vld [vmem:[#allocation6 + $0xc68] sm:$0xff]
    %v669 = vld [vmem:[#allocation6 + $0xc70] sm:$0xff]
    %v670 = vld [vmem:[#allocation6 + $0xc78] sm:$0xff]
    %v671 = vld [vmem:[#allocation6 + $0xc80] sm:$0xff]
    %v672 = vld [vmem:[#allocation6 + $0xc88] sm:$0xff]
    %v673 = vld [vmem:[#allocation6 + $0xc90] sm:$0xff]
    %v674 = vld [vmem:[#allocation6 + $0xc98] sm:$0xff]
    %v675 = vld [vmem:[#allocation6 + $0xca0] sm:$0xff]
    %v676 = vld [vmem:[#allocation6 + $0xca8] sm:$0xff]
    %v677 = vld [vmem:[#allocation6 + $0xcb0] sm:$0xff]
    %v678 = vld [vmem:[#allocation6 + $0xcb8] sm:$0xff]
    %v679 = vld [vmem:[#allocation6 + $0xcc0] sm:$0xff]
    %v680 = vld [vmem:[#allocation6 + $0xcc8] sm:$0xff]
    %v681 = vld [vmem:[#allocation6 + $0xcd0] sm:$0xff]
    %v682 = vld [vmem:[#allocation6 + $0xcd8] sm:$0xff]
    %v683 = vld [vmem:[#allocation6 + $0xce0] sm:$0xff]
    %v684 = vld [vmem:[#allocation6 + $0xce8] sm:$0xff]
    %v685 = vld [vmem:[#allocation6 + $0xcf0] sm:$0xff]
    %v686 = vld [vmem:[#allocation6 + $0xcf8] sm:$0xff]
    %v687 = vld [vmem:[#allocation6 + $0xd00] sm:$0xff]
    %v688 = vld [vmem:[#allocation6 + $0xd08] sm:$0xff]
    %v689 = vld [vmem:[#allocation6 + $0xd10] sm:$0xff]
    %v690 = vld [vmem:[#allocation6 + $0xd18] sm:$0xff]
    %v691 = vld [vmem:[#allocation6 + $0xd20] sm:$0xff]
    %v692 = vld [vmem:[#allocation6 + $0xd28] sm:$0xff]
    %v693 = vld [vmem:[#allocation6 + $0xd30] sm:$0xff]
    %v694 = vld [vmem:[#allocation6 + $0xd38] sm:$0xff]
    %v695 = vld [vmem:[#allocation6 + $0xd40] sm:$0xff]
    %v696 = vld [vmem:[#allocation6 + $0xd48] sm:$0xff]
    %v697 = vld [vmem:[#allocation6 + $0xd50] sm:$0xff]
    %v698 = vld [vmem:[#allocation6 + $0xd58] sm:$0xff]
    %v699 = vld [vmem:[#allocation6 + $0xd60] sm:$0xff]
    %v700 = vld [vmem:[#allocation6 + $0xd68] sm:$0xff]
    %v701 = vld [vmem:[#allocation6 + $0xd70] sm:$0xff]
    %v702 = vld [vmem:[#allocation6 + $0xd78] sm:$0xff]
    %v703 = vld [vmem:[#allocation6 + $0xd80] sm:$0xff]
    %v704 = vld [vmem:[#allocation6 + $0xd88] sm:$0xff]
    %v705 = vld [vmem:[#allocation6 + $0xd90] sm:$0xff]
    %v706 = vld [vmem:[#allocation6 + $0xd98] sm:$0xff]
    %v707 = vld [vmem:[#allocation6 + $0xda0] sm:$0xff]
    %v708 = vld [vmem:[#allocation6 + $0xda8] sm:$0xff]
    %v709 = vld [vmem:[#allocation6 + $0xdb0] sm:$0xff]
    %v710 = vld [vmem:[#allocation6 + $0xdb8] sm:$0xff]
    %v711 = vld [vmem:[#allocation6 + $0xdc0] sm:$0xff]
    %v712 = vld [vmem:[#allocation6 + $0xdc8] sm:$0xff]
    %v713 = vld [vmem:[#allocation6 + $0xdd0] sm:$0xff]
    %v714 = vld [vmem:[#allocation6 + $0xdd8] sm:$0xff]
    %v715 = vld [vmem:[#allocation6 + $0xde0] sm:$0xff]
    %v716 = vld [vmem:[#allocation6 + $0xde8] sm:$0xff]
    %v717 = vld [vmem:[#allocation6 + $0xdf0] sm:$0xff]
    %v718 = vld [vmem:[#allocation6 + $0xdf8] sm:$0xff]
    %v719 = vld [vmem:[#allocation6 + $0xe00] sm:$0xff]
    %v720 = vld [vmem:[#allocation6 + $0xe08] sm:$0xff]
    %v721 = vld [vmem:[#allocation6 + $0xe10] sm:$0xff]
    %v722 = vld [vmem:[#allocation6 + $0xe18] sm:$0xff]
    %v723 = vld [vmem:[#allocation6 + $0xe20] sm:$0xff]
    %v724 = vld [vmem:[#allocation6 + $0xe28] sm:$0xff]
    %v725 = vld [vmem:[#allocation6 + $0xe30] sm:$0xff]
    %v726 = vld [vmem:[#allocation6 + $0xe38] sm:$0xff]
    %v727 = vld [vmem:[#allocation6 + $0xe40] sm:$0xff]
    %v728 = vld [vmem:[#allocation6 + $0xe48] sm:$0xff]
    %v729 = vld [vmem:[#allocation6 + $0xe50] sm:$0xff]
    %v730 = vld [vmem:[#allocation6 + $0xe58] sm:$0xff]
    %v731 = vld [vmem:[#allocation6 + $0xe60] sm:$0xff]
    %v732 = vld [vmem:[#allocation6 + $0xe68] sm:$0xff]
    %v733 = vld [vmem:[#allocation6 + $0xe70] sm:$0xff]
    %v734 = vld [vmem:[#allocation6 + $0xe78] sm:$0xff]
    %v735 = vld [vmem:[#allocation6 + $0xe80] sm:$0xff]
    %v736 = vld [vmem:[#allocation6 + $0xe88] sm:$0xff]
    %v737 = vld [vmem:[#allocation6 + $0xe90] sm:$0xff]
    %v738 = vld [vmem:[#allocation6 + $0xe98] sm:$0xff]
    %v739 = vld [vmem:[#allocation6 + $0xea0] sm:$0xff]
    %v740 = vld [vmem:[#allocation6 + $0xea8] sm:$0xff]
    %v741 = vld [vmem:[#allocation6 + $0xeb0] sm:$0xff]
    %v742 = vld [vmem:[#allocation6 + $0xeb8] sm:$0xff]
    %v743 = vld [vmem:[#allocation6 + $0xec0] sm:$0xff]
    %v744 = vld [vmem:[#allocation6 + $0xec8] sm:$0xff]
    %v745 = vld [vmem:[#allocation6 + $0xed0] sm:$0xff]
    %v746 = vld [vmem:[#allocation6 + $0xed8] sm:$0xff]
    %v747 = vld [vmem:[#allocation6 + $0xee0] sm:$0xff]
    %v748 = vld [vmem:[#allocation6 + $0xee8] sm:$0xff]
    %v749 = vld [vmem:[#allocation6 + $0xef0] sm:$0xff]
    %v750 = vld [vmem:[#allocation6 + $0xef8] sm:$0xff]
    %v751 = vld [vmem:[#allocation6 + $0xf00] sm:$0xff]
    %v752 = vld [vmem:[#allocation6 + $0xf08] sm:$0xff]
    %v753 = vld [vmem:[#allocation6 + $0xf10] sm:$0xff]
    %v754 = vld [vmem:[#allocation6 + $0xf18] sm:$0xff]
    %v755 = vld [vmem:[#allocation6 + $0xf20] sm:$0xff]
    %v756 = vld [vmem:[#allocation6 + $0xf28] sm:$0xff]
    %v757 = vld [vmem:[#allocation6 + $0xf30] sm:$0xff]
    %v758 = vld [vmem:[#allocation6 + $0xf38] sm:$0xff]
    %v759 = vld [vmem:[#allocation6 + $0xf40] sm:$0xff]
    %v760 = vld [vmem:[#allocation6 + $0xf48] sm:$0xff]
    %v761 = vld [vmem:[#allocation6 + $0xf50] sm:$0xff]
    %v762 = vld [vmem:[#allocation6 + $0xf58] sm:$0xff]
    %v763 = vld [vmem:[#allocation6 + $0xf60] sm:$0xff]
    %v764 = vld [vmem:[#allocation6 + $0xf68] sm:$0xff]
    %v765 = vld [vmem:[#allocation6 + $0xf70] sm:$0xff]
    %v766 = vld [vmem:[#allocation6 + $0xf78] sm:$0xff]
    %v767 = vld [vmem:[#allocation6 + $0xf80] sm:$0xff]
    %v768 = vld [vmem:[#allocation6 + $0xf88] sm:$0xff]
    %v769 = vld [vmem:[#allocation6 + $0xf90] sm:$0xff]
    %v770 = vld [vmem:[#allocation6 + $0xf98] sm:$0xff]
    %v771 = vld [vmem:[#allocation6 + $0xfa0] sm:$0xff]
    %v772 = vld [vmem:[#allocation6 + $0xfa8] sm:$0xff]
    %v773 = vld [vmem:[#allocation6 + $0xfb0] sm:$0xff]
    %v774 = vld [vmem:[#allocation6 + $0xfb8] sm:$0xff]
    %v775 = vld [vmem:[#allocation6 + $0xfc0] sm:$0xff]
    %v776 = vld [vmem:[#allocation6 + $0xfc8] sm:$0xff]
    %v777 = vld [vmem:[#allocation6 + $0xfd0] sm:$0xff]
    %v778 = vld [vmem:[#allocation6 + $0xfd8] sm:$0xff]
    %v779 = vld [vmem:[#allocation6 + $0xfe0] sm:$0xff]
    %v780 = vld [vmem:[#allocation6 + $0xfe8] sm:$0xff]
    %v781 = vld [vmem:[#allocation6 + $0xff0] sm:$0xff]
    %v782 = vld [vmem:[#allocation6 + $0xff8] sm:$0xff]
    %v783 = vld [vmem:[#allocation7] sm:$0xff]
    %v785 = vlaneseq
    %v786 = vshrl.u32 %v785, 7
    %v787 = vsub.s32 0, %v786
    %v788 = vrot.slane %v783, %v787
    %v789 = vlaneseq
    %v790 = vshrl.u32 %v789, 7
    %v791 = vsub.s32 1, %v790
    %v792 = vrot.slane %v783, %v791
    %v793 = vlaneseq
    %v794 = vshrl.u32 %v793, 7
    %v795 = vsub.s32 2, %v794
    %v796 = vrot.slane %v783, %v795
    %v797 = vlaneseq
    %v798 = vshrl.u32 %v797, 7
    %v799 = vsub.s32 3, %v798
    %v800 = vrot.slane %v783, %v799
    %v801 = vlaneseq
    %v802 = vshrl.u32 %v801, 7
    %v803 = vsub.s32 4, %v802
    %v804 = vrot.slane %v783, %v803
    %v805 = vlaneseq
    %v806 = vshrl.u32 %v805, 7
    %v807 = vsub.s32 5, %v806
    %v808 = vrot.slane %v783, %v807
    %v809 = vlaneseq
    %v810 = vshrl.u32 %v809, 7
    %v811 = vsub.s32 6, %v810
    %v812 = vrot.slane %v783, %v811
    %v813 = vlaneseq
    %v814 = vshrl.u32 %v813, 7
    %v815 = vsub.s32 7, %v814
    %v816 = vrot.slane %v783, %v815
    %v1337 = vunpack.c.l.b16 %v271
    %v1338 = vunpack.c.h.b16 %v271
    %v1339 = vunpack.c.l.b16 %v272
    %v1340 = vunpack.c.h.b16 %v272
    %v1341 = vunpack.c.l.b16 %v273
    %v1342 = vunpack.c.h.b16 %v273
    %v1343 = vunpack.c.l.b16 %v274
    %v1344 = vunpack.c.h.b16 %v274
    %v1345 = vunpack.c.l.b16 %v275
    %v1346 = vunpack.c.h.b16 %v275
    %v1347 = vunpack.c.l.b16 %v276
    %v1348 = vunpack.c.h.b16 %v276
    %v1349 = vunpack.c.l.b16 %v277
    %v1350 = vunpack.c.h.b16 %v277
    %v1351 = vunpack.c.l.b16 %v278
    %v1352 = vunpack.c.h.b16 %v278
    %v1353 = vunpack.c.l.b16 %v279
    %v1354 = vunpack.c.h.b16 %v279
    %v1355 = vunpack.c.l.b16 %v280
    %v1356 = vunpack.c.h.b16 %v280
    %v1357 = vunpack.c.l.b16 %v281
    %v1358 = vunpack.c.h.b16 %v281
    %v1359 = vunpack.c.l.b16 %v282
    %v1360 = vunpack.c.h.b16 %v282
    %v1361 = vunpack.c.l.b16 %v283
    %v1362 = vunpack.c.h.b16 %v283
    %v1363 = vunpack.c.l.b16 %v284
    %v1364 = vunpack.c.h.b16 %v284
    %v1365 = vunpack.c.l.b16 %v285
    %v1366 = vunpack.c.h.b16 %v285
    %v1367 = vunpack.c.l.b16 %v286
    %v1368 = vunpack.c.h.b16 %v286
    %v1369 = vunpack.c.l.b16 %v287
    %v1370 = vunpack.c.h.b16 %v287
    %v1371 = vunpack.c.l.b16 %v288
    %v1372 = vunpack.c.h.b16 %v288
    %v1373 = vunpack.c.l.b16 %v289
    %v1374 = vunpack.c.h.b16 %v289
    %v1375 = vunpack.c.l.b16 %v290
    %v1376 = vunpack.c.h.b16 %v290
    %v1377 = vunpack.c.l.b16 %v291
    %v1378 = vunpack.c.h.b16 %v291
    %v1379 = vunpack.c.l.b16 %v292
    %v1380 = vunpack.c.h.b16 %v292
    %v1381 = vunpack.c.l.b16 %v293
    %v1382 = vunpack.c.h.b16 %v293
    %v1383 = vunpack.c.l.b16 %v294
    %v1384 = vunpack.c.h.b16 %v294
    %v1385 = vunpack.c.l.b16 %v295
    %v1386 = vunpack.c.h.b16 %v295
    %v1387 = vunpack.c.l.b16 %v296
    %v1388 = vunpack.c.h.b16 %v296
    %v1389 = vunpack.c.l.b16 %v297
    %v1390 = vunpack.c.h.b16 %v297
    %v1391 = vunpack.c.l.b16 %v298
    %v1392 = vunpack.c.h.b16 %v298
    %v1393 = vunpack.c.l.b16 %v299
    %v1394 = vunpack.c.h.b16 %v299
    %v1395 = vunpack.c.l.b16 %v300
    %v1396 = vunpack.c.h.b16 %v300
    %v1397 = vunpack.c.l.b16 %v301
    %v1398 = vunpack.c.h.b16 %v301
    %v1399 = vunpack.c.l.b16 %v302
    %v1400 = vunpack.c.h.b16 %v302
    %v1401 = vunpack.c.l.b16 %v303
    %v1402 = vunpack.c.h.b16 %v303
    %v1403 = vunpack.c.l.b16 %v304
    %v1404 = vunpack.c.h.b16 %v304
    %v1405 = vunpack.c.l.b16 %v305
    %v1406 = vunpack.c.h.b16 %v305
    %v1407 = vunpack.c.l.b16 %v306
    %v1408 = vunpack.c.h.b16 %v306
    %v1409 = vunpack.c.l.b16 %v307
    %v1410 = vunpack.c.h.b16 %v307
    %v1411 = vunpack.c.l.b16 %v308
    %v1412 = vunpack.c.h.b16 %v308
    %v1413 = vunpack.c.l.b16 %v309
    %v1414 = vunpack.c.h.b16 %v309
    %v1415 = vunpack.c.l.b16 %v310
    %v1416 = vunpack.c.h.b16 %v310
    %v1417 = vunpack.c.l.b16 %v311
    %v1418 = vunpack.c.h.b16 %v311
    %v1419 = vunpack.c.l.b16 %v312
    %v1420 = vunpack.c.h.b16 %v312
    %v1421 = vunpack.c.l.b16 %v313
    %v1422 = vunpack.c.h.b16 %v313
    %v1423 = vunpack.c.l.b16 %v314
    %v1424 = vunpack.c.h.b16 %v314
    %v1425 = vunpack.c.l.b16 %v315
    %v1426 = vunpack.c.h.b16 %v315
    %v1427 = vunpack.c.l.b16 %v316
    %v1428 = vunpack.c.h.b16 %v316
    %v1429 = vunpack.c.l.b16 %v317
    %v1430 = vunpack.c.h.b16 %v317
    %v1431 = vunpack.c.l.b16 %v318
    %v1432 = vunpack.c.h.b16 %v318
    %v1433 = vunpack.c.l.b16 %v319
    %v1434 = vunpack.c.h.b16 %v319
    %v1435 = vunpack.c.l.b16 %v320
    %v1436 = vunpack.c.h.b16 %v320
    %v1437 = vunpack.c.l.b16 %v321
    %v1438 = vunpack.c.h.b16 %v321
    %v1439 = vunpack.c.l.b16 %v322
    %v1440 = vunpack.c.h.b16 %v322
    %v1441 = vunpack.c.l.b16 %v323
    %v1442 = vunpack.c.h.b16 %v323
    %v1443 = vunpack.c.l.b16 %v324
    %v1444 = vunpack.c.h.b16 %v324
    %v1445 = vunpack.c.l.b16 %v325
    %v1446 = vunpack.c.h.b16 %v325
    %v1447 = vunpack.c.l.b16 %v326
    %v1448 = vunpack.c.h.b16 %v326
    %v1449 = vunpack.c.l.b16 %v327
    %v1450 = vunpack.c.h.b16 %v327
    %v1451 = vunpack.c.l.b16 %v328
    %v1452 = vunpack.c.h.b16 %v328
    %v1453 = vunpack.c.l.b16 %v329
    %v1454 = vunpack.c.h.b16 %v329
    %v1455 = vunpack.c.l.b16 %v330
    %v1456 = vunpack.c.h.b16 %v330
    %v1457 = vunpack.c.l.b16 %v331
    %v1458 = vunpack.c.h.b16 %v331
    %v1459 = vunpack.c.l.b16 %v332
    %v1460 = vunpack.c.h.b16 %v332
    %v1461 = vunpack.c.l.b16 %v333
    %v1462 = vunpack.c.h.b16 %v333
    %v1463 = vunpack.c.l.b16 %v334
    %v1464 = vunpack.c.h.b16 %v334
    %v1465 = vunpack.c.l.b16 %v335
    %v1466 = vunpack.c.h.b16 %v335
    %v1467 = vunpack.c.l.b16 %v336
    %v1468 = vunpack.c.h.b16 %v336
    %v1469 = vunpack.c.l.b16 %v337
    %v1470 = vunpack.c.h.b16 %v337
    %v1471 = vunpack.c.l.b16 %v338
    %v1472 = vunpack.c.h.b16 %v338
    %v1473 = vunpack.c.l.b16 %v339
    %v1474 = vunpack.c.h.b16 %v339
    %v1475 = vunpack.c.l.b16 %v340
    %v1476 = vunpack.c.h.b16 %v340
    %v1477 = vunpack.c.l.b16 %v341
    %v1478 = vunpack.c.h.b16 %v341
    %v1479 = vunpack.c.l.b16 %v342
    %v1480 = vunpack.c.h.b16 %v342
    %v1481 = vunpack.c.l.b16 %v343
    %v1482 = vunpack.c.h.b16 %v343
    %v1483 = vunpack.c.l.b16 %v344
    %v1484 = vunpack.c.h.b16 %v344
    %v1485 = vunpack.c.l.b16 %v345
    %v1486 = vunpack.c.h.b16 %v345
    %v1487 = vunpack.c.l.b16 %v346
    %v1488 = vunpack.c.h.b16 %v346
    %v1489 = vunpack.c.l.b16 %v347
    %v1490 = vunpack.c.h.b16 %v347
    %v1491 = vunpack.c.l.b16 %v348
    %v1492 = vunpack.c.h.b16 %v348
    %v1493 = vunpack.c.l.b16 %v349
    %v1494 = vunpack.c.h.b16 %v349
    %v1495 = vunpack.c.l.b16 %v350
    %v1496 = vunpack.c.h.b16 %v350
    %v1497 = vunpack.c.l.b16 %v351
    %v1498 = vunpack.c.h.b16 %v351
    %v1499 = vunpack.c.l.b16 %v352
    %v1500 = vunpack.c.h.b16 %v352
    %v1501 = vunpack.c.l.b16 %v353
    %v1502 = vunpack.c.h.b16 %v353
    %v1503 = vunpack.c.l.b16 %v354
    %v1504 = vunpack.c.h.b16 %v354
    %v1505 = vunpack.c.l.b16 %v355
    %v1506 = vunpack.c.h.b16 %v355
    %v1507 = vunpack.c.l.b16 %v356
    %v1508 = vunpack.c.h.b16 %v356
    %v1509 = vunpack.c.l.b16 %v357
    %v1510 = vunpack.c.h.b16 %v357
    %v1511 = vunpack.c.l.b16 %v358
    %v1512 = vunpack.c.h.b16 %v358
    %v1513 = vunpack.c.l.b16 %v359
    %v1514 = vunpack.c.h.b16 %v359
    %v1515 = vunpack.c.l.b16 %v360
    %v1516 = vunpack.c.h.b16 %v360
    %v1517 = vunpack.c.l.b16 %v361
    %v1518 = vunpack.c.h.b16 %v361
    %v1519 = vunpack.c.l.b16 %v362
    %v1520 = vunpack.c.h.b16 %v362
    %v1521 = vunpack.c.l.b16 %v363
    %v1522 = vunpack.c.h.b16 %v363
    %v1523 = vunpack.c.l.b16 %v364
    %v1524 = vunpack.c.h.b16 %v364
    %v1525 = vunpack.c.l.b16 %v365
    %v1526 = vunpack.c.h.b16 %v365
    %v1527 = vunpack.c.l.b16 %v366
    %v1528 = vunpack.c.h.b16 %v366
    %v1529 = vunpack.c.l.b16 %v367
    %v1530 = vunpack.c.h.b16 %v367
    %v1531 = vunpack.c.l.b16 %v368
    %v1532 = vunpack.c.h.b16 %v368
    %v1533 = vunpack.c.l.b16 %v369
    %v1534 = vunpack.c.h.b16 %v369
    %v1535 = vunpack.c.l.b16 %v370
    %v1536 = vunpack.c.h.b16 %v370
    %v1537 = vunpack.c.l.b16 %v371
    %v1538 = vunpack.c.h.b16 %v371
    %v1539 = vunpack.c.l.b16 %v372
    %v1540 = vunpack.c.h.b16 %v372
    %v1541 = vunpack.c.l.b16 %v373
    %v1542 = vunpack.c.h.b16 %v373
    %v1543 = vunpack.c.l.b16 %v374
    %v1544 = vunpack.c.h.b16 %v374
    %v1545 = vunpack.c.l.b16 %v375
    %v1546 = vunpack.c.h.b16 %v375
    %v1547 = vunpack.c.l.b16 %v376
    %v1548 = vunpack.c.h.b16 %v376
    %v1549 = vunpack.c.l.b16 %v377
    %v1550 = vunpack.c.h.b16 %v377
    %v1551 = vunpack.c.l.b16 %v378
    %v1552 = vunpack.c.h.b16 %v378
    %v1553 = vunpack.c.l.b16 %v379
    %v1554 = vunpack.c.h.b16 %v379
    %v1555 = vunpack.c.l.b16 %v380
    %v1556 = vunpack.c.h.b16 %v380
    %v1557 = vunpack.c.l.b16 %v381
    %v1558 = vunpack.c.h.b16 %v381
    %v1559 = vunpack.c.l.b16 %v382
    %v1560 = vunpack.c.h.b16 %v382
    %v1561 = vunpack.c.l.b16 %v383
    %v1562 = vunpack.c.h.b16 %v383
    %v1563 = vunpack.c.l.b16 %v384
    %v1564 = vunpack.c.h.b16 %v384
    %v1565 = vunpack.c.l.b16 %v385
    %v1566 = vunpack.c.h.b16 %v385
    %v1567 = vunpack.c.l.b16 %v386
    %v1568 = vunpack.c.h.b16 %v386
    %v1569 = vunpack.c.l.b16 %v387
    %v1570 = vunpack.c.h.b16 %v387
    %v1571 = vunpack.c.l.b16 %v388
    %v1572 = vunpack.c.h.b16 %v388
    %v1573 = vunpack.c.l.b16 %v389
    %v1574 = vunpack.c.h.b16 %v389
    %v1575 = vunpack.c.l.b16 %v390
    %v1576 = vunpack.c.h.b16 %v390
    %v1577 = vunpack.c.l.b16 %v391
    %v1578 = vunpack.c.h.b16 %v391
    %v1579 = vunpack.c.l.b16 %v392
    %v1580 = vunpack.c.h.b16 %v392
    %v1581 = vunpack.c.l.b16 %v393
    %v1582 = vunpack.c.h.b16 %v393
    %v1583 = vunpack.c.l.b16 %v394
    %v1584 = vunpack.c.h.b16 %v394
    %v1585 = vunpack.c.l.b16 %v395
    %v1586 = vunpack.c.h.b16 %v395
    %v1587 = vunpack.c.l.b16 %v396
    %v1588 = vunpack.c.h.b16 %v396
    %v1589 = vunpack.c.l.b16 %v397
    %v1590 = vunpack.c.h.b16 %v397
    %v1591 = vunpack.c.l.b16 %v398
    %v1592 = vunpack.c.h.b16 %v398
    %v1593 = vunpack.c.l.b16 %v399
    %v1594 = vunpack.c.h.b16 %v399
    %v1595 = vunpack.c.l.b16 %v400
    %v1596 = vunpack.c.h.b16 %v400
    %v1597 = vunpack.c.l.b16 %v401
    %v1598 = vunpack.c.h.b16 %v401
    %v1599 = vunpack.c.l.b16 %v402
    %v1600 = vunpack.c.h.b16 %v402
    %v1601 = vunpack.c.l.b16 %v403
    %v1602 = vunpack.c.h.b16 %v403
    %v1603 = vunpack.c.l.b16 %v404
    %v1604 = vunpack.c.h.b16 %v404
    %v1605 = vunpack.c.l.b16 %v405
    %v1606 = vunpack.c.h.b16 %v405
    %v1607 = vunpack.c.l.b16 %v406
    %v1608 = vunpack.c.h.b16 %v406
    %v1609 = vunpack.c.l.b16 %v407
    %v1610 = vunpack.c.h.b16 %v407
    %v1611 = vunpack.c.l.b16 %v408
    %v1612 = vunpack.c.h.b16 %v408
    %v1613 = vunpack.c.l.b16 %v409
    %v1614 = vunpack.c.h.b16 %v409
    %v1615 = vunpack.c.l.b16 %v410
    %v1616 = vunpack.c.h.b16 %v410
    %v1617 = vunpack.c.l.b16 %v411
    %v1618 = vunpack.c.h.b16 %v411
    %v1619 = vunpack.c.l.b16 %v412
    %v1620 = vunpack.c.h.b16 %v412
    %v1621 = vunpack.c.l.b16 %v413
    %v1622 = vunpack.c.h.b16 %v413
    %v1623 = vunpack.c.l.b16 %v414
    %v1624 = vunpack.c.h.b16 %v414
    %v1625 = vunpack.c.l.b16 %v415
    %v1626 = vunpack.c.h.b16 %v415
    %v1627 = vunpack.c.l.b16 %v416
    %v1628 = vunpack.c.h.b16 %v416
    %v1629 = vunpack.c.l.b16 %v417
    %v1630 = vunpack.c.h.b16 %v417
    %v1631 = vunpack.c.l.b16 %v418
    %v1632 = vunpack.c.h.b16 %v418
    %v1633 = vunpack.c.l.b16 %v419
    %v1634 = vunpack.c.h.b16 %v419
    %v1635 = vunpack.c.l.b16 %v420
    %v1636 = vunpack.c.h.b16 %v420
    %v1637 = vunpack.c.l.b16 %v421
    %v1638 = vunpack.c.h.b16 %v421
    %v1639 = vunpack.c.l.b16 %v422
    %v1640 = vunpack.c.h.b16 %v422
    %v1641 = vunpack.c.l.b16 %v423
    %v1642 = vunpack.c.h.b16 %v423
    %v1643 = vunpack.c.l.b16 %v424
    %v1644 = vunpack.c.h.b16 %v424
    %v1645 = vunpack.c.l.b16 %v425
    %v1646 = vunpack.c.h.b16 %v425
    %v1647 = vunpack.c.l.b16 %v426
    %v1648 = vunpack.c.h.b16 %v426
    %v1649 = vunpack.c.l.b16 %v427
    %v1650 = vunpack.c.h.b16 %v427
    %v1651 = vunpack.c.l.b16 %v428
    %v1652 = vunpack.c.h.b16 %v428
    %v1653 = vunpack.c.l.b16 %v429
    %v1654 = vunpack.c.h.b16 %v429
    %v1655 = vunpack.c.l.b16 %v430
    %v1656 = vunpack.c.h.b16 %v430
    %v1657 = vunpack.c.l.b16 %v431
    %v1658 = vunpack.c.h.b16 %v431
    %v1659 = vunpack.c.l.b16 %v432
    %v1660 = vunpack.c.h.b16 %v432
    %v1661 = vunpack.c.l.b16 %v433
    %v1662 = vunpack.c.h.b16 %v433
    %v1663 = vunpack.c.l.b16 %v434
    %v1664 = vunpack.c.h.b16 %v434
    %v1665 = vunpack.c.l.b16 %v435
    %v1666 = vunpack.c.h.b16 %v435
    %v1667 = vunpack.c.l.b16 %v436
    %v1668 = vunpack.c.h.b16 %v436
    %v1669 = vunpack.c.l.b16 %v437
    %v1670 = vunpack.c.h.b16 %v437
    %v1671 = vunpack.c.l.b16 %v438
    %v1672 = vunpack.c.h.b16 %v438
    %v1673 = vunpack.c.l.b16 %v439
    %v1674 = vunpack.c.h.b16 %v439
    %v1675 = vunpack.c.l.b16 %v440
    %v1676 = vunpack.c.h.b16 %v440
    %v1677 = vunpack.c.l.b16 %v441
    %v1678 = vunpack.c.h.b16 %v441
    %v1679 = vunpack.c.l.b16 %v442
    %v1680 = vunpack.c.h.b16 %v442
    %v1681 = vunpack.c.l.b16 %v443
    %v1682 = vunpack.c.h.b16 %v443
    %v1683 = vunpack.c.l.b16 %v444
    %v1684 = vunpack.c.h.b16 %v444
    %v1685 = vunpack.c.l.b16 %v445
    %v1686 = vunpack.c.h.b16 %v445
    %v1687 = vunpack.c.l.b16 %v446
    %v1688 = vunpack.c.h.b16 %v446
    %v1689 = vunpack.c.l.b16 %v447
    %v1690 = vunpack.c.h.b16 %v447
    %v1691 = vunpack.c.l.b16 %v448
    %v1692 = vunpack.c.h.b16 %v448
    %v1693 = vunpack.c.l.b16 %v449
    %v1694 = vunpack.c.h.b16 %v449
    %v1695 = vunpack.c.l.b16 %v450
    %v1696 = vunpack.c.h.b16 %v450
    %v1697 = vunpack.c.l.b16 %v451
    %v1698 = vunpack.c.h.b16 %v451
    %v1699 = vunpack.c.l.b16 %v452
    %v1700 = vunpack.c.h.b16 %v452
    %v1701 = vunpack.c.l.b16 %v453
    %v1702 = vunpack.c.h.b16 %v453
    %v1703 = vunpack.c.l.b16 %v454
    %v1704 = vunpack.c.h.b16 %v454
    %v1705 = vunpack.c.l.b16 %v455
    %v1706 = vunpack.c.h.b16 %v455
    %v1707 = vunpack.c.l.b16 %v456
    %v1708 = vunpack.c.h.b16 %v456
    %v1709 = vunpack.c.l.b16 %v457
    %v1710 = vunpack.c.h.b16 %v457
    %v1711 = vunpack.c.l.b16 %v458
    %v1712 = vunpack.c.h.b16 %v458
    %v1713 = vunpack.c.l.b16 %v459
    %v1714 = vunpack.c.h.b16 %v459
    %v1715 = vunpack.c.l.b16 %v460
    %v1716 = vunpack.c.h.b16 %v460
    %v1717 = vunpack.c.l.b16 %v461
    %v1718 = vunpack.c.h.b16 %v461
    %v1719 = vunpack.c.l.b16 %v462
    %v1720 = vunpack.c.h.b16 %v462
    %v1721 = vunpack.c.l.b16 %v463
    %v1722 = vunpack.c.h.b16 %v463
    %v1723 = vunpack.c.l.b16 %v464
    %v1724 = vunpack.c.h.b16 %v464
    %v1725 = vunpack.c.l.b16 %v465
    %v1726 = vunpack.c.h.b16 %v465
    %v1727 = vunpack.c.l.b16 %v466
    %v1728 = vunpack.c.h.b16 %v466
    %v1729 = vunpack.c.l.b16 %v467
    %v1730 = vunpack.c.h.b16 %v467
    %v1731 = vunpack.c.l.b16 %v468
    %v1732 = vunpack.c.h.b16 %v468
    %v1733 = vunpack.c.l.b16 %v469
    %v1734 = vunpack.c.h.b16 %v469
    %v1735 = vunpack.c.l.b16 %v470
    %v1736 = vunpack.c.h.b16 %v470
    %v1737 = vunpack.c.l.b16 %v471
    %v1738 = vunpack.c.h.b16 %v471
    %v1739 = vunpack.c.l.b16 %v472
    %v1740 = vunpack.c.h.b16 %v472
    %v1741 = vunpack.c.l.b16 %v473
    %v1742 = vunpack.c.h.b16 %v473
    %v1743 = vunpack.c.l.b16 %v474
    %v1744 = vunpack.c.h.b16 %v474
    %v1745 = vunpack.c.l.b16 %v475
    %v1746 = vunpack.c.h.b16 %v475
    %v1747 = vunpack.c.l.b16 %v476
    %v1748 = vunpack.c.h.b16 %v476
    %v1749 = vunpack.c.l.b16 %v477
    %v1750 = vunpack.c.h.b16 %v477
    %v1751 = vunpack.c.l.b16 %v478
    %v1752 = vunpack.c.h.b16 %v478
    %v1753 = vunpack.c.l.b16 %v479
    %v1754 = vunpack.c.h.b16 %v479
    %v1755 = vunpack.c.l.b16 %v480
    %v1756 = vunpack.c.h.b16 %v480
    %v1757 = vunpack.c.l.b16 %v481
    %v1758 = vunpack.c.h.b16 %v481
    %v1759 = vunpack.c.l.b16 %v482
    %v1760 = vunpack.c.h.b16 %v482
    %v1761 = vunpack.c.l.b16 %v483
    %v1762 = vunpack.c.h.b16 %v483
    %v1763 = vunpack.c.l.b16 %v484
    %v1764 = vunpack.c.h.b16 %v484
    %v1765 = vunpack.c.l.b16 %v485
    %v1766 = vunpack.c.h.b16 %v485
    %v1767 = vunpack.c.l.b16 %v486
    %v1768 = vunpack.c.h.b16 %v486
    %v1769 = vunpack.c.l.b16 %v487
    %v1770 = vunpack.c.h.b16 %v487
    %v1771 = vunpack.c.l.b16 %v488
    %v1772 = vunpack.c.h.b16 %v488
    %v1773 = vunpack.c.l.b16 %v489
    %v1774 = vunpack.c.h.b16 %v489
    %v1775 = vunpack.c.l.b16 %v490
    %v1776 = vunpack.c.h.b16 %v490
    %v1777 = vunpack.c.l.b16 %v491
    %v1778 = vunpack.c.h.b16 %v491
    %v1779 = vunpack.c.l.b16 %v492
    %v1780 = vunpack.c.h.b16 %v492
    %v1781 = vunpack.c.l.b16 %v493
    %v1782 = vunpack.c.h.b16 %v493
    %v1783 = vunpack.c.l.b16 %v494
    %v1784 = vunpack.c.h.b16 %v494
    %v1785 = vunpack.c.l.b16 %v495
    %v1786 = vunpack.c.h.b16 %v495
    %v1787 = vunpack.c.l.b16 %v496
    %v1788 = vunpack.c.h.b16 %v496
    %v1789 = vunpack.c.l.b16 %v497
    %v1790 = vunpack.c.h.b16 %v497
    %v1791 = vunpack.c.l.b16 %v498
    %v1792 = vunpack.c.h.b16 %v498
    %v1793 = vunpack.c.l.b16 %v499
    %v1794 = vunpack.c.h.b16 %v499
    %v1795 = vunpack.c.l.b16 %v500
    %v1796 = vunpack.c.h.b16 %v500
    %v1797 = vunpack.c.l.b16 %v501
    %v1798 = vunpack.c.h.b16 %v501
    %v1799 = vunpack.c.l.b16 %v502
    %v1800 = vunpack.c.h.b16 %v502
    %v1801 = vunpack.c.l.b16 %v503
    %v1802 = vunpack.c.h.b16 %v503
    %v1803 = vunpack.c.l.b16 %v504
    %v1804 = vunpack.c.h.b16 %v504
    %v1805 = vunpack.c.l.b16 %v505
    %v1806 = vunpack.c.h.b16 %v505
    %v1807 = vunpack.c.l.b16 %v506
    %v1808 = vunpack.c.h.b16 %v506
    %v1809 = vunpack.c.l.b16 %v507
    %v1810 = vunpack.c.h.b16 %v507
    %v1811 = vunpack.c.l.b16 %v508
    %v1812 = vunpack.c.h.b16 %v508
    %v1813 = vunpack.c.l.b16 %v509
    %v1814 = vunpack.c.h.b16 %v509
    %v1815 = vunpack.c.l.b16 %v510
    %v1816 = vunpack.c.h.b16 %v510
    %v1817 = vunpack.c.l.b16 %v511
    %v1818 = vunpack.c.h.b16 %v511
    %v1819 = vunpack.c.l.b16 %v512
    %v1820 = vunpack.c.h.b16 %v512
    %v1821 = vunpack.c.l.b16 %v513
    %v1822 = vunpack.c.h.b16 %v513
    %v1823 = vunpack.c.l.b16 %v514
    %v1824 = vunpack.c.h.b16 %v514
    %v1825 = vunpack.c.l.b16 %v515
    %v1826 = vunpack.c.h.b16 %v515
    %v1827 = vunpack.c.l.b16 %v516
    %v1828 = vunpack.c.h.b16 %v516
    %v1829 = vunpack.c.l.b16 %v517
    %v1830 = vunpack.c.h.b16 %v517
    %v1831 = vunpack.c.l.b16 %v518
    %v1832 = vunpack.c.h.b16 %v518
    %v1833 = vunpack.c.l.b16 %v519
    %v1834 = vunpack.c.h.b16 %v519
    %v1835 = vunpack.c.l.b16 %v520
    %v1836 = vunpack.c.h.b16 %v520
    %v1837 = vunpack.c.l.b16 %v521
    %v1838 = vunpack.c.h.b16 %v521
    %v1839 = vunpack.c.l.b16 %v522
    %v1840 = vunpack.c.h.b16 %v522
    %v1841 = vunpack.c.l.b16 %v523
    %v1842 = vunpack.c.h.b16 %v523
    %v1843 = vunpack.c.l.b16 %v524
    %v1844 = vunpack.c.h.b16 %v524
    %v1845 = vunpack.c.l.b16 %v525
    %v1846 = vunpack.c.h.b16 %v525
    %v1847 = vunpack.c.l.b16 %v526
    %v1848 = vunpack.c.h.b16 %v526
    %v1849 = vunpack.c.l.b16 %v527
    %v1850 = vunpack.c.h.b16 %v527
    %v1851 = vunpack.c.l.b16 %v528
    %v1852 = vunpack.c.h.b16 %v528
    %v1853 = vunpack.c.l.b16 %v529
    %v1854 = vunpack.c.h.b16 %v529
    %v1855 = vunpack.c.l.b16 %v530
    %v1856 = vunpack.c.h.b16 %v530
    %v1857 = vunpack.c.l.b16 %v531
    %v1858 = vunpack.c.h.b16 %v531
    %v1859 = vunpack.c.l.b16 %v532
    %v1860 = vunpack.c.h.b16 %v532
    %v1861 = vunpack.c.l.b16 %v533
    %v1862 = vunpack.c.h.b16 %v533
    %v1863 = vunpack.c.l.b16 %v534
    %v1864 = vunpack.c.h.b16 %v534
    %v1865 = vunpack.c.l.b16 %v535
    %v1866 = vunpack.c.h.b16 %v535
    %v1867 = vunpack.c.l.b16 %v536
    %v1868 = vunpack.c.h.b16 %v536
    %v1869 = vunpack.c.l.b16 %v537
    %v1870 = vunpack.c.h.b16 %v537
    %v1871 = vunpack.c.l.b16 %v538
    %v1872 = vunpack.c.h.b16 %v538
    %v1873 = vunpack.c.l.b16 %v539
    %v1874 = vunpack.c.h.b16 %v539
    %v1875 = vunpack.c.l.b16 %v540
    %v1876 = vunpack.c.h.b16 %v540
    %v1877 = vunpack.c.l.b16 %v541
    %v1878 = vunpack.c.h.b16 %v541
    %v1879 = vunpack.c.l.b16 %v542
    %v1880 = vunpack.c.h.b16 %v542
    %v1881 = vunpack.c.l.b16 %v543
    %v1882 = vunpack.c.h.b16 %v543
    %v1883 = vunpack.c.l.b16 %v544
    %v1884 = vunpack.c.h.b16 %v544
    %v1885 = vunpack.c.l.b16 %v545
    %v1886 = vunpack.c.h.b16 %v545
    %v1887 = vunpack.c.l.b16 %v546
    %v1888 = vunpack.c.h.b16 %v546
    %v1889 = vunpack.c.l.b16 %v547
    %v1890 = vunpack.c.h.b16 %v547
    %v1891 = vunpack.c.l.b16 %v548
    %v1892 = vunpack.c.h.b16 %v548
    %v1893 = vunpack.c.l.b16 %v549
    %v1894 = vunpack.c.h.b16 %v549
    %v1895 = vunpack.c.l.b16 %v550
    %v1896 = vunpack.c.h.b16 %v550
    %v1897 = vunpack.c.l.b16 %v551
    %v1898 = vunpack.c.h.b16 %v551
    %v1899 = vunpack.c.l.b16 %v552
    %v1900 = vunpack.c.h.b16 %v552
    %v1901 = vunpack.c.l.b16 %v553
    %v1902 = vunpack.c.h.b16 %v553
    %v1903 = vunpack.c.l.b16 %v554
    %v1904 = vunpack.c.h.b16 %v554
    %v1905 = vunpack.c.l.b16 %v555
    %v1906 = vunpack.c.h.b16 %v555
    %v1907 = vunpack.c.l.b16 %v556
    %v1908 = vunpack.c.h.b16 %v556
    %v1909 = vunpack.c.l.b16 %v557
    %v1910 = vunpack.c.h.b16 %v557
    %v1911 = vunpack.c.l.b16 %v558
    %v1912 = vunpack.c.h.b16 %v558
    %v1913 = vunpack.c.l.b16 %v559
    %v1914 = vunpack.c.h.b16 %v559
    %v1915 = vunpack.c.l.b16 %v560
    %v1916 = vunpack.c.h.b16 %v560
    %v1917 = vunpack.c.l.b16 %v561
    %v1918 = vunpack.c.h.b16 %v561
    %v1919 = vunpack.c.l.b16 %v562
    %v1920 = vunpack.c.h.b16 %v562
    %v1921 = vunpack.c.l.b16 %v563
    %v1922 = vunpack.c.h.b16 %v563
    %v1923 = vunpack.c.l.b16 %v564
    %v1924 = vunpack.c.h.b16 %v564
    %v1925 = vunpack.c.l.b16 %v565
    %v1926 = vunpack.c.h.b16 %v565
    %v1927 = vunpack.c.l.b16 %v566
    %v1928 = vunpack.c.h.b16 %v566
    %v1929 = vunpack.c.l.b16 %v567
    %v1930 = vunpack.c.h.b16 %v567
    %v1931 = vunpack.c.l.b16 %v568
    %v1932 = vunpack.c.h.b16 %v568
    %v1933 = vunpack.c.l.b16 %v569
    %v1934 = vunpack.c.h.b16 %v569
    %v1935 = vunpack.c.l.b16 %v570
    %v1936 = vunpack.c.h.b16 %v570
    %v1937 = vunpack.c.l.b16 %v571
    %v1938 = vunpack.c.h.b16 %v571
    %v1939 = vunpack.c.l.b16 %v572
    %v1940 = vunpack.c.h.b16 %v572
    %v1941 = vunpack.c.l.b16 %v573
    %v1942 = vunpack.c.h.b16 %v573
    %v1943 = vunpack.c.l.b16 %v574
    %v1944 = vunpack.c.h.b16 %v574
    %v1945 = vunpack.c.l.b16 %v575
    %v1946 = vunpack.c.h.b16 %v575
    %v1947 = vunpack.c.l.b16 %v576
    %v1948 = vunpack.c.h.b16 %v576
    %v1949 = vunpack.c.l.b16 %v577
    %v1950 = vunpack.c.h.b16 %v577
    %v1951 = vunpack.c.l.b16 %v578
    %v1952 = vunpack.c.h.b16 %v578
    %v1953 = vunpack.c.l.b16 %v579
    %v1954 = vunpack.c.h.b16 %v579
    %v1955 = vunpack.c.l.b16 %v580
    %v1956 = vunpack.c.h.b16 %v580
    %v1957 = vunpack.c.l.b16 %v581
    %v1958 = vunpack.c.h.b16 %v581
    %v1959 = vunpack.c.l.b16 %v582
    %v1960 = vunpack.c.h.b16 %v582
    %v1961 = vunpack.c.l.b16 %v583
    %v1962 = vunpack.c.h.b16 %v583
    %v1963 = vunpack.c.l.b16 %v584
    %v1964 = vunpack.c.h.b16 %v584
    %v1965 = vunpack.c.l.b16 %v585
    %v1966 = vunpack.c.h.b16 %v585
    %v1967 = vunpack.c.l.b16 %v586
    %v1968 = vunpack.c.h.b16 %v586
    %v1969 = vunpack.c.l.b16 %v587
    %v1970 = vunpack.c.h.b16 %v587
    %v1971 = vunpack.c.l.b16 %v588
    %v1972 = vunpack.c.h.b16 %v588
    %v1973 = vunpack.c.l.b16 %v589
    %v1974 = vunpack.c.h.b16 %v589
    %v1975 = vunpack.c.l.b16 %v590
    %v1976 = vunpack.c.h.b16 %v590
    %v1977 = vunpack.c.l.b16 %v591
    %v1978 = vunpack.c.h.b16 %v591
    %v1979 = vunpack.c.l.b16 %v592
    %v1980 = vunpack.c.h.b16 %v592
    %v1981 = vunpack.c.l.b16 %v593
    %v1982 = vunpack.c.h.b16 %v593
    %v1983 = vunpack.c.l.b16 %v594
    %v1984 = vunpack.c.h.b16 %v594
    %v1985 = vunpack.c.l.b16 %v595
    %v1986 = vunpack.c.h.b16 %v595
    %v1987 = vunpack.c.l.b16 %v596
    %v1988 = vunpack.c.h.b16 %v596
    %v1989 = vunpack.c.l.b16 %v597
    %v1990 = vunpack.c.h.b16 %v597
    %v1991 = vunpack.c.l.b16 %v598
    %v1992 = vunpack.c.h.b16 %v598
    %v1993 = vunpack.c.l.b16 %v599
    %v1994 = vunpack.c.h.b16 %v599
    %v1995 = vunpack.c.l.b16 %v600
    %v1996 = vunpack.c.h.b16 %v600
    %v1997 = vunpack.c.l.b16 %v601
    %v1998 = vunpack.c.h.b16 %v601
    %v1999 = vunpack.c.l.b16 %v602
    %v2000 = vunpack.c.h.b16 %v602
    %v2001 = vunpack.c.l.b16 %v603
    %v2002 = vunpack.c.h.b16 %v603
    %v2003 = vunpack.c.l.b16 %v604
    %v2004 = vunpack.c.h.b16 %v604
    %v2005 = vunpack.c.l.b16 %v605
    %v2006 = vunpack.c.h.b16 %v605
    %v2007 = vunpack.c.l.b16 %v606
    %v2008 = vunpack.c.h.b16 %v606
    %v2009 = vunpack.c.l.b16 %v607
    %v2010 = vunpack.c.h.b16 %v607
    %v2011 = vunpack.c.l.b16 %v608
    %v2012 = vunpack.c.h.b16 %v608
    %v2013 = vunpack.c.l.b16 %v609
    %v2014 = vunpack.c.h.b16 %v609
    %v2015 = vunpack.c.l.b16 %v610
    %v2016 = vunpack.c.h.b16 %v610
    %v2017 = vunpack.c.l.b16 %v611
    %v2018 = vunpack.c.h.b16 %v611
    %v2019 = vunpack.c.l.b16 %v612
    %v2020 = vunpack.c.h.b16 %v612
    %v2021 = vunpack.c.l.b16 %v613
    %v2022 = vunpack.c.h.b16 %v613
    %v2023 = vunpack.c.l.b16 %v614
    %v2024 = vunpack.c.h.b16 %v614
    %v2025 = vunpack.c.l.b16 %v615
    %v2026 = vunpack.c.h.b16 %v615
    %v2027 = vunpack.c.l.b16 %v616
    %v2028 = vunpack.c.h.b16 %v616
    %v2029 = vunpack.c.l.b16 %v617
    %v2030 = vunpack.c.h.b16 %v617
    %v2031 = vunpack.c.l.b16 %v618
    %v2032 = vunpack.c.h.b16 %v618
    %v2033 = vunpack.c.l.b16 %v619
    %v2034 = vunpack.c.h.b16 %v619
    %v2035 = vunpack.c.l.b16 %v620
    %v2036 = vunpack.c.h.b16 %v620
    %v2037 = vunpack.c.l.b16 %v621
    %v2038 = vunpack.c.h.b16 %v621
    %v2039 = vunpack.c.l.b16 %v622
    %v2040 = vunpack.c.h.b16 %v622
    %v2041 = vunpack.c.l.b16 %v623
    %v2042 = vunpack.c.h.b16 %v623
    %v2043 = vunpack.c.l.b16 %v624
    %v2044 = vunpack.c.h.b16 %v624
    %v2045 = vunpack.c.l.b16 %v625
    %v2046 = vunpack.c.h.b16 %v625
    %v2047 = vunpack.c.l.b16 %v626
    %v2048 = vunpack.c.h.b16 %v626
    %v2049 = vunpack.c.l.b16 %v627
    %v2050 = vunpack.c.h.b16 %v627
    %v2051 = vunpack.c.l.b16 %v628
    %v2052 = vunpack.c.h.b16 %v628
    %v2053 = vunpack.c.l.b16 %v629
    %v2054 = vunpack.c.h.b16 %v629
    %v2055 = vunpack.c.l.b16 %v630
    %v2056 = vunpack.c.h.b16 %v630
    %v2057 = vunpack.c.l.b16 %v631
    %v2058 = vunpack.c.h.b16 %v631
    %v2059 = vunpack.c.l.b16 %v632
    %v2060 = vunpack.c.h.b16 %v632
    %v2061 = vunpack.c.l.b16 %v633
    %v2062 = vunpack.c.h.b16 %v633
    %v2063 = vunpack.c.l.b16 %v634
    %v2064 = vunpack.c.h.b16 %v634
    %v2065 = vunpack.c.l.b16 %v635
    %v2066 = vunpack.c.h.b16 %v635
    %v2067 = vunpack.c.l.b16 %v636
    %v2068 = vunpack.c.h.b16 %v636
    %v2069 = vunpack.c.l.b16 %v637
    %v2070 = vunpack.c.h.b16 %v637
    %v2071 = vunpack.c.l.b16 %v638
    %v2072 = vunpack.c.h.b16 %v638
    %v2073 = vunpack.c.l.b16 %v639
    %v2074 = vunpack.c.h.b16 %v639
    %v2075 = vunpack.c.l.b16 %v640
    %v2076 = vunpack.c.h.b16 %v640
    %v2077 = vunpack.c.l.b16 %v641
    %v2078 = vunpack.c.h.b16 %v641
    %v2079 = vunpack.c.l.b16 %v642
    %v2080 = vunpack.c.h.b16 %v642
    %v2081 = vunpack.c.l.b16 %v643
    %v2082 = vunpack.c.h.b16 %v643
    %v2083 = vunpack.c.l.b16 %v644
    %v2084 = vunpack.c.h.b16 %v644
    %v2085 = vunpack.c.l.b16 %v645
    %v2086 = vunpack.c.h.b16 %v645
    %v2087 = vunpack.c.l.b16 %v646
    %v2088 = vunpack.c.h.b16 %v646
    %v2089 = vunpack.c.l.b16 %v647
    %v2090 = vunpack.c.h.b16 %v647
    %v2091 = vunpack.c.l.b16 %v648
    %v2092 = vunpack.c.h.b16 %v648
    %v2093 = vunpack.c.l.b16 %v649
    %v2094 = vunpack.c.h.b16 %v649
    %v2095 = vunpack.c.l.b16 %v650
    %v2096 = vunpack.c.h.b16 %v650
    %v2097 = vunpack.c.l.b16 %v651
    %v2098 = vunpack.c.h.b16 %v651
    %v2099 = vunpack.c.l.b16 %v652
    %v2100 = vunpack.c.h.b16 %v652
    %v2101 = vunpack.c.l.b16 %v653
    %v2102 = vunpack.c.h.b16 %v653
    %v2103 = vunpack.c.l.b16 %v654
    %v2104 = vunpack.c.h.b16 %v654
    %v2105 = vunpack.c.l.b16 %v655
    %v2106 = vunpack.c.h.b16 %v655
    %v2107 = vunpack.c.l.b16 %v656
    %v2108 = vunpack.c.h.b16 %v656
    %v2109 = vunpack.c.l.b16 %v657
    %v2110 = vunpack.c.h.b16 %v657
    %v2111 = vunpack.c.l.b16 %v658
    %v2112 = vunpack.c.h.b16 %v658
    %v2113 = vunpack.c.l.b16 %v659
    %v2114 = vunpack.c.h.b16 %v659
    %v2115 = vunpack.c.l.b16 %v660
    %v2116 = vunpack.c.h.b16 %v660
    %v2117 = vunpack.c.l.b16 %v661
    %v2118 = vunpack.c.h.b16 %v661
    %v2119 = vunpack.c.l.b16 %v662
    %v2120 = vunpack.c.h.b16 %v662
    %v2121 = vunpack.c.l.b16 %v663
    %v2122 = vunpack.c.h.b16 %v663
    %v2123 = vunpack.c.l.b16 %v664
    %v2124 = vunpack.c.h.b16 %v664
    %v2125 = vunpack.c.l.b16 %v665
    %v2126 = vunpack.c.h.b16 %v665
    %v2127 = vunpack.c.l.b16 %v666
    %v2128 = vunpack.c.h.b16 %v666
    %v2129 = vunpack.c.l.b16 %v667
    %v2130 = vunpack.c.h.b16 %v667
    %v2131 = vunpack.c.l.b16 %v668
    %v2132 = vunpack.c.h.b16 %v668
    %v2133 = vunpack.c.l.b16 %v669
    %v2134 = vunpack.c.h.b16 %v669
    %v2135 = vunpack.c.l.b16 %v670
    %v2136 = vunpack.c.h.b16 %v670
    %v2137 = vunpack.c.l.b16 %v671
    %v2138 = vunpack.c.h.b16 %v671
    %v2139 = vunpack.c.l.b16 %v672
    %v2140 = vunpack.c.h.b16 %v672
    %v2141 = vunpack.c.l.b16 %v673
    %v2142 = vunpack.c.h.b16 %v673
    %v2143 = vunpack.c.l.b16 %v674
    %v2144 = vunpack.c.h.b16 %v674
    %v2145 = vunpack.c.l.b16 %v675
    %v2146 = vunpack.c.h.b16 %v675
    %v2147 = vunpack.c.l.b16 %v676
    %v2148 = vunpack.c.h.b16 %v676
    %v2149 = vunpack.c.l.b16 %v677
    %v2150 = vunpack.c.h.b16 %v677
    %v2151 = vunpack.c.l.b16 %v678
    %v2152 = vunpack.c.h.b16 %v678
    %v2153 = vunpack.c.l.b16 %v679
    %v2154 = vunpack.c.h.b16 %v679
    %v2155 = vunpack.c.l.b16 %v680
    %v2156 = vunpack.c.h.b16 %v680
    %v2157 = vunpack.c.l.b16 %v681
    %v2158 = vunpack.c.h.b16 %v681
    %v2159 = vunpack.c.l.b16 %v682
    %v2160 = vunpack.c.h.b16 %v682
    %v2161 = vunpack.c.l.b16 %v683
    %v2162 = vunpack.c.h.b16 %v683
    %v2163 = vunpack.c.l.b16 %v684
    %v2164 = vunpack.c.h.b16 %v684
    %v2165 = vunpack.c.l.b16 %v685
    %v2166 = vunpack.c.h.b16 %v685
    %v2167 = vunpack.c.l.b16 %v686
    %v2168 = vunpack.c.h.b16 %v686
    %v2169 = vunpack.c.l.b16 %v687
    %v2170 = vunpack.c.h.b16 %v687
    %v2171 = vunpack.c.l.b16 %v688
    %v2172 = vunpack.c.h.b16 %v688
    %v2173 = vunpack.c.l.b16 %v689
    %v2174 = vunpack.c.h.b16 %v689
    %v2175 = vunpack.c.l.b16 %v690
    %v2176 = vunpack.c.h.b16 %v690
    %v2177 = vunpack.c.l.b16 %v691
    %v2178 = vunpack.c.h.b16 %v691
    %v2179 = vunpack.c.l.b16 %v692
    %v2180 = vunpack.c.h.b16 %v692
    %v2181 = vunpack.c.l.b16 %v693
    %v2182 = vunpack.c.h.b16 %v693
    %v2183 = vunpack.c.l.b16 %v694
    %v2184 = vunpack.c.h.b16 %v694
    %v2185 = vunpack.c.l.b16 %v695
    %v2186 = vunpack.c.h.b16 %v695
    %v2187 = vunpack.c.l.b16 %v696
    %v2188 = vunpack.c.h.b16 %v696
    %v2189 = vunpack.c.l.b16 %v697
    %v2190 = vunpack.c.h.b16 %v697
    %v2191 = vunpack.c.l.b16 %v698
    %v2192 = vunpack.c.h.b16 %v698
    %v2193 = vunpack.c.l.b16 %v699
    %v2194 = vunpack.c.h.b16 %v699
    %v2195 = vunpack.c.l.b16 %v700
    %v2196 = vunpack.c.h.b16 %v700
    %v2197 = vunpack.c.l.b16 %v701
    %v2198 = vunpack.c.h.b16 %v701
    %v2199 = vunpack.c.l.b16 %v702
    %v2200 = vunpack.c.h.b16 %v702
    %v2201 = vunpack.c.l.b16 %v703
    %v2202 = vunpack.c.h.b16 %v703
    %v2203 = vunpack.c.l.b16 %v704
    %v2204 = vunpack.c.h.b16 %v704
    %v2205 = vunpack.c.l.b16 %v705
    %v2206 = vunpack.c.h.b16 %v705
    %v2207 = vunpack.c.l.b16 %v706
    %v2208 = vunpack.c.h.b16 %v706
    %v2209 = vunpack.c.l.b16 %v707
    %v2210 = vunpack.c.h.b16 %v707
    %v2211 = vunpack.c.l.b16 %v708
    %v2212 = vunpack.c.h.b16 %v708
    %v2213 = vunpack.c.l.b16 %v709
    %v2214 = vunpack.c.h.b16 %v709
    %v2215 = vunpack.c.l.b16 %v710
    %v2216 = vunpack.c.h.b16 %v710
    %v2217 = vunpack.c.l.b16 %v711
    %v2218 = vunpack.c.h.b16 %v711
    %v2219 = vunpack.c.l.b16 %v712
    %v2220 = vunpack.c.h.b16 %v712
    %v2221 = vunpack.c.l.b16 %v713
    %v2222 = vunpack.c.h.b16 %v713
    %v2223 = vunpack.c.l.b16 %v714
    %v2224 = vunpack.c.h.b16 %v714
    %v2225 = vunpack.c.l.b16 %v715
    %v2226 = vunpack.c.h.b16 %v715
    %v2227 = vunpack.c.l.b16 %v716
    %v2228 = vunpack.c.h.b16 %v716
    %v2229 = vunpack.c.l.b16 %v717
    %v2230 = vunpack.c.h.b16 %v717
    %v2231 = vunpack.c.l.b16 %v718
    %v2232 = vunpack.c.h.b16 %v718
    %v2233 = vunpack.c.l.b16 %v719
    %v2234 = vunpack.c.h.b16 %v719
    %v2235 = vunpack.c.l.b16 %v720
    %v2236 = vunpack.c.h.b16 %v720
    %v2237 = vunpack.c.l.b16 %v721
    %v2238 = vunpack.c.h.b16 %v721
    %v2239 = vunpack.c.l.b16 %v722
    %v2240 = vunpack.c.h.b16 %v722
    %v2241 = vunpack.c.l.b16 %v723
    %v2242 = vunpack.c.h.b16 %v723
    %v2243 = vunpack.c.l.b16 %v724
    %v2244 = vunpack.c.h.b16 %v724
    %v2245 = vunpack.c.l.b16 %v725
    %v2246 = vunpack.c.h.b16 %v725
    %v2247 = vunpack.c.l.b16 %v726
    %v2248 = vunpack.c.h.b16 %v726
    %v2249 = vunpack.c.l.b16 %v727
    %v2250 = vunpack.c.h.b16 %v727
    %v2251 = vunpack.c.l.b16 %v728
    %v2252 = vunpack.c.h.b16 %v728
    %v2253 = vunpack.c.l.b16 %v729
    %v2254 = vunpack.c.h.b16 %v729
    %v2255 = vunpack.c.l.b16 %v730
    %v2256 = vunpack.c.h.b16 %v730
    %v2257 = vunpack.c.l.b16 %v731
    %v2258 = vunpack.c.h.b16 %v731
    %v2259 = vunpack.c.l.b16 %v732
    %v2260 = vunpack.c.h.b16 %v732
    %v2261 = vunpack.c.l.b16 %v733
    %v2262 = vunpack.c.h.b16 %v733
    %v2263 = vunpack.c.l.b16 %v734
    %v2264 = vunpack.c.h.b16 %v734
    %v2265 = vunpack.c.l.b16 %v735
    %v2266 = vunpack.c.h.b16 %v735
    %v2267 = vunpack.c.l.b16 %v736
    %v2268 = vunpack.c.h.b16 %v736
    %v2269 = vunpack.c.l.b16 %v737
    %v2270 = vunpack.c.h.b16 %v737
    %v2271 = vunpack.c.l.b16 %v738
    %v2272 = vunpack.c.h.b16 %v738
    %v2273 = vunpack.c.l.b16 %v739
    %v2274 = vunpack.c.h.b16 %v739
    %v2275 = vunpack.c.l.b16 %v740
    %v2276 = vunpack.c.h.b16 %v740
    %v2277 = vunpack.c.l.b16 %v741
    %v2278 = vunpack.c.h.b16 %v741
    %v2279 = vunpack.c.l.b16 %v742
    %v2280 = vunpack.c.h.b16 %v742
    %v2281 = vunpack.c.l.b16 %v743
    %v2282 = vunpack.c.h.b16 %v743
    %v2283 = vunpack.c.l.b16 %v744
    %v2284 = vunpack.c.h.b16 %v744
    %v2285 = vunpack.c.l.b16 %v745
    %v2286 = vunpack.c.h.b16 %v745
    %v2287 = vunpack.c.l.b16 %v746
    %v2288 = vunpack.c.h.b16 %v746
    %v2289 = vunpack.c.l.b16 %v747
    %v2290 = vunpack.c.h.b16 %v747
    %v2291 = vunpack.c.l.b16 %v748
    %v2292 = vunpack.c.h.b16 %v748
    %v2293 = vunpack.c.l.b16 %v749
    %v2294 = vunpack.c.h.b16 %v749
    %v2295 = vunpack.c.l.b16 %v750
    %v2296 = vunpack.c.h.b16 %v750
    %v2297 = vunpack.c.l.b16 %v751
    %v2298 = vunpack.c.h.b16 %v751
    %v2299 = vunpack.c.l.b16 %v752
    %v2300 = vunpack.c.h.b16 %v752
    %v2301 = vunpack.c.l.b16 %v753
    %v2302 = vunpack.c.h.b16 %v753
    %v2303 = vunpack.c.l.b16 %v754
    %v2304 = vunpack.c.h.b16 %v754
    %v2305 = vunpack.c.l.b16 %v755
    %v2306 = vunpack.c.h.b16 %v755
    %v2307 = vunpack.c.l.b16 %v756
    %v2308 = vunpack.c.h.b16 %v756
    %v2309 = vunpack.c.l.b16 %v757
    %v2310 = vunpack.c.h.b16 %v757
    %v2311 = vunpack.c.l.b16 %v758
    %v2312 = vunpack.c.h.b16 %v758
    %v2313 = vunpack.c.l.b16 %v759
    %v2314 = vunpack.c.h.b16 %v759
    %v2315 = vunpack.c.l.b16 %v760
    %v2316 = vunpack.c.h.b16 %v760
    %v2317 = vunpack.c.l.b16 %v761
    %v2318 = vunpack.c.h.b16 %v761
    %v2319 = vunpack.c.l.b16 %v762
    %v2320 = vunpack.c.h.b16 %v762
    %v2321 = vunpack.c.l.b16 %v763
    %v2322 = vunpack.c.h.b16 %v763
    %v2323 = vunpack.c.l.b16 %v764
    %v2324 = vunpack.c.h.b16 %v764
    %v2325 = vunpack.c.l.b16 %v765
    %v2326 = vunpack.c.h.b16 %v765
    %v2327 = vunpack.c.l.b16 %v766
    %v2328 = vunpack.c.h.b16 %v766
    %v2329 = vunpack.c.l.b16 %v767
    %v2330 = vunpack.c.h.b16 %v767
    %v2331 = vunpack.c.l.b16 %v768
    %v2332 = vunpack.c.h.b16 %v768
    %v2333 = vunpack.c.l.b16 %v769
    %v2334 = vunpack.c.h.b16 %v769
    %v2335 = vunpack.c.l.b16 %v770
    %v2336 = vunpack.c.h.b16 %v770
    %v2337 = vunpack.c.l.b16 %v771
    %v2338 = vunpack.c.h.b16 %v771
    %v2339 = vunpack.c.l.b16 %v772
    %v2340 = vunpack.c.h.b16 %v772
    %v2341 = vunpack.c.l.b16 %v773
    %v2342 = vunpack.c.h.b16 %v773
    %v2343 = vunpack.c.l.b16 %v774
    %v2344 = vunpack.c.h.b16 %v774
    %v2345 = vunpack.c.l.b16 %v775
    %v2346 = vunpack.c.h.b16 %v775
    %v2347 = vunpack.c.l.b16 %v776
    %v2348 = vunpack.c.h.b16 %v776
    %v2349 = vunpack.c.l.b16 %v777
    %v2350 = vunpack.c.h.b16 %v777
    %v2351 = vunpack.c.l.b16 %v778
    %v2352 = vunpack.c.h.b16 %v778
    %v2353 = vunpack.c.l.b16 %v779
    %v2354 = vunpack.c.h.b16 %v779
    %v2355 = vunpack.c.l.b16 %v780
    %v2356 = vunpack.c.h.b16 %v780
    %v2357 = vunpack.c.l.b16 %v781
    %v2358 = vunpack.c.h.b16 %v781
    %v2359 = vunpack.c.l.b16 %v782
    %v2360 = vunpack.c.h.b16 %v782
    %v2361 = vpack.c.b16 %v1345, %v1337
    %v2362 = vpack.c.b16 %v1346, %v1338
    %v2363 = vpack.c.b16 %v1347, %v1339
    %v2364 = vpack.c.b16 %v1348, %v1340
    %v2365 = vpack.c.b16 %v1349, %v1341
    %v2366 = vpack.c.b16 %v1350, %v1342
    %v2367 = vpack.c.b16 %v1351, %v1343
    %v2368 = vpack.c.b16 %v1352, %v1344
    %v2369 = vpack.c.b16 %v1361, %v1353
    %v2370 = vpack.c.b16 %v1362, %v1354
    %v2371 = vpack.c.b16 %v1363, %v1355
    %v2372 = vpack.c.b16 %v1364, %v1356
    %v2373 = vpack.c.b16 %v1365, %v1357
    %v2374 = vpack.c.b16 %v1366, %v1358
    %v2375 = vpack.c.b16 %v1367, %v1359
    %v2376 = vpack.c.b16 %v1368, %v1360
    %v2377 = vpack.c.b16 %v1377, %v1369
    %v2378 = vpack.c.b16 %v1378, %v1370
    %v2379 = vpack.c.b16 %v1379, %v1371
    %v2380 = vpack.c.b16 %v1380, %v1372
    %v2381 = vpack.c.b16 %v1381, %v1373
    %v2382 = vpack.c.b16 %v1382, %v1374
    %v2383 = vpack.c.b16 %v1383, %v1375
    %v2384 = vpack.c.b16 %v1384, %v1376
    %v2385 = vpack.c.b16 %v1393, %v1385
    %v2386 = vpack.c.b16 %v1394, %v1386
    %v2387 = vpack.c.b16 %v1395, %v1387
    %v2388 = vpack.c.b16 %v1396, %v1388
    %v2389 = vpack.c.b16 %v1397, %v1389
    %v2390 = vpack.c.b16 %v1398, %v1390
    %v2391 = vpack.c.b16 %v1399, %v1391
    %v2392 = vpack.c.b16 %v1400, %v1392
    %v2393 = vpack.c.b16 %v1409, %v1401
    %v2394 = vpack.c.b16 %v1410, %v1402
    %v2395 = vpack.c.b16 %v1411, %v1403
    %v2396 = vpack.c.b16 %v1412, %v1404
    %v2397 = vpack.c.b16 %v1413, %v1405
    %v2398 = vpack.c.b16 %v1414, %v1406
    %v2399 = vpack.c.b16 %v1415, %v1407
    %v2400 = vpack.c.b16 %v1416, %v1408
    %v2401 = vpack.c.b16 %v1425, %v1417
    %v2402 = vpack.c.b16 %v1426, %v1418
    %v2403 = vpack.c.b16 %v1427, %v1419
    %v2404 = vpack.c.b16 %v1428, %v1420
    %v2405 = vpack.c.b16 %v1429, %v1421
    %v2406 = vpack.c.b16 %v1430, %v1422
    %v2407 = vpack.c.b16 %v1431, %v1423
    %v2408 = vpack.c.b16 %v1432, %v1424
    %v2409 = vpack.c.b16 %v1441, %v1433
    %v2410 = vpack.c.b16 %v1442, %v1434
    %v2411 = vpack.c.b16 %v1443, %v1435
    %v2412 = vpack.c.b16 %v1444, %v1436
    %v2413 = vpack.c.b16 %v1445, %v1437
    %v2414 = vpack.c.b16 %v1446, %v1438
    %v2415 = vpack.c.b16 %v1447, %v1439
    %v2416 = vpack.c.b16 %v1448, %v1440
    %v2417 = vpack.c.b16 %v1457, %v1449
    %v2418 = vpack.c.b16 %v1458, %v1450
    %v2419 = vpack.c.b16 %v1459, %v1451
    %v2420 = vpack.c.b16 %v1460, %v1452
    %v2421 = vpack.c.b16 %v1461, %v1453
    %v2422 = vpack.c.b16 %v1462, %v1454
    %v2423 = vpack.c.b16 %v1463, %v1455
    %v2424 = vpack.c.b16 %v1464, %v1456
    %v2425 = vpack.c.b16 %v1473, %v1465
    %v2426 = vpack.c.b16 %v1474, %v1466
    %v2427 = vpack.c.b16 %v1475, %v1467
    %v2428 = vpack.c.b16 %v1476, %v1468
    %v2429 = vpack.c.b16 %v1477, %v1469
    %v2430 = vpack.c.b16 %v1478, %v1470
    %v2431 = vpack.c.b16 %v1479, %v1471
    %v2432 = vpack.c.b16 %v1480, %v1472
    %v2433 = vpack.c.b16 %v1489, %v1481
    %v2434 = vpack.c.b16 %v1490, %v1482
    %v2435 = vpack.c.b16 %v1491, %v1483
    %v2436 = vpack.c.b16 %v1492, %v1484
    %v2437 = vpack.c.b16 %v1493, %v1485
    %v2438 = vpack.c.b16 %v1494, %v1486
    %v2439 = vpack.c.b16 %v1495, %v1487
    %v2440 = vpack.c.b16 %v1496, %v1488
    %v2441 = vpack.c.b16 %v1505, %v1497
    %v2442 = vpack.c.b16 %v1506, %v1498
    %v2443 = vpack.c.b16 %v1507, %v1499
    %v2444 = vpack.c.b16 %v1508, %v1500
    %v2445 = vpack.c.b16 %v1509, %v1501
    %v2446 = vpack.c.b16 %v1510, %v1502
    %v2447 = vpack.c.b16 %v1511, %v1503
    %v2448 = vpack.c.b16 %v1512, %v1504
    %v2449 = vpack.c.b16 %v1521, %v1513
    %v2450 = vpack.c.b16 %v1522, %v1514
    %v2451 = vpack.c.b16 %v1523, %v1515
    %v2452 = vpack.c.b16 %v1524, %v1516
    %v2453 = vpack.c.b16 %v1525, %v1517
    %v2454 = vpack.c.b16 %v1526, %v1518
    %v2455 = vpack.c.b16 %v1527, %v1519
    %v2456 = vpack.c.b16 %v1528, %v1520
    %v2457 = vpack.c.b16 %v1537, %v1529
    %v2458 = vpack.c.b16 %v1538, %v1530
    %v2459 = vpack.c.b16 %v1539, %v1531
    %v2460 = vpack.c.b16 %v1540, %v1532
    %v2461 = vpack.c.b16 %v1541, %v1533
    %v2462 = vpack.c.b16 %v1542, %v1534
    %v2463 = vpack.c.b16 %v1543, %v1535
    %v2464 = vpack.c.b16 %v1544, %v1536
    %v2465 = vpack.c.b16 %v1553, %v1545
    %v2466 = vpack.c.b16 %v1554, %v1546
    %v2467 = vpack.c.b16 %v1555, %v1547
    %v2468 = vpack.c.b16 %v1556, %v1548
    %v2469 = vpack.c.b16 %v1557, %v1549
    %v2470 = vpack.c.b16 %v1558, %v1550
    %v2471 = vpack.c.b16 %v1559, %v1551
    %v2472 = vpack.c.b16 %v1560, %v1552
    %v2473 = vpack.c.b16 %v1569, %v1561
    %v2474 = vpack.c.b16 %v1570, %v1562
    %v2475 = vpack.c.b16 %v1571, %v1563
    %v2476 = vpack.c.b16 %v1572, %v1564
    %v2477 = vpack.c.b16 %v1573, %v1565
    %v2478 = vpack.c.b16 %v1574, %v1566
    %v2479 = vpack.c.b16 %v1575, %v1567
    %v2480 = vpack.c.b16 %v1576, %v1568
    %v2481 = vpack.c.b16 %v1585, %v1577
    %v2482 = vpack.c.b16 %v1586, %v1578
    %v2483 = vpack.c.b16 %v1587, %v1579
    %v2484 = vpack.c.b16 %v1588, %v1580
    %v2485 = vpack.c.b16 %v1589, %v1581
    %v2486 = vpack.c.b16 %v1590, %v1582
    %v2487 = vpack.c.b16 %v1591, %v1583
    %v2488 = vpack.c.b16 %v1592, %v1584
    %v2489 = vpack.c.b16 %v1601, %v1593
    %v2490 = vpack.c.b16 %v1602, %v1594
    %v2491 = vpack.c.b16 %v1603, %v1595
    %v2492 = vpack.c.b16 %v1604, %v1596
    %v2493 = vpack.c.b16 %v1605, %v1597
    %v2494 = vpack.c.b16 %v1606, %v1598
    %v2495 = vpack.c.b16 %v1607, %v1599
    %v2496 = vpack.c.b16 %v1608, %v1600
    %v2497 = vpack.c.b16 %v1617, %v1609
    %v2498 = vpack.c.b16 %v1618, %v1610
    %v2499 = vpack.c.b16 %v1619, %v1611
    %v2500 = vpack.c.b16 %v1620, %v1612
    %v2501 = vpack.c.b16 %v1621, %v1613
    %v2502 = vpack.c.b16 %v1622, %v1614
    %v2503 = vpack.c.b16 %v1623, %v1615
    %v2504 = vpack.c.b16 %v1624, %v1616
    %v2505 = vpack.c.b16 %v1633, %v1625
    %v2506 = vpack.c.b16 %v1634, %v1626
    %v2507 = vpack.c.b16 %v1635, %v1627
    %v2508 = vpack.c.b16 %v1636, %v1628
    %v2509 = vpack.c.b16 %v1637, %v1629
    %v2510 = vpack.c.b16 %v1638, %v1630
    %v2511 = vpack.c.b16 %v1639, %v1631
    %v2512 = vpack.c.b16 %v1640, %v1632
    %v2513 = vpack.c.b16 %v1649, %v1641
    %v2514 = vpack.c.b16 %v1650, %v1642
    %v2515 = vpack.c.b16 %v1651, %v1643
    %v2516 = vpack.c.b16 %v1652, %v1644
    %v2517 = vpack.c.b16 %v1653, %v1645
    %v2518 = vpack.c.b16 %v1654, %v1646
    %v2519 = vpack.c.b16 %v1655, %v1647
    %v2520 = vpack.c.b16 %v1656, %v1648
    %v2521 = vpack.c.b16 %v1665, %v1657
    %v2522 = vpack.c.b16 %v1666, %v1658
    %v2523 = vpack.c.b16 %v1667, %v1659
    %v2524 = vpack.c.b16 %v1668, %v1660
    %v2525 = vpack.c.b16 %v1669, %v1661
    %v2526 = vpack.c.b16 %v1670, %v1662
    %v2527 = vpack.c.b16 %v1671, %v1663
    %v2528 = vpack.c.b16 %v1672, %v1664
    %v2529 = vpack.c.b16 %v1681, %v1673
    %v2530 = vpack.c.b16 %v1682, %v1674
    %v2531 = vpack.c.b16 %v1683, %v1675
    %v2532 = vpack.c.b16 %v1684, %v1676
    %v2533 = vpack.c.b16 %v1685, %v1677
    %v2534 = vpack.c.b16 %v1686, %v1678
    %v2535 = vpack.c.b16 %v1687, %v1679
    %v2536 = vpack.c.b16 %v1688, %v1680
    %v2537 = vpack.c.b16 %v1697, %v1689
    %v2538 = vpack.c.b16 %v1698, %v1690
    %v2539 = vpack.c.b16 %v1699, %v1691
    %v2540 = vpack.c.b16 %v1700, %v1692
    %v2541 = vpack.c.b16 %v1701, %v1693
    %v2542 = vpack.c.b16 %v1702, %v1694
    %v2543 = vpack.c.b16 %v1703, %v1695
    %v2544 = vpack.c.b16 %v1704, %v1696
    %v2545 = vpack.c.b16 %v1713, %v1705
    %v2546 = vpack.c.b16 %v1714, %v1706
    %v2547 = vpack.c.b16 %v1715, %v1707
    %v2548 = vpack.c.b16 %v1716, %v1708
    %v2549 = vpack.c.b16 %v1717, %v1709
    %v2550 = vpack.c.b16 %v1718, %v1710
    %v2551 = vpack.c.b16 %v1719, %v1711
    %v2552 = vpack.c.b16 %v1720, %v1712
    %v2553 = vpack.c.b16 %v1729, %v1721
    %v2554 = vpack.c.b16 %v1730, %v1722
    %v2555 = vpack.c.b16 %v1731, %v1723
    %v2556 = vpack.c.b16 %v1732, %v1724
    %v2557 = vpack.c.b16 %v1733, %v1725
    %v2558 = vpack.c.b16 %v1734, %v1726
    %v2559 = vpack.c.b16 %v1735, %v1727
    %v2560 = vpack.c.b16 %v1736, %v1728
    %v2561 = vpack.c.b16 %v1745, %v1737
    %v2562 = vpack.c.b16 %v1746, %v1738
    %v2563 = vpack.c.b16 %v1747, %v1739
    %v2564 = vpack.c.b16 %v1748, %v1740
    %v2565 = vpack.c.b16 %v1749, %v1741
    %v2566 = vpack.c.b16 %v1750, %v1742
    %v2567 = vpack.c.b16 %v1751, %v1743
    %v2568 = vpack.c.b16 %v1752, %v1744
    %v2569 = vpack.c.b16 %v1761, %v1753
    %v2570 = vpack.c.b16 %v1762, %v1754
    %v2571 = vpack.c.b16 %v1763, %v1755
    %v2572 = vpack.c.b16 %v1764, %v1756
    %v2573 = vpack.c.b16 %v1765, %v1757
    %v2574 = vpack.c.b16 %v1766, %v1758
    %v2575 = vpack.c.b16 %v1767, %v1759
    %v2576 = vpack.c.b16 %v1768, %v1760
    %v2577 = vpack.c.b16 %v1777, %v1769
    %v2578 = vpack.c.b16 %v1778, %v1770
    %v2579 = vpack.c.b16 %v1779, %v1771
    %v2580 = vpack.c.b16 %v1780, %v1772
    %v2581 = vpack.c.b16 %v1781, %v1773
    %v2582 = vpack.c.b16 %v1782, %v1774
    %v2583 = vpack.c.b16 %v1783, %v1775
    %v2584 = vpack.c.b16 %v1784, %v1776
    %v2585 = vpack.c.b16 %v1793, %v1785
    %v2586 = vpack.c.b16 %v1794, %v1786
    %v2587 = vpack.c.b16 %v1795, %v1787
    %v2588 = vpack.c.b16 %v1796, %v1788
    %v2589 = vpack.c.b16 %v1797, %v1789
    %v2590 = vpack.c.b16 %v1798, %v1790
    %v2591 = vpack.c.b16 %v1799, %v1791
    %v2592 = vpack.c.b16 %v1800, %v1792
    %v2593 = vpack.c.b16 %v1809, %v1801
    %v2594 = vpack.c.b16 %v1810, %v1802
    %v2595 = vpack.c.b16 %v1811, %v1803
    %v2596 = vpack.c.b16 %v1812, %v1804
    %v2597 = vpack.c.b16 %v1813, %v1805
    %v2598 = vpack.c.b16 %v1814, %v1806
    %v2599 = vpack.c.b16 %v1815, %v1807
    %v2600 = vpack.c.b16 %v1816, %v1808
    %v2601 = vpack.c.b16 %v1825, %v1817
    %v2602 = vpack.c.b16 %v1826, %v1818
    %v2603 = vpack.c.b16 %v1827, %v1819
    %v2604 = vpack.c.b16 %v1828, %v1820
    %v2605 = vpack.c.b16 %v1829, %v1821
    %v2606 = vpack.c.b16 %v1830, %v1822
    %v2607 = vpack.c.b16 %v1831, %v1823
    %v2608 = vpack.c.b16 %v1832, %v1824
    %v2609 = vpack.c.b16 %v1841, %v1833
    %v2610 = vpack.c.b16 %v1842, %v1834
    %v2611 = vpack.c.b16 %v1843, %v1835
    %v2612 = vpack.c.b16 %v1844, %v1836
    %v2613 = vpack.c.b16 %v1845, %v1837
    %v2614 = vpack.c.b16 %v1846, %v1838
    %v2615 = vpack.c.b16 %v1847, %v1839
    %v2616 = vpack.c.b16 %v1848, %v1840
    %v2617 = vpack.c.b16 %v1857, %v1849
    %v2618 = vpack.c.b16 %v1858, %v1850
    %v2619 = vpack.c.b16 %v1859, %v1851
    %v2620 = vpack.c.b16 %v1860, %v1852
    %v2621 = vpack.c.b16 %v1861, %v1853
    %v2622 = vpack.c.b16 %v1862, %v1854
    %v2623 = vpack.c.b16 %v1863, %v1855
    %v2624 = vpack.c.b16 %v1864, %v1856
    %v2625 = vpack.c.b16 %v1873, %v1865
    %v2626 = vpack.c.b16 %v1874, %v1866
    %v2627 = vpack.c.b16 %v1875, %v1867
    %v2628 = vpack.c.b16 %v1876, %v1868
    %v2629 = vpack.c.b16 %v1877, %v1869
    %v2630 = vpack.c.b16 %v1878, %v1870
    %v2631 = vpack.c.b16 %v1879, %v1871
    %v2632 = vpack.c.b16 %v1880, %v1872
    %v2633 = vpack.c.b16 %v1889, %v1881
    %v2634 = vpack.c.b16 %v1890, %v1882
    %v2635 = vpack.c.b16 %v1891, %v1883
    %v2636 = vpack.c.b16 %v1892, %v1884
    %v2637 = vpack.c.b16 %v1893, %v1885
    %v2638 = vpack.c.b16 %v1894, %v1886
    %v2639 = vpack.c.b16 %v1895, %v1887
    %v2640 = vpack.c.b16 %v1896, %v1888
    %v2641 = vpack.c.b16 %v1905, %v1897
    %v2642 = vpack.c.b16 %v1906, %v1898
    %v2643 = vpack.c.b16 %v1907, %v1899
    %v2644 = vpack.c.b16 %v1908, %v1900
    %v2645 = vpack.c.b16 %v1909, %v1901
    %v2646 = vpack.c.b16 %v1910, %v1902
    %v2647 = vpack.c.b16 %v1911, %v1903
    %v2648 = vpack.c.b16 %v1912, %v1904
    %v2649 = vpack.c.b16 %v1921, %v1913
    %v2650 = vpack.c.b16 %v1922, %v1914
    %v2651 = vpack.c.b16 %v1923, %v1915
    %v2652 = vpack.c.b16 %v1924, %v1916
    %v2653 = vpack.c.b16 %v1925, %v1917
    %v2654 = vpack.c.b16 %v1926, %v1918
    %v2655 = vpack.c.b16 %v1927, %v1919
    %v2656 = vpack.c.b16 %v1928, %v1920
    %v2657 = vpack.c.b16 %v1937, %v1929
    %v2658 = vpack.c.b16 %v1938, %v1930
    %v2659 = vpack.c.b16 %v1939, %v1931
    %v2660 = vpack.c.b16 %v1940, %v1932
    %v2661 = vpack.c.b16 %v1941, %v1933
    %v2662 = vpack.c.b16 %v1942, %v1934
    %v2663 = vpack.c.b16 %v1943, %v1935
    %v2664 = vpack.c.b16 %v1944, %v1936
    %v2665 = vpack.c.b16 %v1953, %v1945
    %v2666 = vpack.c.b16 %v1954, %v1946
    %v2667 = vpack.c.b16 %v1955, %v1947
    %v2668 = vpack.c.b16 %v1956, %v1948
    %v2669 = vpack.c.b16 %v1957, %v1949
    %v2670 = vpack.c.b16 %v1958, %v1950
    %v2671 = vpack.c.b16 %v1959, %v1951
    %v2672 = vpack.c.b16 %v1960, %v1952
    %v2673 = vpack.c.b16 %v1969, %v1961
    %v2674 = vpack.c.b16 %v1970, %v1962
    %v2675 = vpack.c.b16 %v1971, %v1963
    %v2676 = vpack.c.b16 %v1972, %v1964
    %v2677 = vpack.c.b16 %v1973, %v1965
    %v2678 = vpack.c.b16 %v1974, %v1966
    %v2679 = vpack.c.b16 %v1975, %v1967
    %v2680 = vpack.c.b16 %v1976, %v1968
    %v2681 = vpack.c.b16 %v1985, %v1977
    %v2682 = vpack.c.b16 %v1986, %v1978
    %v2683 = vpack.c.b16 %v1987, %v1979
    %v2684 = vpack.c.b16 %v1988, %v1980
    %v2685 = vpack.c.b16 %v1989, %v1981
    %v2686 = vpack.c.b16 %v1990, %v1982
    %v2687 = vpack.c.b16 %v1991, %v1983
    %v2688 = vpack.c.b16 %v1992, %v1984
    %v2689 = vpack.c.b16 %v2001, %v1993
    %v2690 = vpack.c.b16 %v2002, %v1994
    %v2691 = vpack.c.b16 %v2003, %v1995
    %v2692 = vpack.c.b16 %v2004, %v1996
    %v2693 = vpack.c.b16 %v2005, %v1997
    %v2694 = vpack.c.b16 %v2006, %v1998
    %v2695 = vpack.c.b16 %v2007, %v1999
    %v2696 = vpack.c.b16 %v2008, %v2000
    %v2697 = vpack.c.b16 %v2017, %v2009
    %v2698 = vpack.c.b16 %v2018, %v2010
    %v2699 = vpack.c.b16 %v2019, %v2011
    %v2700 = vpack.c.b16 %v2020, %v2012
    %v2701 = vpack.c.b16 %v2021, %v2013
    %v2702 = vpack.c.b16 %v2022, %v2014
    %v2703 = vpack.c.b16 %v2023, %v2015
    %v2704 = vpack.c.b16 %v2024, %v2016
    %v2705 = vpack.c.b16 %v2033, %v2025
    %v2706 = vpack.c.b16 %v2034, %v2026
    %v2707 = vpack.c.b16 %v2035, %v2027
    %v2708 = vpack.c.b16 %v2036, %v2028
    %v2709 = vpack.c.b16 %v2037, %v2029
    %v2710 = vpack.c.b16 %v2038, %v2030
    %v2711 = vpack.c.b16 %v2039, %v2031
    %v2712 = vpack.c.b16 %v2040, %v2032
    %v2713 = vpack.c.b16 %v2049, %v2041
    %v2714 = vpack.c.b16 %v2050, %v2042
    %v2715 = vpack.c.b16 %v2051, %v2043
    %v2716 = vpack.c.b16 %v2052, %v2044
    %v2717 = vpack.c.b16 %v2053, %v2045
    %v2718 = vpack.c.b16 %v2054, %v2046
    %v2719 = vpack.c.b16 %v2055, %v2047
    %v2720 = vpack.c.b16 %v2056, %v2048
    %v2721 = vpack.c.b16 %v2065, %v2057
    %v2722 = vpack.c.b16 %v2066, %v2058
    %v2723 = vpack.c.b16 %v2067, %v2059
    %v2724 = vpack.c.b16 %v2068, %v2060
    %v2725 = vpack.c.b16 %v2069, %v2061
    %v2726 = vpack.c.b16 %v2070, %v2062
    %v2727 = vpack.c.b16 %v2071, %v2063
    %v2728 = vpack.c.b16 %v2072, %v2064
    %v2729 = vpack.c.b16 %v2081, %v2073
    %v2730 = vpack.c.b16 %v2082, %v2074
    %v2731 = vpack.c.b16 %v2083, %v2075
    %v2732 = vpack.c.b16 %v2084, %v2076
    %v2733 = vpack.c.b16 %v2085, %v2077
    %v2734 = vpack.c.b16 %v2086, %v2078
    %v2735 = vpack.c.b16 %v2087, %v2079
    %v2736 = vpack.c.b16 %v2088, %v2080
    %v2737 = vpack.c.b16 %v2097, %v2089
    %v2738 = vpack.c.b16 %v2098, %v2090
    %v2739 = vpack.c.b16 %v2099, %v2091
    %v2740 = vpack.c.b16 %v2100, %v2092
    %v2741 = vpack.c.b16 %v2101, %v2093
    %v2742 = vpack.c.b16 %v2102, %v2094
    %v2743 = vpack.c.b16 %v2103, %v2095
    %v2744 = vpack.c.b16 %v2104, %v2096
    %v2745 = vpack.c.b16 %v2113, %v2105
    %v2746 = vpack.c.b16 %v2114, %v2106
    %v2747 = vpack.c.b16 %v2115, %v2107
    %v2748 = vpack.c.b16 %v2116, %v2108
    %v2749 = vpack.c.b16 %v2117, %v2109
    %v2750 = vpack.c.b16 %v2118, %v2110
    %v2751 = vpack.c.b16 %v2119, %v2111
    %v2752 = vpack.c.b16 %v2120, %v2112
    %v2753 = vpack.c.b16 %v2129, %v2121
    %v2754 = vpack.c.b16 %v2130, %v2122
    %v2755 = vpack.c.b16 %v2131, %v2123
    %v2756 = vpack.c.b16 %v2132, %v2124
    %v2757 = vpack.c.b16 %v2133, %v2125
    %v2758 = vpack.c.b16 %v2134, %v2126
    %v2759 = vpack.c.b16 %v2135, %v2127
    %v2760 = vpack.c.b16 %v2136, %v2128
    %v2761 = vpack.c.b16 %v2145, %v2137
    %v2762 = vpack.c.b16 %v2146, %v2138
    %v2763 = vpack.c.b16 %v2147, %v2139
    %v2764 = vpack.c.b16 %v2148, %v2140
    %v2765 = vpack.c.b16 %v2149, %v2141
    %v2766 = vpack.c.b16 %v2150, %v2142
    %v2767 = vpack.c.b16 %v2151, %v2143
    %v2768 = vpack.c.b16 %v2152, %v2144
    %v2769 = vpack.c.b16 %v2161, %v2153
    %v2770 = vpack.c.b16 %v2162, %v2154
    %v2771 = vpack.c.b16 %v2163, %v2155
    %v2772 = vpack.c.b16 %v2164, %v2156
    %v2773 = vpack.c.b16 %v2165, %v2157
    %v2774 = vpack.c.b16 %v2166, %v2158
    %v2775 = vpack.c.b16 %v2167, %v2159
    %v2776 = vpack.c.b16 %v2168, %v2160
    %v2777 = vpack.c.b16 %v2177, %v2169
    %v2778 = vpack.c.b16 %v2178, %v2170
    %v2779 = vpack.c.b16 %v2179, %v2171
    %v2780 = vpack.c.b16 %v2180, %v2172
    %v2781 = vpack.c.b16 %v2181, %v2173
    %v2782 = vpack.c.b16 %v2182, %v2174
    %v2783 = vpack.c.b16 %v2183, %v2175
    %v2784 = vpack.c.b16 %v2184, %v2176
    %v2785 = vpack.c.b16 %v2193, %v2185
    %v2786 = vpack.c.b16 %v2194, %v2186
    %v2787 = vpack.c.b16 %v2195, %v2187
    %v2788 = vpack.c.b16 %v2196, %v2188
    %v2789 = vpack.c.b16 %v2197, %v2189
    %v2790 = vpack.c.b16 %v2198, %v2190
    %v2791 = vpack.c.b16 %v2199, %v2191
    %v2792 = vpack.c.b16 %v2200, %v2192
    %v2793 = vpack.c.b16 %v2209, %v2201
    %v2794 = vpack.c.b16 %v2210, %v2202
    %v2795 = vpack.c.b16 %v2211, %v2203
    %v2796 = vpack.c.b16 %v2212, %v2204
    %v2797 = vpack.c.b16 %v2213, %v2205
    %v2798 = vpack.c.b16 %v2214, %v2206
    %v2799 = vpack.c.b16 %v2215, %v2207
    %v2800 = vpack.c.b16 %v2216, %v2208
    %v2801 = vpack.c.b16 %v2225, %v2217
    %v2802 = vpack.c.b16 %v2226, %v2218
    %v2803 = vpack.c.b16 %v2227, %v2219
    %v2804 = vpack.c.b16 %v2228, %v2220
    %v2805 = vpack.c.b16 %v2229, %v2221
    %v2806 = vpack.c.b16 %v2230, %v2222
    %v2807 = vpack.c.b16 %v2231, %v2223
    %v2808 = vpack.c.b16 %v2232, %v2224
    %v2809 = vpack.c.b16 %v2241, %v2233
    %v2810 = vpack.c.b16 %v2242, %v2234
    %v2811 = vpack.c.b16 %v2243, %v2235
    %v2812 = vpack.c.b16 %v2244, %v2236
    %v2813 = vpack.c.b16 %v2245, %v2237
    %v2814 = vpack.c.b16 %v2246, %v2238
    %v2815 = vpack.c.b16 %v2247, %v2239
    %v2816 = vpack.c.b16 %v2248, %v2240
    %v2817 = vpack.c.b16 %v2257, %v2249
    %v2818 = vpack.c.b16 %v2258, %v2250
    %v2819 = vpack.c.b16 %v2259, %v2251
    %v2820 = vpack.c.b16 %v2260, %v2252
    %v2821 = vpack.c.b16 %v2261, %v2253
    %v2822 = vpack.c.b16 %v2262, %v2254
    %v2823 = vpack.c.b16 %v2263, %v2255
    %v2824 = vpack.c.b16 %v2264, %v2256
    %v2825 = vpack.c.b16 %v2273, %v2265
    %v2826 = vpack.c.b16 %v2274, %v2266
    %v2827 = vpack.c.b16 %v2275, %v2267
    %v2828 = vpack.c.b16 %v2276, %v2268
    %v2829 = vpack.c.b16 %v2277, %v2269
    %v2830 = vpack.c.b16 %v2278, %v2270
    %v2831 = vpack.c.b16 %v2279, %v2271
    %v2832 = vpack.c.b16 %v2280, %v2272
    %v2833 = vpack.c.b16 %v2289, %v2281
    %v2834 = vpack.c.b16 %v2290, %v2282
    %v2835 = vpack.c.b16 %v2291, %v2283
    %v2836 = vpack.c.b16 %v2292, %v2284
    %v2837 = vpack.c.b16 %v2293, %v2285
    %v2838 = vpack.c.b16 %v2294, %v2286
    %v2839 = vpack.c.b16 %v2295, %v2287
    %v2840 = vpack.c.b16 %v2296, %v2288
    %v2841 = vpack.c.b16 %v2305, %v2297
    %v2842 = vpack.c.b16 %v2306, %v2298
    %v2843 = vpack.c.b16 %v2307, %v2299
    %v2844 = vpack.c.b16 %v2308, %v2300
    %v2845 = vpack.c.b16 %v2309, %v2301
    %v2846 = vpack.c.b16 %v2310, %v2302
    %v2847 = vpack.c.b16 %v2311, %v2303
    %v2848 = vpack.c.b16 %v2312, %v2304
    %v2849 = vpack.c.b16 %v2321, %v2313
    %v2850 = vpack.c.b16 %v2322, %v2314
    %v2851 = vpack.c.b16 %v2323, %v2315
    %v2852 = vpack.c.b16 %v2324, %v2316
    %v2853 = vpack.c.b16 %v2325, %v2317
    %v2854 = vpack.c.b16 %v2326, %v2318
    %v2855 = vpack.c.b16 %v2327, %v2319
    %v2856 = vpack.c.b16 %v2328, %v2320
    %v2857 = vpack.c.b16 %v2337, %v2329
    %v2858 = vpack.c.b16 %v2338, %v2330
    %v2859 = vpack.c.b16 %v2339, %v2331
    %v2860 = vpack.c.b16 %v2340, %v2332
    %v2861 = vpack.c.b16 %v2341, %v2333
    %v2862 = vpack.c.b16 %v2342, %v2334
    %v2863 = vpack.c.b16 %v2343, %v2335
    %v2864 = vpack.c.b16 %v2344, %v2336
    %v2865 = vpack.c.b16 %v2353, %v2345
    %v2866 = vpack.c.b16 %v2354, %v2346
    %v2867 = vpack.c.b16 %v2355, %v2347
    %v2868 = vpack.c.b16 %v2356, %v2348
    %v2869 = vpack.c.b16 %v2357, %v2349
    %v2870 = vpack.c.b16 %v2358, %v2350
    %v2871 = vpack.c.b16 %v2359, %v2351
    %v2872 = vpack.c.b16 %v2360, %v2352
    %3385 = vmatprep.subr.bf16.mxu0 %v2362
    %3386 = vmatpush1.bf16.msra.mxu0 %v2361
    %3387 = vmatprep.subr.bf16.mxu0 %v2370
    %3388 = vmatpush1.bf16.msra.mxu0 %v2369
    %3389 = vmatprep.subr.bf16.mxu0 %v2378
    %3390 = vmatpush1.bf16.msra.mxu0 %v2377
    %3391 = vmatprep.subr.bf16.mxu0 %v2386
    %3392 = vmatpush1.bf16.msra.mxu0 %v2385
    %3393 = vmatprep.subr.bf16.mxu0 %v2394
    %3394 = vmatpush1.bf16.msra.mxu0 %v2393
    %3395 = vmatprep.subr.bf16.mxu0 %v2402
    %3396 = vmatpush1.bf16.msra.mxu0 %v2401
    %3397 = vmatprep.subr.bf16.mxu0 %v2410
    %3398 = vmatpush1.bf16.msra.mxu0 %v2409
    %3399 = vmatprep.subr.bf16.mxu0 %v2418
    %3400 = vmatpush1.bf16.msra.mxu0 %v2417
    %3401 = vmatprep.subr.bf16.mxu0 %v2426
    %3402 = vmatpush1.bf16.msra.mxu0 %v2425
    %3403 = vmatprep.subr.bf16.mxu0 %v2434
    %3404 = vmatpush1.bf16.msra.mxu0 %v2433
    %3405 = vmatprep.subr.bf16.mxu0 %v2442
    %3406 = vmatpush1.bf16.msra.mxu0 %v2441
    %3407 = vmatprep.subr.bf16.mxu0 %v2450
    %3408 = vmatpush1.bf16.msra.mxu0 %v2449
    %3409 = vmatprep.subr.bf16.mxu0 %v2458
    %3410 = vmatpush1.bf16.msra.mxu0 %v2457
    %3411 = vmatprep.subr.bf16.mxu0 %v2466
    %3412 = vmatpush1.bf16.msra.mxu0 %v2465
    %3413 = vmatprep.subr.bf16.mxu0 %v2474
    %3414 = vmatpush1.bf16.msra.mxu0 %v2473
    %3415 = vmatprep.subr.bf16.mxu0 %v2482
    %3416 = vmatpush1.bf16.msra.mxu0 %v2481
    %3417 = vmatprep.mubr.bf16.mxu0 %v264
    %3418 = vmatmul.mubr.bf16.gmra.mrb[0].mxu0 %v263
    %v3419 = vpop.f32.mrb[0].mxu0
    %v3420 = vadd.f32 %v788, %v3419
    %v3421 = vpop.f32.mrb[0].mxu0
    %v3422 = vadd.f32 %v792, %v3421
    %v3423 = vpop.f32.mrb[0].mxu0
    %v3424 = vpop.f32.mrb[0].mxu0
    %3425 = vdwg.mxu0
    %3426 = vmatprep.subr.bf16.mxu0 %v2490
    %3427 = vmatpush1.bf16.msra.mxu0 %v2489
    %3428 = vmatprep.subr.bf16.mxu0 %v2498
    %3429 = vmatpush1.bf16.msra.mxu0 %v2497
    %3430 = vmatprep.subr.bf16.mxu0 %v2506
    %3431 = vmatpush1.bf16.msra.mxu0 %v2505
    %3432 = vmatprep.subr.bf16.mxu0 %v2514
    %3433 = vmatpush1.bf16.msra.mxu0 %v2513
    %3434 = vmatprep.subr.bf16.mxu0 %v2522
    %3435 = vmatpush1.bf16.msra.mxu0 %v2521
    %3436 = vmatprep.subr.bf16.mxu0 %v2530
    %3437 = vmatpush1.bf16.msra.mxu0 %v2529
    %3438 = vmatprep.subr.bf16.mxu0 %v2538
    %3439 = vmatpush1.bf16.msra.mxu0 %v2537
    %3440 = vmatprep.subr.bf16.mxu0 %v2546
    %3441 = vmatpush1.bf16.msra.mxu0 %v2545
    %3442 = vmatprep.subr.bf16.mxu0 %v2554
    %3443 = vmatpush1.bf16.msra.mxu0 %v2553
    %3444 = vmatprep.subr.bf16.mxu0 %v2562
    %3445 = vmatpush1.bf16.msra.mxu0 %v2561
    %3446 = vmatprep.subr.bf16.mxu0 %v2570
    %3447 = vmatpush1.bf16.msra.mxu0 %v2569
    %3448 = vmatprep.subr.bf16.mxu0 %v2578
    %3449 = vmatpush1.bf16.msra.mxu0 %v2577
    %3450 = vmatprep.subr.bf16.mxu0 %v2586
    %3451 = vmatpush1.bf16.msra.mxu0 %v2585
    %3452 = vmatprep.subr.bf16.mxu0 %v2594
    %3453 = vmatpush1.bf16.msra.mxu0 %v2593
    %3454 = vmatprep.subr.bf16.mxu0 %v2602
    %3455 = vmatpush1.bf16.msra.mxu0 %v2601
    %3456 = vmatprep.subr.bf16.mxu0 %v2610
    %3457 = vmatpush1.bf16.msra.mxu0 %v2609
    %3458 = vmatprep.mubr.bf16.mxu0 %v266
    %3459 = vmatmul.mubr.bf16.gmra.mrb[0].mxu0 %v265
    %v3460 = vpop.f32.mrb[0].mxu0
    %v3461 = vadd.f32 %v3420, %v3460
    %v3462 = vpop.f32.mrb[0].mxu0
    %v3463 = vadd.f32 %v3422, %v3462
    %v3464 = vpop.f32.mrb[0].mxu0
    %v3465 = vpop.f32.mrb[0].mxu0
    %3466 = vdwg.mxu0
    %3467 = vmatprep.subr.bf16.mxu0 %v2618
    %3468 = vmatpush1.bf16.msra.mxu0 %v2617
    %3469 = vmatprep.subr.bf16.mxu0 %v2626
    %3470 = vmatpush1.bf16.msra.mxu0 %v2625
    %3471 = vmatprep.subr.bf16.mxu0 %v2634
    %3472 = vmatpush1.bf16.msra.mxu0 %v2633
    %3473 = vmatprep.subr.bf16.mxu0 %v2642
    %3474 = vmatpush1.bf16.msra.mxu0 %v2641
    %3475 = vmatprep.subr.bf16.mxu0 %v2650
    %3476 = vmatpush1.bf16.msra.mxu0 %v2649
    %3477 = vmatprep.subr.bf16.mxu0 %v2658
    %3478 = vmatpush1.bf16.msra.mxu0 %v2657
    %3479 = vmatprep.subr.bf16.mxu0 %v2666
    %3480 = vmatpush1.bf16.msra.mxu0 %v2665
    %3481 = vmatprep.subr.bf16.mxu0 %v2674
    %3482 = vmatpush1.bf16.msra.mxu0 %v2673
    %3483 = vmatprep.subr.bf16.mxu0 %v2682
    %3484 = vmatpush1.bf16.msra.mxu0 %v2681
    %3485 = vmatprep.subr.bf16.mxu0 %v2690
    %3486 = vmatpush1.bf16.msra.mxu0 %v2689
    %3487 = vmatprep.subr.bf16.mxu0 %v2698
    %3488 = vmatpush1.bf16.msra.mxu0 %v2697
    %3489 = vmatprep.subr.bf16.mxu0 %v2706
    %3490 = vmatpush1.bf16.msra.mxu0 %v2705
    %3491 = vmatprep.subr.bf16.mxu0 %v2714
    %3492 = vmatpush1.bf16.msra.mxu0 %v2713
    %3493 = vmatprep.subr.bf16.mxu0 %v2722
    %3494 = vmatpush1.bf16.msra.mxu0 %v2721
    %3495 = vmatprep.subr.bf16.mxu0 %v2730
    %3496 = vmatpush1.bf16.msra.mxu0 %v2729
    %3497 = vmatprep.subr.bf16.mxu0 %v2738
    %3498 = vmatpush1.bf16.msra.mxu0 %v2737
    %3499 = vmatprep.mubr.bf16.mxu0 %v268
    %3500 = vmatmul.mubr.bf16.gmra.mrb[0].mxu0 %v267
    %v3501 = vpop.f32.mrb[0].mxu0
    %v3502 = vadd.f32 %v3461, %v3501
    %v3503 = vpop.f32.mrb[0].mxu0
    %v3504 = vadd.f32 %v3463, %v3503
    %v3505 = vpop.f32.mrb[0].mxu0
    %v3506 = vpop.f32.mrb[0].mxu0
    %3507 = vdwg.mxu0
    %3508 = vmatprep.subr.bf16.mxu0 %v2746
    %3509 = vmatpush1.bf16.msra.mxu0 %v2745
    %3510 = vmatprep.subr.bf16.mxu0 %v2754
    %3511 = vmatpush1.bf16.msra.mxu0 %v2753
    %3512 = vmatprep.subr.bf16.mxu0 %v2762
    %3513 = vmatpush1.bf16.msra.mxu0 %v2761
    %3514 = vmatprep.subr.bf16.mxu0 %v2770
    %3515 = vmatpush1.bf16.msra.mxu0 %v2769
    %3516 = vmatprep.subr.bf16.mxu0 %v2778
    %3517 = vmatpush1.bf16.msra.mxu0 %v2777
    %3518 = vmatprep.subr.bf16.mxu0 %v2786
    %3519 = vmatpush1.bf16.msra.mxu0 %v2785
    %3520 = vmatprep.subr.bf16.mxu0 %v2794
    %3521 = vmatpush1.bf16.msra.mxu0 %v2793
    %3522 = vmatprep.subr.bf16.mxu0 %v2802
    %3523 = vmatpush1.bf16.msra.mxu0 %v2801
    %3524 = vmatprep.subr.bf16.mxu0 %v2810
    %3525 = vmatpush1.bf16.msra.mxu0 %v2809
    %3526 = vmatprep.subr.bf16.mxu0 %v2818
    %3527 = vmatpush1.bf16.msra.mxu0 %v2817
    %3528 = vmatprep.subr.bf16.mxu0 %v2826
    %3529 = vmatpush1.bf16.msra.mxu0 %v2825
    %3530 = vmatprep.subr.bf16.mxu0 %v2834
    %3531 = vmatpush1.bf16.msra.mxu0 %v2833
    %3532 = vmatprep.subr.bf16.mxu0 %v2842
    %3533 = vmatpush1.bf16.msra.mxu0 %v2841
    %3534 = vmatprep.subr.bf16.mxu0 %v2850
    %3535 = vmatpush1.bf16.msra.mxu0 %v2849
    %3536 = vmatprep.subr.bf16.mxu0 %v2858
    %3537 = vmatpush1.bf16.msra.mxu0 %v2857
    %3538 = vmatprep.subr.bf16.mxu0 %v2866
    %3539 = vmatpush1.bf16.msra.mxu0 %v2865
    %3540 = vmatprep.mubr.bf16.mxu0 %v270
    %3541 = vmatmul.mubr.bf16.gmra.mrb[0].mxu0 %v269
    %v3542 = vpop.f32.mrb[0].mxu0
    %v3543 = vadd.f32 %v3502, %v3542
    %v3544 = vpop.f32.mrb[0].mxu0
    %v3545 = vadd.f32 %v3504, %v3544
    %v3546 = vpop.f32.mrb[0].mxu0
    %v3547 = vpop.f32.mrb[0].mxu0
    %3548 = vdwg.mxu0
    %3549 = vmatprep.subr.bf16.mxu0 %v2364
    %3550 = vmatpush1.bf16.msra.mxu0 %v2363
    %3551 = vmatprep.subr.bf16.mxu0 %v2372
    %3552 = vmatpush1.bf16.msra.mxu0 %v2371
    %3553 = vmatprep.subr.bf16.mxu0 %v2380
    %3554 = vmatpush1.bf16.msra.mxu0 %v2379
    %3555 = vmatprep.subr.bf16.mxu0 %v2388
    %3556 = vmatpush1.bf16.msra.mxu0 %v2387
    %3557 = vmatprep.subr.bf16.mxu0 %v2396
    %3558 = vmatpush1.bf16.msra.mxu0 %v2395
    %3559 = vmatprep.subr.bf16.mxu0 %v2404
    %3560 = vmatpush1.bf16.msra.mxu0 %v2403
    %3561 = vmatprep.subr.bf16.mxu0 %v2412
    %3562 = vmatpush1.bf16.msra.mxu0 %v2411
    %3563 = vmatprep.subr.bf16.mxu0 %v2420
    %3564 = vmatpush1.bf16.msra.mxu0 %v2419
    %3565 = vmatprep.subr.bf16.mxu0 %v2428
    %3566 = vmatpush1.bf16.msra.mxu0 %v2427
    %3567 = vmatprep.subr.bf16.mxu0 %v2436
    %3568 = vmatpush1.bf16.msra.mxu0 %v2435
    %3569 = vmatprep.subr.bf16.mxu0 %v2444
    %3570 = vmatpush1.bf16.msra.mxu0 %v2443
    %3571 = vmatprep.subr.bf16.mxu0 %v2452
    %3572 = vmatpush1.bf16.msra.mxu0 %v2451
    %3573 = vmatprep.subr.bf16.mxu0 %v2460
    %3574 = vmatpush1.bf16.msra.mxu0 %v2459
    %3575 = vmatprep.subr.bf16.mxu0 %v2468
    %3576 = vmatpush1.bf16.msra.mxu0 %v2467
    %3577 = vmatprep.subr.bf16.mxu0 %v2476
    %3578 = vmatpush1.bf16.msra.mxu0 %v2475
    %3579 = vmatprep.subr.bf16.mxu0 %v2484
    %3580 = vmatpush1.bf16.msra.mxu0 %v2483
    %3581 = vmatprep.mubr.bf16.mxu0 %v264
    %3582 = vmatmul.mubr.bf16.gmra.mrb[0].mxu0 %v263
    %v3583 = vpop.f32.mrb[0].mxu0
    %v3584 = vadd.f32 %v796, %v3583
    %v3585 = vpop.f32.mrb[0].mxu0
    %v3586 = vadd.f32 %v800, %v3585
    %v3587 = vpop.f32.mrb[0].mxu0
    %v3588 = vpop.f32.mrb[0].mxu0
    %3589 = vdwg.mxu0
    %3590 = vmatprep.subr.bf16.mxu0 %v2492
    %3591 = vmatpush1.bf16.msra.mxu0 %v2491
    %3592 = vmatprep.subr.bf16.mxu0 %v2500
    %3593 = vmatpush1.bf16.msra.mxu0 %v2499
    %3594 = vmatprep.subr.bf16.mxu0 %v2508
    %3595 = vmatpush1.bf16.msra.mxu0 %v2507
    %3596 = vmatprep.subr.bf16.mxu0 %v2516
    %3597 = vmatpush1.bf16.msra.mxu0 %v2515
    %3598 = vmatprep.subr.bf16.mxu0 %v2524
    %3599 = vmatpush1.bf16.msra.mxu0 %v2523
    %3600 = vmatprep.subr.bf16.mxu0 %v2532
    %3601 = vmatpush1.bf16.msra.mxu0 %v2531
    %3602 = vmatprep.subr.bf16.mxu0 %v2540
    %3603 = vmatpush1.bf16.msra.mxu0 %v2539
    %3604 = vmatprep.subr.bf16.mxu0 %v2548
    %3605 = vmatpush1.bf16.msra.mxu0 %v2547
    %3606 = vmatprep.subr.bf16.mxu0 %v2556
    %3607 = vmatpush1.bf16.msra.mxu0 %v2555
    %3608 = vmatprep.subr.bf16.mxu0 %v2564
    %3609 = vmatpush1.bf16.msra.mxu0 %v2563
    %3610 = vmatprep.subr.bf16.mxu0 %v2572
    %3611 = vmatpush1.bf16.msra.mxu0 %v2571
    %3612 = vmatprep.subr.bf16.mxu0 %v2580
    %3613 = vmatpush1.bf16.msra.mxu0 %v2579
    %3614 = vmatprep.subr.bf16.mxu0 %v2588
    %3615 = vmatpush1.bf16.msra.mxu0 %v2587
    %3616 = vmatprep.subr.bf16.mxu0 %v2596
    %3617 = vmatpush1.bf16.msra.mxu0 %v2595
    %3618 = vmatprep.subr.bf16.mxu0 %v2604
    %3619 = vmatpush1.bf16.msra.mxu0 %v2603
    %3620 = vmatprep.subr.bf16.mxu0 %v2612
    %3621 = vmatpush1.bf16.msra.mxu0 %v2611
    %3622 = vmatprep.mubr.bf16.mxu0 %v266
    %3623 = vmatmul.mubr.bf16.gmra.mrb[0].mxu0 %v265
    %v3624 = vpop.f32.mrb[0].mxu0
    %v3625 = vadd.f32 %v3584, %v3624
    %v3626 = vpop.f32.mrb[0].mxu0
    %v3627 = vadd.f32 %v3586, %v3626
    %v3628 = vpop.f32.mrb[0].mxu0
    %v3629 = vpop.f32.mrb[0].mxu0
    %3630 = vdwg.mxu0
    %3631 = vmatprep.subr.bf16.mxu0 %v2620
    %3632 = vmatpush1.bf16.msra.mxu0 %v2619
    %3633 = vmatprep.subr.bf16.mxu0 %v2628
    %3634 = vmatpush1.bf16.msra.mxu0 %v2627
    %3635 = vmatprep.subr.bf16.mxu0 %v2636
    %3636 = vmatpush1.bf16.msra.mxu0 %v2635
    %3637 = vmatprep.subr.bf16.mxu0 %v2644
    %3638 = vmatpush1.bf16.msra.mxu0 %v2643
    %3639 = vmatprep.subr.bf16.mxu0 %v2652
    %3640 = vmatpush1.bf16.msra.mxu0 %v2651
    %3641 = vmatprep.subr.bf16.mxu0 %v2660
    %3642 = vmatpush1.bf16.msra.mxu0 %v2659
    %3643 = vmatprep.subr.bf16.mxu0 %v2668
    %3644 = vmatpush1.bf16.msra.mxu0 %v2667
    %3645 = vmatprep.subr.bf16.mxu0 %v2676
    %3646 = vmatpush1.bf16.msra.mxu0 %v2675
    %3647 = vmatprep.subr.bf16.mxu0 %v2684
    %3648 = vmatpush1.bf16.msra.mxu0 %v2683
    %3649 = vmatprep.subr.bf16.mxu0 %v2692
    %3650 = vmatpush1.bf16.msra.mxu0 %v2691
    %3651 = vmatprep.subr.bf16.mxu0 %v2700
    %3652 = vmatpush1.bf16.msra.mxu0 %v2699
    %3653 = vmatprep.subr.bf16.mxu0 %v2708
    %3654 = vmatpush1.bf16.msra.mxu0 %v2707
    %3655 = vmatprep.subr.bf16.mxu0 %v2716
    %3656 = vmatpush1.bf16.msra.mxu0 %v2715
    %3657 = vmatprep.subr.bf16.mxu0 %v2724
    %3658 = vmatpush1.bf16.msra.mxu0 %v2723
    %3659 = vmatprep.subr.bf16.mxu0 %v2732
    %3660 = vmatpush1.bf16.msra.mxu0 %v2731
    %3661 = vmatprep.subr.bf16.mxu0 %v2740
    %3662 = vmatpush1.bf16.msra.mxu0 %v2739
    %3663 = vmatprep.mubr.bf16.mxu0 %v268
    %3664 = vmatmul.mubr.bf16.gmra.mrb[0].mxu0 %v267
    %v3665 = vpop.f32.mrb[0].mxu0
    %v3666 = vadd.f32 %v3625, %v3665
    %v3667 = vpop.f32.mrb[0].mxu0
    %v3668 = vadd.f32 %v3627, %v3667
    %v3669 = vpop.f32.mrb[0].mxu0
    %v3670 = vpop.f32.mrb[0].mxu0
    %3671 = vdwg.mxu0
    %3672 = vmatprep.subr.bf16.mxu0 %v2748
    %3673 = vmatpush1.bf16.msra.mxu0 %v2747
    %3674 = vmatprep.subr.bf16.mxu0 %v2756
    %3675 = vmatpush1.bf16.msra.mxu0 %v2755
    %3676 = vmatprep.subr.bf16.mxu0 %v2764
    %3677 = vmatpush1.bf16.msra.mxu0 %v2763
    %3678 = vmatprep.subr.bf16.mxu0 %v2772
    %3679 = vmatpush1.bf16.msra.mxu0 %v2771
    %3680 = vmatprep.subr.bf16.mxu0 %v2780
    %3681 = vmatpush1.bf16.msra.mxu0 %v2779
    %3682 = vmatprep.subr.bf16.mxu0 %v2788
    %3683 = vmatpush1.bf16.msra.mxu0 %v2787
    %3684 = vmatprep.subr.bf16.mxu0 %v2796
    %3685 = vmatpush1.bf16.msra.mxu0 %v2795
    %3686 = vmatprep.subr.bf16.mxu0 %v2804
    %3687 = vmatpush1.bf16.msra.mxu0 %v2803
    %3688 = vmatprep.subr.bf16.mxu0 %v2812
    %3689 = vmatpush1.bf16.msra.mxu0 %v2811
    %3690 = vmatprep.subr.bf16.mxu0 %v2820
    %3691 = vmatpush1.bf16.msra.mxu0 %v2819
    %3692 = vmatprep.subr.bf16.mxu0 %v2828
    %3693 = vmatpush1.bf16.msra.mxu0 %v2827
    %3694 = vmatprep.subr.bf16.mxu0 %v2836
    %3695 = vmatpush1.bf16.msra.mxu0 %v2835
    %3696 = vmatprep.subr.bf16.mxu0 %v2844
    %3697 = vmatpush1.bf16.msra.mxu0 %v2843
    %3698 = vmatprep.subr.bf16.mxu0 %v2852
    %3699 = vmatpush1.bf16.msra.mxu0 %v2851
    %3700 = vmatprep.subr.bf16.mxu0 %v2860
    %3701 = vmatpush1.bf16.msra.mxu0 %v2859
    %3702 = vmatprep.subr.bf16.mxu0 %v2868
    %3703 = vmatpush1.bf16.msra.mxu0 %v2867
    %3704 = vmatprep.mubr.bf16.mxu0 %v270
    %3705 = vmatmul.mubr.bf16.gmra.mrb[0].mxu0 %v269
    %v3706 = vpop.f32.mrb[0].mxu0
    %v3707 = vadd.f32 %v3666, %v3706
    %v3708 = vpop.f32.mrb[0].mxu0
    %v3709 = vadd.f32 %v3668, %v3708
    %v3710 = vpop.f32.mrb[0].mxu0
    %v3711 = vpop.f32.mrb[0].mxu0
    %3712 = vdwg.mxu0
    %3713 = vmatprep.subr.bf16.mxu0 %v2366
    %3714 = vmatpush1.bf16.msra.mxu0 %v2365
    %3715 = vmatprep.subr.bf16.mxu0 %v2374
    %3716 = vmatpush1.bf16.msra.mxu0 %v2373
    %3717 = vmatprep.subr.bf16.mxu0 %v2382
    %3718 = vmatpush1.bf16.msra.mxu0 %v2381
    %3719 = vmatprep.subr.bf16.mxu0 %v2390
    %3720 = vmatpush1.bf16.msra.mxu0 %v2389
    %3721 = vmatprep.subr.bf16.mxu0 %v2398
    %3722 = vmatpush1.bf16.msra.mxu0 %v2397
    %3723 = vmatprep.subr.bf16.mxu0 %v2406
    %3724 = vmatpush1.bf16.msra.mxu0 %v2405
    %3725 = vmatprep.subr.bf16.mxu0 %v2414
    %3726 = vmatpush1.bf16.msra.mxu0 %v2413
    %3727 = vmatprep.subr.bf16.mxu0 %v2422
    %3728 = vmatpush1.bf16.msra.mxu0 %v2421
    %3729 = vmatprep.subr.bf16.mxu0 %v2430
    %3730 = vmatpush1.bf16.msra.mxu0 %v2429
    %3731 = vmatprep.subr.bf16.mxu0 %v2438
    %3732 = vmatpush1.bf16.msra.mxu0 %v2437
    %3733 = vmatprep.subr.bf16.mxu0 %v2446
    %3734 = vmatpush1.bf16.msra.mxu0 %v2445
    %3735 = vmatprep.subr.bf16.mxu0 %v2454
    %3736 = vmatpush1.bf16.msra.mxu0 %v2453
    %3737 = vmatprep.subr.bf16.mxu0 %v2462
    %3738 = vmatpush1.bf16.msra.mxu0 %v2461
    %3739 = vmatprep.subr.bf16.mxu0 %v2470
    %3740 = vmatpush1.bf16.msra.mxu0 %v2469
    %3741 = vmatprep.subr.bf16.mxu0 %v2478
    %3742 = vmatpush1.bf16.msra.mxu0 %v2477
    %3743 = vmatprep.subr.bf16.mxu0 %v2486
    %3744 = vmatpush1.bf16.msra.mxu0 %v2485
    %3745 = vmatprep.mubr.bf16.mxu0 %v264
    %3746 = vmatmul.mubr.bf16.gmra.mrb[0].mxu0 %v263
    %v3747 = vpop.f32.mrb[0].mxu0
    %v3748 = vadd.f32 %v804, %v3747
    %v3749 = vpop.f32.mrb[0].mxu0
    %v3750 = vadd.f32 %v808, %v3749
    %v3751 = vpop.f32.mrb[0].mxu0
    %v3752 = vpop.f32.mrb[0].mxu0
    %3753 = vdwg.mxu0
    %3754 = vmatprep.subr.bf16.mxu0 %v2494
    %3755 = vmatpush1.bf16.msra.mxu0 %v2493
    %3756 = vmatprep.subr.bf16.mxu0 %v2502
    %3757 = vmatpush1.bf16.msra.mxu0 %v2501
    %3758 = vmatprep.subr.bf16.mxu0 %v2510
    %3759 = vmatpush1.bf16.msra.mxu0 %v2509
    %3760 = vmatprep.subr.bf16.mxu0 %v2518
    %3761 = vmatpush1.bf16.msra.mxu0 %v2517
    %3762 = vmatprep.subr.bf16.mxu0 %v2526
    %3763 = vmatpush1.bf16.msra.mxu0 %v2525
    %3764 = vmatprep.subr.bf16.mxu0 %v2534
    %3765 = vmatpush1.bf16.msra.mxu0 %v2533
    %3766 = vmatprep.subr.bf16.mxu0 %v2542
    %3767 = vmatpush1.bf16.msra.mxu0 %v2541
    %3768 = vmatprep.subr.bf16.mxu0 %v2550
    %3769 = vmatpush1.bf16.msra.mxu0 %v2549
    %3770 = vmatprep.subr.bf16.mxu0 %v2558
    %3771 = vmatpush1.bf16.msra.mxu0 %v2557
    %3772 = vmatprep.subr.bf16.mxu0 %v2566
    %3773 = vmatpush1.bf16.msra.mxu0 %v2565
    %3774 = vmatprep.subr.bf16.mxu0 %v2574
    %3775 = vmatpush1.bf16.msra.mxu0 %v2573
    %3776 = vmatprep.subr.bf16.mxu0 %v2582
    %3777 = vmatpush1.bf16.msra.mxu0 %v2581
    %3778 = vmatprep.subr.bf16.mxu0 %v2590
    %3779 = vmatpush1.bf16.msra.mxu0 %v2589
    %3780 = vmatprep.subr.bf16.mxu0 %v2598
    %3781 = vmatpush1.bf16.msra.mxu0 %v2597
    %3782 = vmatprep.subr.bf16.mxu0 %v2606
    %3783 = vmatpush1.bf16.msra.mxu0 %v2605
    %3784 = vmatprep.subr.bf16.mxu0 %v2614
    %3785 = vmatpush1.bf16.msra.mxu0 %v2613
    %3786 = vmatprep.mubr.bf16.mxu0 %v266
    %3787 = vmatmul.mubr.bf16.gmra.mrb[0].mxu0 %v265
    %v3788 = vpop.f32.mrb[0].mxu0
    %v3789 = vadd.f32 %v3748, %v3788
    %v3790 = vpop.f32.mrb[0].mxu0
    %v3791 = vadd.f32 %v3750, %v3790
    %v3792 = vpop.f32.mrb[0].mxu0
    %v3793 = vpop.f32.mrb[0].mxu0
    %3794 = vdwg.mxu0
    %3795 = vmatprep.subr.bf16.mxu0 %v2622
    %3796 = vmatpush1.bf16.msra.mxu0 %v2621
    %3797 = vmatprep.subr.bf16.mxu0 %v2630
    %3798 = vmatpush1.bf16.msra.mxu0 %v2629
    %3799 = vmatprep.subr.bf16.mxu0 %v2638
    %3800 = vmatpush1.bf16.msra.mxu0 %v2637
    %3801 = vmatprep.subr.bf16.mxu0 %v2646
    %3802 = vmatpush1.bf16.msra.mxu0 %v2645
    %3803 = vmatprep.subr.bf16.mxu0 %v2654
    %3804 = vmatpush1.bf16.msra.mxu0 %v2653
    %3805 = vmatprep.subr.bf16.mxu0 %v2662
    %3806 = vmatpush1.bf16.msra.mxu0 %v2661
    %3807 = vmatprep.subr.bf16.mxu0 %v2670
    %3808 = vmatpush1.bf16.msra.mxu0 %v2669
    %3809 = vmatprep.subr.bf16.mxu0 %v2678
    %3810 = vmatpush1.bf16.msra.mxu0 %v2677
    %3811 = vmatprep.subr.bf16.mxu0 %v2686
    %3812 = vmatpush1.bf16.msra.mxu0 %v2685
    %3813 = vmatprep.subr.bf16.mxu0 %v2694
    %3814 = vmatpush1.bf16.msra.mxu0 %v2693
    %3815 = vmatprep.subr.bf16.mxu0 %v2702
    %3816 = vmatpush1.bf16.msra.mxu0 %v2701
    %3817 = vmatprep.subr.bf16.mxu0 %v2710
    %3818 = vmatpush1.bf16.msra.mxu0 %v2709
    %3819 = vmatprep.subr.bf16.mxu0 %v2718
    %3820 = vmatpush1.bf16.msra.mxu0 %v2717
    %3821 = vmatprep.subr.bf16.mxu0 %v2726
    %3822 = vmatpush1.bf16.msra.mxu0 %v2725
    %3823 = vmatprep.subr.bf16.mxu0 %v2734
    %3824 = vmatpush1.bf16.msra.mxu0 %v2733
    %3825 = vmatprep.subr.bf16.mxu0 %v2742
    %3826 = vmatpush1.bf16.msra.mxu0 %v2741
    %3827 = vmatprep.mubr.bf16.mxu0 %v268
    %3828 = vmatmul.mubr.bf16.gmra.mrb[0].mxu0 %v267
    %v3829 = vpop.f32.mrb[0].mxu0
    %v3830 = vadd.f32 %v3789, %v3829
    %v3831 = vpop.f32.mrb[0].mxu0
    %v3832 = vadd.f32 %v3791, %v3831
    %v3833 = vpop.f32.mrb[0].mxu0
    %v3834 = vpop.f32.mrb[0].mxu0
    %3835 = vdwg.mxu0
    %3836 = vmatprep.subr.bf16.mxu0 %v2750
    %3837 = vmatpush1.bf16.msra.mxu0 %v2749
    %3838 = vmatprep.subr.bf16.mxu0 %v2758
    %3839 = vmatpush1.bf16.msra.mxu0 %v2757
    %3840 = vmatprep.subr.bf16.mxu0 %v2766
    %3841 = vmatpush1.bf16.msra.mxu0 %v2765
    %3842 = vmatprep.subr.bf16.mxu0 %v2774
    %3843 = vmatpush1.bf16.msra.mxu0 %v2773
    %3844 = vmatprep.subr.bf16.mxu0 %v2782
    %3845 = vmatpush1.bf16.msra.mxu0 %v2781
    %3846 = vmatprep.subr.bf16.mxu0 %v2790
    %3847 = vmatpush1.bf16.msra.mxu0 %v2789
    %3848 = vmatprep.subr.bf16.mxu0 %v2798
    %3849 = vmatpush1.bf16.msra.mxu0 %v2797
    %3850 = vmatprep.subr.bf16.mxu0 %v2806
    %3851 = vmatpush1.bf16.msra.mxu0 %v2805
    %3852 = vmatprep.subr.bf16.mxu0 %v2814
    %3853 = vmatpush1.bf16.msra.mxu0 %v2813
    %3854 = vmatprep.subr.bf16.mxu0 %v2822
    %3855 = vmatpush1.bf16.msra.mxu0 %v2821
    %3856 = vmatprep.subr.bf16.mxu0 %v2830
    %3857 = vmatpush1.bf16.msra.mxu0 %v2829
    %3858 = vmatprep.subr.bf16.mxu0 %v2838
    %3859 = vmatpush1.bf16.msra.mxu0 %v2837
    %3860 = vmatprep.subr.bf16.mxu0 %v2846
    %3861 = vmatpush1.bf16.msra.mxu0 %v2845
    %3862 = vmatprep.subr.bf16.mxu0 %v2854
    %3863 = vmatpush1.bf16.msra.mxu0 %v2853
    %3864 = vmatprep.subr.bf16.mxu0 %v2862
    %3865 = vmatpush1.bf16.msra.mxu0 %v2861
    %3866 = vmatprep.subr.bf16.mxu0 %v2870
    %3867 = vmatpush1.bf16.msra.mxu0 %v2869
    %3868 = vmatprep.mubr.bf16.mxu0 %v270
    %3869 = vmatmul.mubr.bf16.gmra.mrb[0].mxu0 %v269
    %v3870 = vpop.f32.mrb[0].mxu0
    %v3871 = vadd.f32 %v3830, %v3870
    %v3872 = vpop.f32.mrb[0].mxu0
    %v3873 = vadd.f32 %v3832, %v3872
    %v3874 = vpop.f32.mrb[0].mxu0
    %v3875 = vpop.f32.mrb[0].mxu0
    %3876 = vdwg.mxu0
    %3877 = vmatprep.subr.bf16.mxu0 %v2368
    %3878 = vmatpush1.bf16.msra.mxu0 %v2367
    %3879 = vmatprep.subr.bf16.mxu0 %v2376
    %3880 = vmatpush1.bf16.msra.mxu0 %v2375
    %3881 = vmatprep.subr.bf16.mxu0 %v2384
    %3882 = vmatpush1.bf16.msra.mxu0 %v2383
    %3883 = vmatprep.subr.bf16.mxu0 %v2392
    %3884 = vmatpush1.bf16.msra.mxu0 %v2391
    %3885 = vmatprep.subr.bf16.mxu0 %v2400
    %3886 = vmatpush1.bf16.msra.mxu0 %v2399
    %3887 = vmatprep.subr.bf16.mxu0 %v2408
    %3888 = vmatpush1.bf16.msra.mxu0 %v2407
    %3889 = vmatprep.subr.bf16.mxu0 %v2416
    %3890 = vmatpush1.bf16.msra.mxu0 %v2415
    %3891 = vmatprep.subr.bf16.mxu0 %v2424
    %3892 = vmatpush1.bf16.msra.mxu0 %v2423
    %3893 = vmatprep.subr.bf16.mxu0 %v2432
    %3894 = vmatpush1.bf16.msra.mxu0 %v2431
    %3895 = vmatprep.subr.bf16.mxu0 %v2440
    %3896 = vmatpush1.bf16.msra.mxu0 %v2439
    %3897 = vmatprep.subr.bf16.mxu0 %v2448
    %3898 = vmatpush1.bf16.msra.mxu0 %v2447
    %3899 = vmatprep.subr.bf16.mxu0 %v2456
    %3900 = vmatpush1.bf16.msra.mxu0 %v2455
    %3901 = vmatprep.subr.bf16.mxu0 %v2464
    %3902 = vmatpush1.bf16.msra.mxu0 %v2463
    %3903 = vmatprep.subr.bf16.mxu0 %v2472
    %3904 = vmatpush1.bf16.msra.mxu0 %v2471
    %3905 = vmatprep.subr.bf16.mxu0 %v2480
    %3906 = vmatpush1.bf16.msra.mxu0 %v2479
    %3907 = vmatprep.subr.bf16.mxu0 %v2488
    %3908 = vmatpush1.bf16.msra.mxu0 %v2487
    %3909 = vmatprep.mubr.bf16.mxu0 %v264
    %3910 = vmatmul.mubr.bf16.gmra.mrb[0].mxu0 %v263
    %v3911 = vpop.f32.mrb[0].mxu0
    %v3912 = vadd.f32 %v812, %v3911
    %v3913 = vpop.f32.mrb[0].mxu0
    %v3914 = vadd.f32 %v816, %v3913
    %v3915 = vpop.f32.mrb[0].mxu0
    %v3916 = vpop.f32.mrb[0].mxu0
    %3917 = vdwg.mxu0
    %3918 = vmatprep.subr.bf16.mxu0 %v2496
    %3919 = vmatpush1.bf16.msra.mxu0 %v2495
    %3920 = vmatprep.subr.bf16.mxu0 %v2504
    %3921 = vmatpush1.bf16.msra.mxu0 %v2503
    %3922 = vmatprep.subr.bf16.mxu0 %v2512
    %3923 = vmatpush1.bf16.msra.mxu0 %v2511
    %3924 = vmatprep.subr.bf16.mxu0 %v2520
    %3925 = vmatpush1.bf16.msra.mxu0 %v2519
    %3926 = vmatprep.subr.bf16.mxu0 %v2528
    %3927 = vmatpush1.bf16.msra.mxu0 %v2527
    %3928 = vmatprep.subr.bf16.mxu0 %v2536
    %3929 = vmatpush1.bf16.msra.mxu0 %v2535
    %3930 = vmatprep.subr.bf16.mxu0 %v2544
    %3931 = vmatpush1.bf16.msra.mxu0 %v2543
    %3932 = vmatprep.subr.bf16.mxu0 %v2552
    %3933 = vmatpush1.bf16.msra.mxu0 %v2551
    %3934 = vmatprep.subr.bf16.mxu0 %v2560
    %3935 = vmatpush1.bf16.msra.mxu0 %v2559
    %3936 = vmatprep.subr.bf16.mxu0 %v2568
    %3937 = vmatpush1.bf16.msra.mxu0 %v2567
    %3938 = vmatprep.subr.bf16.mxu0 %v2576
    %3939 = vmatpush1.bf16.msra.mxu0 %v2575
    %3940 = vmatprep.subr.bf16.mxu0 %v2584
    %3941 = vmatpush1.bf16.msra.mxu0 %v2583
    %3942 = vmatprep.subr.bf16.mxu0 %v2592
    %3943 = vmatpush1.bf16.msra.mxu0 %v2591
    %3944 = vmatprep.subr.bf16.mxu0 %v2600
    %3945 = vmatpush1.bf16.msra.mxu0 %v2599
    %3946 = vmatprep.subr.bf16.mxu0 %v2608
    %3947 = vmatpush1.bf16.msra.mxu0 %v2607
    %3948 = vmatprep.subr.bf16.mxu0 %v2616
    %3949 = vmatpush1.bf16.msra.mxu0 %v2615
    %3950 = vmatprep.mubr.bf16.mxu0 %v266
    %3951 = vmatmul.mubr.bf16.gmra.mrb[0].mxu0 %v265
    %v3952 = vpop.f32.mrb[0].mxu0
    %v3953 = vadd.f32 %v3912, %v3952
    %v3954 = vpop.f32.mrb[0].mxu0
    %v3955 = vadd.f32 %v3914, %v3954
    %v3956 = vpop.f32.mrb[0].mxu0
    %v3957 = vpop.f32.mrb[0].mxu0
    %3958 = vdwg.mxu0
    %3959 = vmatprep.subr.bf16.mxu0 %v2624
    %3960 = vmatpush1.bf16.msra.mxu0 %v2623
    %3961 = vmatprep.subr.bf16.mxu0 %v2632
    %3962 = vmatpush1.bf16.msra.mxu0 %v2631
    %3963 = vmatprep.subr.bf16.mxu0 %v2640
    %3964 = vmatpush1.bf16.msra.mxu0 %v2639
    %3965 = vmatprep.subr.bf16.mxu0 %v2648
    %3966 = vmatpush1.bf16.msra.mxu0 %v2647
    %3967 = vmatprep.subr.bf16.mxu0 %v2656
    %3968 = vmatpush1.bf16.msra.mxu0 %v2655
    %3969 = vmatprep.subr.bf16.mxu0 %v2664
    %3970 = vmatpush1.bf16.msra.mxu0 %v2663
    %3971 = vmatprep.subr.bf16.mxu0 %v2672
    %3972 = vmatpush1.bf16.msra.mxu0 %v2671
    %3973 = vmatprep.subr.bf16.mxu0 %v2680
    %3974 = vmatpush1.bf16.msra.mxu0 %v2679
    %3975 = vmatprep.subr.bf16.mxu0 %v2688
    %3976 = vmatpush1.bf16.msra.mxu0 %v2687
    %3977 = vmatprep.subr.bf16.mxu0 %v2696
    %3978 = vmatpush1.bf16.msra.mxu0 %v2695
    %3979 = vmatprep.subr.bf16.mxu0 %v2704
    %3980 = vmatpush1.bf16.msra.mxu0 %v2703
    %3981 = vmatprep.subr.bf16.mxu0 %v2712
    %3982 = vmatpush1.bf16.msra.mxu0 %v2711
    %3983 = vmatprep.subr.bf16.mxu0 %v2720
    %3984 = vmatpush1.bf16.msra.mxu0 %v2719
    %3985 = vmatprep.subr.bf16.mxu0 %v2728
    %3986 = vmatpush1.bf16.msra.mxu0 %v2727
    %3987 = vmatprep.subr.bf16.mxu0 %v2736
    %3988 = vmatpush1.bf16.msra.mxu0 %v2735
    %3989 = vmatprep.subr.bf16.mxu0 %v2744
    %3990 = vmatpush1.bf16.msra.mxu0 %v2743
    %3991 = vmatprep.mubr.bf16.mxu0 %v268
    %3992 = vmatmul.mubr.bf16.gmra.mrb[0].mxu0 %v267
    %v3993 = vpop.f32.mrb[0].mxu0
    %v3994 = vadd.f32 %v3953, %v3993
    %v3995 = vpop.f32.mrb[0].mxu0
    %v3996 = vadd.f32 %v3955, %v3995
    %v3997 = vpop.f32.mrb[0].mxu0
    %v3998 = vpop.f32.mrb[0].mxu0
    %3999 = vdwg.mxu0
    %4000 = vmatprep.subr.bf16.mxu0 %v2752
    %4001 = vmatpush1.bf16.msra.mxu0 %v2751
    %4002 = vmatprep.subr.bf16.mxu0 %v2760
    %4003 = vmatpush1.bf16.msra.mxu0 %v2759
    %4004 = vmatprep.subr.bf16.mxu0 %v2768
    %4005 = vmatpush1.bf16.msra.mxu0 %v2767
    %4006 = vmatprep.subr.bf16.mxu0 %v2776
    %4007 = vmatpush1.bf16.msra.mxu0 %v2775
    %4008 = vmatprep.subr.bf16.mxu0 %v2784
    %4009 = vmatpush1.bf16.msra.mxu0 %v2783
    %4010 = vmatprep.subr.bf16.mxu0 %v2792
    %4011 = vmatpush1.bf16.msra.mxu0 %v2791
    %4012 = vmatprep.subr.bf16.mxu0 %v2800
    %4013 = vmatpush1.bf16.msra.mxu0 %v2799
    %4014 = vmatprep.subr.bf16.mxu0 %v2808
    %4015 = vmatpush1.bf16.msra.mxu0 %v2807
    %4016 = vmatprep.subr.bf16.mxu0 %v2816
    %4017 = vmatpush1.bf16.msra.mxu0 %v2815
    %4018 = vmatprep.subr.bf16.mxu0 %v2824
    %4019 = vmatpush1.bf16.msra.mxu0 %v2823
    %4020 = vmatprep.subr.bf16.mxu0 %v2832
    %4021 = vmatpush1.bf16.msra.mxu0 %v2831
    %4022 = vmatprep.subr.bf16.mxu0 %v2840
    %4023 = vmatpush1.bf16.msra.mxu0 %v2839
    %4024 = vmatprep.subr.bf16.mxu0 %v2848
    %4025 = vmatpush1.bf16.msra.mxu0 %v2847
    %4026 = vmatprep.subr.bf16.mxu0 %v2856
    %4027 = vmatpush1.bf16.msra.mxu0 %v2855
    %4028 = vmatprep.subr.bf16.mxu0 %v2864
    %4029 = vmatpush1.bf16.msra.mxu0 %v2863
    %4030 = vmatprep.subr.bf16.mxu0 %v2872
    %4031 = vmatpush1.bf16.msra.mxu0 %v2871
    %4032 = vmatprep.mubr.bf16.mxu0 %v270
    %4033 = vmatmul.mubr.bf16.gmra.mrb[0].mxu0 %v269
    %v4034 = vpop.f32.mrb[0].mxu0
    %v4035 = vadd.f32 %v3994, %v4034
    %v4036 = vpop.f32.mrb[0].mxu0
    %v4037 = vadd.f32 %v3996, %v4036
    %v4038 = vpop.f32.mrb[0].mxu0
    %v4039 = vpop.f32.mrb[0].mxu0
    %4040 = vdwg.mxu0
    %v4041 = vmax.f32 %v3543, 0.0
    %v4042 = vmax.f32 %v3545, 0.0
    %v4043 = vmax.f32 %v3707, 0.0
    %v4044 = vmax.f32 %v3709, 0.0
    %v4045 = vmax.f32 %v3871, 0.0
    %v4046 = vmax.f32 %v3873, 0.0
    %v4047 = vmax.f32 %v4035, 0.0
    %v4048 = vmax.f32 %v4037, 0.0
    %v4049 = vld [vmem:[%s5] sm:$0xff]
    %v4050 = vld [vmem:[%s5 + $0x8] sm:$0xff]
    %v4051 = vld [vmem:[%s5 + $0x10] sm:$0xff]
    %v4052 = vld [vmem:[%s5 + $0x18] sm:$0xff]
    %v4053 = vld [vmem:[%s5 + $0x20] sm:$0xff]
    %v4054 = vld [vmem:[%s5 + $0x28] sm:$0xff]
    %v4055 = vld [vmem:[%s5 + $0x30] sm:$0xff]
    %v4056 = vld [vmem:[%s5 + $0x38] sm:$0xff]
    %v4057 = vld [vmem:[%s5 + $0x40] sm:$0xff]
    %v4058 = vld [vmem:[%s5 + $0x48] sm:$0xff]
    %v4059 = vld [vmem:[%s5 + $0x50] sm:$0xff]
    %v4060 = vld [vmem:[%s5 + $0x58] sm:$0xff]
    %v4061 = vld [vmem:[%s5 + $0x60] sm:$0xff]
    %v4062 = vld [vmem:[%s5 + $0x68] sm:$0xff]
    %v4063 = vld [vmem:[%s5 + $0x70] sm:$0xff]
    %v4064 = vld [vmem:[%s5 + $0x78] sm:$0xff]
    %v4065 = vld [vmem:[%s5 + $0x80] sm:$0xff]
    %v4066 = vld [vmem:[%s5 + $0x88] sm:$0xff]
    %v4067 = vld [vmem:[%s5 + $0x90] sm:$0xff]
    %v4068 = vld [vmem:[%s5 + $0x98] sm:$0xff]
    %v4069 = vld [vmem:[%s5 + $0xa0] sm:$0xff]
    %v4070 = vld [vmem:[%s5 + $0xa8] sm:$0xff]
    %v4071 = vld [vmem:[%s5 + $0xb0] sm:$0xff]
    %v4072 = vld [vmem:[%s5 + $0xb8] sm:$0xff]
    %v4073 = vld [vmem:[%s5 + $0xc0] sm:$0xff]
    %v4074 = vld [vmem:[%s5 + $0xc8] sm:$0xff]
    %v4075 = vld [vmem:[%s5 + $0xd0] sm:$0xff]
    %v4076 = vld [vmem:[%s5 + $0xd8] sm:$0xff]
    %v4077 = vld [vmem:[%s5 + $0xe0] sm:$0xff]
    %v4078 = vld [vmem:[%s5 + $0xe8] sm:$0xff]
    %v4079 = vld [vmem:[%s5 + $0xf0] sm:$0xff]
    %v4080 = vld [vmem:[%s5 + $0xf8] sm:$0xff]
    %v4081 = vld [vmem:[%s5 + $0x100] sm:$0xff]
    %v4082 = vld [vmem:[%s5 + $0x108] sm:$0xff]
    %v4083 = vld [vmem:[%s5 + $0x110] sm:$0xff]
    %v4084 = vld [vmem:[%s5 + $0x118] sm:$0xff]
    %v4085 = vld [vmem:[%s5 + $0x120] sm:$0xff]
    %v4086 = vld [vmem:[%s5 + $0x128] sm:$0xff]
    %v4087 = vld [vmem:[%s5 + $0x130] sm:$0xff]
    %v4088 = vld [vmem:[%s5 + $0x138] sm:$0xff]
    %v4089 = vld [vmem:[%s5 + $0x140] sm:$0xff]
    %v4090 = vld [vmem:[%s5 + $0x148] sm:$0xff]
    %v4091 = vld [vmem:[%s5 + $0x150] sm:$0xff]
    %v4092 = vld [vmem:[%s5 + $0x158] sm:$0xff]
    %v4093 = vld [vmem:[%s5 + $0x160] sm:$0xff]
    %v4094 = vld [vmem:[%s5 + $0x168] sm:$0xff]
    %v4095 = vld [vmem:[%s5 + $0x170] sm:$0xff]
    %v4096 = vld [vmem:[%s5 + $0x178] sm:$0xff]
    %v4097 = vld [vmem:[%s5 + $0x180] sm:$0xff]
    %v4098 = vld [vmem:[%s5 + $0x188] sm:$0xff]
    %v4099 = vld [vmem:[%s5 + $0x190] sm:$0xff]
    %v4100 = vld [vmem:[%s5 + $0x198] sm:$0xff]
    %v4101 = vld [vmem:[%s5 + $0x1a0] sm:$0xff]
    %v4102 = vld [vmem:[%s5 + $0x1a8] sm:$0xff]
    %v4103 = vld [vmem:[%s5 + $0x1b0] sm:$0xff]
    %v4104 = vld [vmem:[%s5 + $0x1b8] sm:$0xff]
    %v4105 = vld [vmem:[%s5 + $0x1c0] sm:$0xff]
    %v4106 = vld [vmem:[%s5 + $0x1c8] sm:$0xff]
    %v4107 = vld [vmem:[%s5 + $0x1d0] sm:$0xff]
    %v4108 = vld [vmem:[%s5 + $0x1d8] sm:$0xff]
    %v4109 = vld [vmem:[%s5 + $0x1e0] sm:$0xff]
    %v4110 = vld [vmem:[%s5 + $0x1e8] sm:$0xff]
    %v4111 = vld [vmem:[%s5 + $0x1f0] sm:$0xff]
    %v4112 = vld [vmem:[%s5 + $0x1f8] sm:$0xff]
    %v4113 = vld [vmem:[%s5 + $0x200] sm:$0xff]
    %v4114 = vld [vmem:[%s5 + $0x208] sm:$0xff]
    %v4115 = vld [vmem:[%s5 + $0x210] sm:$0xff]
    %v4116 = vld [vmem:[%s5 + $0x218] sm:$0xff]
    %v4117 = vld [vmem:[%s5 + $0x220] sm:$0xff]
    %v4118 = vld [vmem:[%s5 + $0x228] sm:$0xff]
    %v4119 = vld [vmem:[%s5 + $0x230] sm:$0xff]
    %v4120 = vld [vmem:[%s5 + $0x238] sm:$0xff]
    %v4121 = vld [vmem:[%s5 + $0x240] sm:$0xff]
    %v4122 = vld [vmem:[%s5 + $0x248] sm:$0xff]
    %v4123 = vld [vmem:[%s5 + $0x250] sm:$0xff]
    %v4124 = vld [vmem:[%s5 + $0x258] sm:$0xff]
    %v4125 = vld [vmem:[%s5 + $0x260] sm:$0xff]
    %v4126 = vld [vmem:[%s5 + $0x268] sm:$0xff]
    %v4127 = vld [vmem:[%s5 + $0x270] sm:$0xff]
    %v4128 = vld [vmem:[%s5 + $0x278] sm:$0xff]
    %v4129 = vld [vmem:[%s5 + $0x280] sm:$0xff]
    %v4130 = vld [vmem:[%s5 + $0x288] sm:$0xff]
    %v4131 = vld [vmem:[%s5 + $0x290] sm:$0xff]
    %v4132 = vld [vmem:[%s5 + $0x298] sm:$0xff]
    %v4133 = vld [vmem:[%s5 + $0x2a0] sm:$0xff]
    %v4134 = vld [vmem:[%s5 + $0x2a8] sm:$0xff]
    %v4135 = vld [vmem:[%s5 + $0x2b0] sm:$0xff]
    %v4136 = vld [vmem:[%s5 + $0x2b8] sm:$0xff]
    %v4137 = vld [vmem:[%s5 + $0x2c0] sm:$0xff]
    %v4138 = vld [vmem:[%s5 + $0x2c8] sm:$0xff]
    %v4139 = vld [vmem:[%s5 + $0x2d0] sm:$0xff]
    %v4140 = vld [vmem:[%s5 + $0x2d8] sm:$0xff]
    %v4141 = vld [vmem:[%s5 + $0x2e0] sm:$0xff]
    %v4142 = vld [vmem:[%s5 + $0x2e8] sm:$0xff]
    %v4143 = vld [vmem:[%s5 + $0x2f0] sm:$0xff]
    %v4144 = vld [vmem:[%s5 + $0x2f8] sm:$0xff]
    %v4145 = vld [vmem:[%s5 + $0x300] sm:$0xff]
    %v4146 = vld [vmem:[%s5 + $0x308] sm:$0xff]
    %v4147 = vld [vmem:[%s5 + $0x310] sm:$0xff]
    %v4148 = vld [vmem:[%s5 + $0x318] sm:$0xff]
    %v4149 = vld [vmem:[%s5 + $0x320] sm:$0xff]
    %v4150 = vld [vmem:[%s5 + $0x328] sm:$0xff]
    %v4151 = vld [vmem:[%s5 + $0x330] sm:$0xff]
    %v4152 = vld [vmem:[%s5 + $0x338] sm:$0xff]
    %v4153 = vld [vmem:[%s5 + $0x340] sm:$0xff]
    %v4154 = vld [vmem:[%s5 + $0x348] sm:$0xff]
    %v4155 = vld [vmem:[%s5 + $0x350] sm:$0xff]
    %v4156 = vld [vmem:[%s5 + $0x358] sm:$0xff]
    %v4157 = vld [vmem:[%s5 + $0x360] sm:$0xff]
    %v4158 = vld [vmem:[%s5 + $0x368] sm:$0xff]
    %v4159 = vld [vmem:[%s5 + $0x370] sm:$0xff]
    %v4160 = vld [vmem:[%s5 + $0x378] sm:$0xff]
    %v4161 = vld [vmem:[%s5 + $0x380] sm:$0xff]
    %v4162 = vld [vmem:[%s5 + $0x388] sm:$0xff]
    %v4163 = vld [vmem:[%s5 + $0x390] sm:$0xff]
    %v4164 = vld [vmem:[%s5 + $0x398] sm:$0xff]
    %v4165 = vld [vmem:[%s5 + $0x3a0] sm:$0xff]
    %v4166 = vld [vmem:[%s5 + $0x3a8] sm:$0xff]
    %v4167 = vld [vmem:[%s5 + $0x3b0] sm:$0xff]
    %v4168 = vld [vmem:[%s5 + $0x3b8] sm:$0xff]
    %v4169 = vld [vmem:[%s5 + $0x3c0] sm:$0xff]
    %v4170 = vld [vmem:[%s5 + $0x3c8] sm:$0xff]
    %v4171 = vld [vmem:[%s5 + $0x3d0] sm:$0xff]
    %v4172 = vld [vmem:[%s5 + $0x3d8] sm:$0xff]
    %v4173 = vld [vmem:[%s5 + $0x3e0] sm:$0xff]
    %v4174 = vld [vmem:[%s5 + $0x3e8] sm:$0xff]
    %v4175 = vld [vmem:[%s5 + $0x3f0] sm:$0xff]
    %v4176 = vld [vmem:[%s5 + $0x3f8] sm:$0xff]
    %v4177 = vld [vmem:[#allocation9] sm:$0x1]
    %v4179 = vlaneseq
    %v4180 = vshrl.u32 %v4179, 7
    %v4181 = vsub.s32 0, %v4180
    %v4182 = vrot.slane %v4177, %v4181
    %4184 = vmatprep.subr.mxu0 0.0
    %4185 = vmatpush1.msra.mxu0 %v4049
    %4186 = vmatprep.subr.mxu0 0.0
    %4187 = vmatpush1.msra.mxu0 %v4050
    %4188 = vmatprep.subr.mxu0 0.0
    %4189 = vmatpush1.msra.mxu0 %v4051
    %4190 = vmatprep.subr.mxu0 0.0
    %4191 = vmatpush1.msra.mxu0 %v4052
    %4192 = vmatprep.subr.mxu0 0.0
    %4193 = vmatpush1.msra.mxu0 %v4053
    %4194 = vmatprep.subr.mxu0 0.0
    %4195 = vmatpush1.msra.mxu0 %v4054
    %4196 = vmatprep.subr.mxu0 0.0
    %4197 = vmatpush1.msra.mxu0 %v4055
    %4198 = vmatprep.subr.mxu0 0.0
    %4199 = vmatpush1.msra.mxu0 %v4056
    %4200 = vmatprep.subr.mxu0 0.0
    %4201 = vmatpush1.msra.mxu0 %v4057
    %4202 = vmatprep.subr.mxu0 0.0
    %4203 = vmatpush1.msra.mxu0 %v4058
    %4204 = vmatprep.subr.mxu0 0.0
    %4205 = vmatpush1.msra.mxu0 %v4059
    %4206 = vmatprep.subr.mxu0 0.0
    %4207 = vmatpush1.msra.mxu0 %v4060
    %4208 = vmatprep.subr.mxu0 0.0
    %4209 = vmatpush1.msra.mxu0 %v4061
    %4210 = vmatprep.subr.mxu0 0.0
    %4211 = vmatpush1.msra.mxu0 %v4062
    %4212 = vmatprep.subr.mxu0 0.0
    %4213 = vmatpush1.msra.mxu0 %v4063
    %4214 = vmatprep.subr.mxu0 0.0
    %4215 = vmatpush1.msra.mxu0 %v4064
    %4216 = vmatprep.subr.mxu0 0.0
    %4217 = vmatpush1.msra.mxu0 %v4065
    %4218 = vmatprep.subr.mxu0 0.0
    %4219 = vmatpush1.msra.mxu0 %v4066
    %4220 = vmatprep.subr.mxu0 0.0
    %4221 = vmatpush1.msra.mxu0 %v4067
    %4222 = vmatprep.subr.mxu0 0.0
    %4223 = vmatpush1.msra.mxu0 %v4068
    %4224 = vmatprep.subr.mxu0 0.0
    %4225 = vmatpush1.msra.mxu0 %v4069
    %4226 = vmatprep.subr.mxu0 0.0
    %4227 = vmatpush1.msra.mxu0 %v4070
    %4228 = vmatprep.subr.mxu0 0.0
    %4229 = vmatpush1.msra.mxu0 %v4071
    %4230 = vmatprep.subr.mxu0 0.0
    %4231 = vmatpush1.msra.mxu0 %v4072
    %4232 = vmatprep.subr.mxu0 0.0
    %4233 = vmatpush1.msra.mxu0 %v4073
    %4234 = vmatprep.subr.mxu0 0.0
    %4235 = vmatpush1.msra.mxu0 %v4074
    %4236 = vmatprep.subr.mxu0 0.0
    %4237 = vmatpush1.msra.mxu0 %v4075
    %4238 = vmatprep.subr.mxu0 0.0
    %4239 = vmatpush1.msra.mxu0 %v4076
    %4240 = vmatprep.subr.mxu0 0.0
    %4241 = vmatpush1.msra.mxu0 %v4077
    %4242 = vmatprep.subr.mxu0 0.0
    %4243 = vmatpush1.msra.mxu0 %v4078
    %4244 = vmatprep.subr.mxu0 0.0
    %4245 = vmatpush1.msra.mxu0 %v4079
    %4246 = vmatprep.subr.mxu0 0.0
    %4247 = vmatpush1.msra.mxu0 %v4080
    %4248 = vmatprep.mubr.f32.mxu0 %v4042
    %4249 = vmatmul.mubr.f32.gmra.mrb[0].mxu0 %v4041
    %v4250 = vpop.f32.mrb[0].mxu0
    %v4251 = vadd.f32 %v4182, %v4250
    %v4252 = vpop.f32.mrb[0].mxu0
    %4253 = vdwg.mxu0
    %4254 = vmatprep.subr.mxu0 0.0
    %4255 = vmatpush1.msra.mxu0 %v4081
    %4256 = vmatprep.subr.mxu0 0.0
    %4257 = vmatpush1.msra.mxu0 %v4082
    %4258 = vmatprep.subr.mxu0 0.0
    %4259 = vmatpush1.msra.mxu0 %v4083
    %4260 = vmatprep.subr.mxu0 0.0
    %4261 = vmatpush1.msra.mxu0 %v4084
    %4262 = vmatprep.subr.mxu0 0.0
    %4263 = vmatpush1.msra.mxu0 %v4085
    %4264 = vmatprep.subr.mxu0 0.0
    %4265 = vmatpush1.msra.mxu0 %v4086
    %4266 = vmatprep.subr.mxu0 0.0
    %4267 = vmatpush1.msra.mxu0 %v4087
    %4268 = vmatprep.subr.mxu0 0.0
    %4269 = vmatpush1.msra.mxu0 %v4088
    %4270 = vmatprep.subr.mxu0 0.0
    %4271 = vmatpush1.msra.mxu0 %v4089
    %4272 = vmatprep.subr.mxu0 0.0
    %4273 = vmatpush1.msra.mxu0 %v4090
    %4274 = vmatprep.subr.mxu0 0.0
    %4275 = vmatpush1.msra.mxu0 %v4091
    %4276 = vmatprep.subr.mxu0 0.0
    %4277 = vmatpush1.msra.mxu0 %v4092
    %4278 = vmatprep.subr.mxu0 0.0
    %4279 = vmatpush1.msra.mxu0 %v4093
    %4280 = vmatprep.subr.mxu0 0.0
    %4281 = vmatpush1.msra.mxu0 %v4094
    %4282 = vmatprep.subr.mxu0 0.0
    %4283 = vmatpush1.msra.mxu0 %v4095
    %4284 = vmatprep.subr.mxu0 0.0
    %4285 = vmatpush1.msra.mxu0 %v4096
    %4286 = vmatprep.subr.mxu0 0.0
    %4287 = vmatpush1.msra.mxu0 %v4097
    %4288 = vmatprep.subr.mxu0 0.0
    %4289 = vmatpush1.msra.mxu0 %v4098
    %4290 = vmatprep.subr.mxu0 0.0
    %4291 = vmatpush1.msra.mxu0 %v4099
    %4292 = vmatprep.subr.mxu0 0.0
    %4293 = vmatpush1.msra.mxu0 %v4100
    %4294 = vmatprep.subr.mxu0 0.0
    %4295 = vmatpush1.msra.mxu0 %v4101
    %4296 = vmatprep.subr.mxu0 0.0
    %4297 = vmatpush1.msra.mxu0 %v4102
    %4298 = vmatprep.subr.mxu0 0.0
    %4299 = vmatpush1.msra.mxu0 %v4103
    %4300 = vmatprep.subr.mxu0 0.0
    %4301 = vmatpush1.msra.mxu0 %v4104
    %4302 = vmatprep.subr.mxu0 0.0
    %4303 = vmatpush1.msra.mxu0 %v4105
    %4304 = vmatprep.subr.mxu0 0.0
    %4305 = vmatpush1.msra.mxu0 %v4106
    %4306 = vmatprep.subr.mxu0 0.0
    %4307 = vmatpush1.msra.mxu0 %v4107
    %4308 = vmatprep.subr.mxu0 0.0
    %4309 = vmatpush1.msra.mxu0 %v4108
    %4310 = vmatprep.subr.mxu0 0.0
    %4311 = vmatpush1.msra.mxu0 %v4109
    %4312 = vmatprep.subr.mxu0 0.0
    %4313 = vmatpush1.msra.mxu0 %v4110
    %4314 = vmatprep.subr.mxu0 0.0
    %4315 = vmatpush1.msra.mxu0 %v4111
    %4316 = vmatprep.subr.mxu0 0.0
    %4317 = vmatpush1.msra.mxu0 %v4112
    %4318 = vmatprep.mubr.f32.mxu0 %v4044
    %4319 = vmatmul.mubr.f32.gmra.mrb[0].mxu0 %v4043
    %v4320 = vpop.f32.mrb[0].mxu0
    %v4321 = vadd.f32 %v4251, %v4320
    %v4322 = vpop.f32.mrb[0].mxu0
    %4323 = vdwg.mxu0
    %4324 = vmatprep.subr.mxu0 0.0
    %4325 = vmatpush1.msra.mxu0 %v4113
    %4326 = vmatprep.subr.mxu0 0.0
    %4327 = vmatpush1.msra.mxu0 %v4114
    %4328 = vmatprep.subr.mxu0 0.0
    %4329 = vmatpush1.msra.mxu0 %v4115
    %4330 = vmatprep.subr.mxu0 0.0
    %4331 = vmatpush1.msra.mxu0 %v4116
    %4332 = vmatprep.subr.mxu0 0.0
    %4333 = vmatpush1.msra.mxu0 %v4117
    %4334 = vmatprep.subr.mxu0 0.0
    %4335 = vmatpush1.msra.mxu0 %v4118
    %4336 = vmatprep.subr.mxu0 0.0
    %4337 = vmatpush1.msra.mxu0 %v4119
    %4338 = vmatprep.subr.mxu0 0.0
    %4339 = vmatpush1.msra.mxu0 %v4120
    %4340 = vmatprep.subr.mxu0 0.0
    %4341 = vmatpush1.msra.mxu0 %v4121
    %4342 = vmatprep.subr.mxu0 0.0
    %4343 = vmatpush1.msra.mxu0 %v4122
    %4344 = vmatprep.subr.mxu0 0.0
    %4345 = vmatpush1.msra.mxu0 %v4123
    %4346 = vmatprep.subr.mxu0 0.0
    %4347 = vmatpush1.msra.mxu0 %v4124
    %4348 = vmatprep.subr.mxu0 0.0
    %4349 = vmatpush1.msra.mxu0 %v4125
    %4350 = vmatprep.subr.mxu0 0.0
    %4351 = vmatpush1.msra.mxu0 %v4126
    %4352 = vmatprep.subr.mxu0 0.0
    %4353 = vmatpush1.msra.mxu0 %v4127
    %4354 = vmatprep.subr.mxu0 0.0
    %4355 = vmatpush1.msra.mxu0 %v4128
    %4356 = vmatprep.subr.mxu0 0.0
    %4357 = vmatpush1.msra.mxu0 %v4129
    %4358 = vmatprep.subr.mxu0 0.0
    %4359 = vmatpush1.msra.mxu0 %v4130
    %4360 = vmatprep.subr.mxu0 0.0
    %4361 = vmatpush1.msra.mxu0 %v4131
    %4362 = vmatprep.subr.mxu0 0.0
    %4363 = vmatpush1.msra.mxu0 %v4132
    %4364 = vmatprep.subr.mxu0 0.0
    %4365 = vmatpush1.msra.mxu0 %v4133
    %4366 = vmatprep.subr.mxu0 0.0
    %4367 = vmatpush1.msra.mxu0 %v4134
    %4368 = vmatprep.subr.mxu0 0.0
    %4369 = vmatpush1.msra.mxu0 %v4135
    %4370 = vmatprep.subr.mxu0 0.0
    %4371 = vmatpush1.msra.mxu0 %v4136
    %4372 = vmatprep.subr.mxu0 0.0
    %4373 = vmatpush1.msra.mxu0 %v4137
    %4374 = vmatprep.subr.mxu0 0.0
    %4375 = vmatpush1.msra.mxu0 %v4138
    %4376 = vmatprep.subr.mxu0 0.0
    %4377 = vmatpush1.msra.mxu0 %v4139
    %4378 = vmatprep.subr.mxu0 0.0
    %4379 = vmatpush1.msra.mxu0 %v4140
    %4380 = vmatprep.subr.mxu0 0.0
    %4381 = vmatpush1.msra.mxu0 %v4141
    %4382 = vmatprep.subr.mxu0 0.0
    %4383 = vmatpush1.msra.mxu0 %v4142
    %4384 = vmatprep.subr.mxu0 0.0
    %4385 = vmatpush1.msra.mxu0 %v4143
    %4386 = vmatprep.subr.mxu0 0.0
    %4387 = vmatpush1.msra.mxu0 %v4144
    %4388 = vmatprep.mubr.f32.mxu0 %v4046
    %4389 = vmatmul.mubr.f32.gmra.mrb[0].mxu0 %v4045
    %v4390 = vpop.f32.mrb[0].mxu0
    %v4391 = vadd.f32 %v4321, %v4390
    %v4392 = vpop.f32.mrb[0].mxu0
    %4393 = vdwg.mxu0
    %4394 = vmatprep.subr.mxu0 0.0
    %4395 = vmatpush1.msra.mxu0 %v4145
    %4396 = vmatprep.subr.mxu0 0.0
    %4397 = vmatpush1.msra.mxu0 %v4146
    %4398 = vmatprep.subr.mxu0 0.0
    %4399 = vmatpush1.msra.mxu0 %v4147
    %4400 = vmatprep.subr.mxu0 0.0
    %4401 = vmatpush1.msra.mxu0 %v4148
    %4402 = vmatprep.subr.mxu0 0.0
    %4403 = vmatpush1.msra.mxu0 %v4149
    %4404 = vmatprep.subr.mxu0 0.0
    %4405 = vmatpush1.msra.mxu0 %v4150
    %4406 = vmatprep.subr.mxu0 0.0
    %4407 = vmatpush1.msra.mxu0 %v4151
    %4408 = vmatprep.subr.mxu0 0.0
    %4409 = vmatpush1.msra.mxu0 %v4152
    %4410 = vmatprep.subr.mxu0 0.0
    %4411 = vmatpush1.msra.mxu0 %v4153
    %4412 = vmatprep.subr.mxu0 0.0
    %4413 = vmatpush1.msra.mxu0 %v4154
    %4414 = vmatprep.subr.mxu0 0.0
    %4415 = vmatpush1.msra.mxu0 %v4155
    %4416 = vmatprep.subr.mxu0 0.0
    %4417 = vmatpush1.msra.mxu0 %v4156
    %4418 = vmatprep.subr.mxu0 0.0
    %4419 = vmatpush1.msra.mxu0 %v4157
    %4420 = vmatprep.subr.mxu0 0.0
    %4421 = vmatpush1.msra.mxu0 %v4158
    %4422 = vmatprep.subr.mxu0 0.0
    %4423 = vmatpush1.msra.mxu0 %v4159
    %4424 = vmatprep.subr.mxu0 0.0
    %4425 = vmatpush1.msra.mxu0 %v4160
    %4426 = vmatprep.subr.mxu0 0.0
    %4427 = vmatpush1.msra.mxu0 %v4161
    %4428 = vmatprep.subr.mxu0 0.0
    %4429 = vmatpush1.msra.mxu0 %v4162
    %4430 = vmatprep.subr.mxu0 0.0
    %4431 = vmatpush1.msra.mxu0 %v4163
    %4432 = vmatprep.subr.mxu0 0.0
    %4433 = vmatpush1.msra.mxu0 %v4164
    %4434 = vmatprep.subr.mxu0 0.0
    %4435 = vmatpush1.msra.mxu0 %v4165
    %4436 = vmatprep.subr.mxu0 0.0
    %4437 = vmatpush1.msra.mxu0 %v4166
    %4438 = vmatprep.subr.mxu0 0.0
    %4439 = vmatpush1.msra.mxu0 %v4167
    %4440 = vmatprep.subr.mxu0 0.0
    %4441 = vmatpush1.msra.mxu0 %v4168
    %4442 = vmatprep.subr.mxu0 0.0
    %4443 = vmatpush1.msra.mxu0 %v4169
    %4444 = vmatprep.subr.mxu0 0.0
    %4445 = vmatpush1.msra.mxu0 %v4170
    %4446 = vmatprep.subr.mxu0 0.0
    %4447 = vmatpush1.msra.mxu0 %v4171
    %4448 = vmatprep.subr.mxu0 0.0
    %4449 = vmatpush1.msra.mxu0 %v4172
    %4450 = vmatprep.subr.mxu0 0.0
    %4451 = vmatpush1.msra.mxu0 %v4173
    %4452 = vmatprep.subr.mxu0 0.0
    %4453 = vmatpush1.msra.mxu0 %v4174
    %4454 = vmatprep.subr.mxu0 0.0
    %4455 = vmatpush1.msra.mxu0 %v4175
    %4456 = vmatprep.subr.mxu0 0.0
    %4457 = vmatpush1.msra.mxu0 %v4176
    %4458 = vmatprep.mubr.f32.mxu0 %v4048
    %4459 = vmatmul.mubr.f32.gmra.mrb[0].mxu0 %v4047
    %v4460 = vpop.f32.mrb[0].mxu0
    %v4461 = vadd.f32 %v4391, %v4460
    %v4462 = vpop.f32.mrb[0].mxu0
    %4463 = vdwg.mxu0
    %vm4464 = vcmask 15360
    %4465 = vst.msk [vmem:[%s7] sm:$0xff] %vm4464, %v4461
    // Predicated region
    $region50: #{tpu_custom_call.1} parent=1 // pred_check
      _
    $region51: #{tpu_custom_call.1} parent=1 // pred_check_branch
      %4467 = sbr.rel (0) target = $region53
    $region52: #{tpu_custom_call.1} parent=1 // pred_region
      _
    $region53: #{tpu_custom_call.1} parent=1 // pred_fallthru
      _
    // Predicated region
    $region54: #{tpu_custom_call.1} parent=1 // pred_check
      _
    $region55: #{tpu_custom_call.1} parent=1 // pred_check_branch
      %4469 = sbr.rel (0) target = $region57
    $region56: #{tpu_custom_call.1} parent=1 // pred_region
      _
    $region57: #{tpu_custom_call.1} parent=1 // pred_fallthru
      _
    %4470 = vsyncpa [#allocation3], 1
    %4471 = vsyncpa [#allocation5], 1
    %4472 = vsyncpa [#allocation8], 1

</llo_original>
